<compile_context>
chip_gen: v7x
topology: tpu7x:2x2x1
jax: 0.10.0
libtpu: 0.0.40
codegen_flags: <defaults>
</compile_context>

<pallas_src>
import numpy as np
import jax
import jax.numpy as jnp
from jax import lax
from jax.experimental import pallas as pl
from jax.experimental.pallas import tpu as pltpu


# ----------------------------- fused Pallas kernel ---------------------------

def _make_fused_kernel(num_stages, k_size, pad, axis_lens, strides_flat, m_flat,
                       eps, use_bf16):
    """Builds the fused kernel: num_stages x (1-D conv -> BN(train) -> ReLU).

    Activation layout inside the kernel: (C, M), M = N*D*H*W on the lane axis.
    For the stage convolving spatial axis a, tap t (= k - pad) reads source flat
    index m + t*strides_flat[a], i.e. a lane rotation of the whole (C, M) slab;
    destinations whose source coordinate falls outside [0, axis_len) — which
    also covers rotation wrap-around and cross-sample bleed — are zeroed via a
    (1, M) mask built from the precomputed per-axis coordinate table.
    """
    inv_m = 1.0 / float(m_flat)

    def kernel(x_ref, coord_ref, *refs):
        stage_refs, o_ref = refs[:-1], refs[-1]
        act = x_ref[...]                                        # (Cin0, M) f32

        for si in range(num_stages):
            w_ref, gamma_ref, beta_ref = stage_refs[3 * si: 3 * si + 3]
            cout = w_ref.shape[1]
            s_flat = strides_flat[si]
            a_len = axis_lens[si]
            coord = coord_ref[si]                               # (1, M) int32

            # ---- 1-D conv as K shifted taps, accumulated on the MXU in f32 ----
            conv = jnp.zeros((cout, m_flat), jnp.float32)
            for k in range(k_size):
                t = k - pad
                if t == 0:
                    tap = act
                else:
                    # want tap[m] = act[m + t*s_flat]; pltpu.roll follows np.roll
                    # semantics, so rotate by (-t*s_flat) mod M; lanes whose
                    # source coordinate is out of range (incl. wrap-around) are
                    # zeroed.  Mask applied on the Cin side (Cin < Cout).
                    tap = pltpu.roll(act, shift=(-t * s_flat) % m_flat, axis=1)
                    valid = ((coord + t >= 0) &
                             (coord + t < a_len)).astype(jnp.float32)   # (1, M)
                    tap = tap * valid
                wk = w_ref[k]                                   # (Cout, Cin)
                if use_bf16:
                    tap = tap.astype(jnp.bfloat16)
                    wk = wk.astype(jnp.bfloat16)
                conv = conv + jnp.dot(wk, tap,
                                      preferred_element_type=jnp.float32)

            # ---- BatchNorm (training-mode batch stats), two-pass variance ----
            mean = jnp.sum(conv, axis=1, keepdims=True) * inv_m         # (Cout,1)
            centered = conv - mean
            var = jnp.sum(centered * centered, axis=1, keepdims=True) * inv_m
            scale = gamma_ref[...] * lax.rsqrt(var + eps)               # (Cout,1)

            # ---- normalize + affine + ReLU -> next stage's activation --------
            act = jnp.maximum(centered * scale + beta_ref[...], 0.0)    # (Cout,M)

        o_ref[...] = act

    return kernel


# ------------------------------ host-side helpers ----------------------------

def _coords_ndhw(dims_ndhw):
    """(3, 1, M) int32: for each flat index m over (N,D,H,W), its D/H/W coord."""
    n, d, h, w = dims_ndhw
    m = n * d * h * w
    idx = np.arange(m, dtype=np.int64)
    coord_d = (idx // (h * w)) % d
    coord_h = (idx // w) % h
    coord_w = idx % w
    return np.stack([coord_d, coord_h, coord_w]).astype(np.int32).reshape(3, 1, m)


def split_conv3d_forward(x_ncdhw, params, kernel_size, stride=1, padding=0,
                         *, eps=1e-5, use_bf16_matmul=False):
    """SplitConv3d forward.  x_ncdhw: (N, C, D, H, W) float32 (PyTorch layout)."""
    if stride != 1 or 2 * padding != kernel_size - 1:
        # TODO(synk): general stride / padding needs a strided flat-axis gather
        # (output layout != input layout) and M-tiled two-pass BN.
        raise NotImplementedError("fused kernel supports stride=1 with 'same' padding")

    n, c0, d, h, w = x_ncdhw.shape
    dims_ndhw = (n, d, h, w)
    m_flat = int(np.prod(dims_ndhw))

    # NCDHW -> channel-major flat-spatial (C, M): channels on sublanes, the
    # N*D*H*W axis on lanes (lane-dense loads/stores and MXU output).
    x2d = jnp.transpose(x_ncdhw, (1, 0, 2, 3, 4)).reshape(c0, m_flat)
    x2d = x2d.astype(jnp.float32)

    coords = jnp.asarray(_coords_ndhw(dims_ndhw))          # (3, 1, M) int32
    strides_flat = (h * w, w, 1)          # flat strides of the D, H, W axes
    axis_lens = (d, h, w)

    inputs = [x2d, coords]
    for p in params:
        inputs += [p["w"], p["gamma"], p["beta"]]
    c_out = int(params[-1]["w"].shape[1])

    kernel = _make_fused_kernel(
        num_stages=len(params), k_size=kernel_size, pad=padding,
        axis_lens=axis_lens, strides_flat=strides_flat, m_flat=m_flat,
        eps=eps, use_bf16=use_bf16_matmul)

    out2d = pl.pallas_call(
        kernel,
        out_shape=jax.ShapeDtypeStruct((c_out, m_flat), jnp.float32),
        in_specs=[pl.BlockSpec(memory_space=pltpu.MemorySpace.VMEM)] * len(inputs),
        out_specs=pl.BlockSpec(memory_space=pltpu.MemorySpace.VMEM),
    )(*inputs)

    # (C, M) -> NCDHW
    return jnp.transpose(out2d.reshape(c_out, n, d, h, w), (1, 0, 2, 3, 4))


def init_params(key, in_channels, out_channels, kernel_size):
    """Mirrors SplitConv3d.__init__: 3 stages, xavier_normal conv weights,
    BN gamma=1 / beta=0.  Conv bias (zero-init in the module) is omitted: any
    per-channel constant is exactly cancelled by training-mode BatchNorm."""
    assert (out_channels - in_channels) % 3 == 0
    crem = (out_channels - in_channels) // 3
    chans = [in_channels, in_channels + crem, in_channels + 2 * crem, out_channels]
    params = []
    for i in range(3):
        cin, cout = chans[i], chans[i + 1]
        key, sub = jax.random.split(key)
        fan_in = cin * kernel_size            # xavier_normal on (Cout, Cin, K, 1, 1)
        fan_out = cout * kernel_size
        std = float(np.sqrt(2.0 / (fan_in + fan_out)))
        # stored as (K, Cout, Cin): per-tap matrices ready for (Cout,Cin)@(Cin,M)
        w = std * jax.random.normal(sub, (kernel_size, cout, cin), jnp.float32)
        params.append(dict(
            w=w,
            gamma=jnp.ones((cout, 1), jnp.float32),
            beta=jnp.zeros((cout, 1), jnp.float32),
        ))
    return params


# ------------------------------ reference (jnp) -------------------------------

def _extract_patches_1d(x, axis, k, stride, pad):
    """x: (N, D, H, W, C) -> patches (N, D', H', W', K, C) along `axis`."""
    pads = [(0, 0)] * 5
    pads[axis] = (pad, pad)
    xp = jnp.pad(x, pads)
    l = xp.shape[axis]
    l_out = (l - k) // stride + 1
    slices = []
    for kk in range(k):
        idx = [slice(None)] * 5
        idx[axis] = slice(kk, kk + (l_out - 1) * stride + 1, stride)
        slices.append(xp[tuple(idx)])
    return jnp.stack(slices, axis=-2)


def _reference_forward(x_ncdhw, params, kernel_size, stride, padding, eps=1e-5):
    x = jnp.transpose(x_ncdhw, (0, 2, 3, 4, 1)).astype(jnp.float32)    # NDHWC
    for p, axis in zip(params, (1, 2, 3)):
        cin = x.shape[-1]
        w = p["w"]                                                     # (K,Cout,Cin)
        cout = w.shape[1]
        patches = _extract_patches_1d(x, axis, kernel_size, stride, padding)
        sp = patches.shape[:4]
        m = int(np.prod(sp))
        pmat = patches.reshape(m, kernel_size * cin)
        wmat = jnp.transpose(w, (0, 2, 1)).reshape(kernel_size * cin, cout)
        conv = pmat @ wmat
        mean = jnp.mean(conv, axis=0, keepdims=True)
        var = jnp.mean((conv - mean) ** 2, axis=0, keepdims=True)
        y = (conv - mean) * lax.rsqrt(var + eps) * p["gamma"].reshape(1, cout) \
            + p["beta"].reshape(1, cout)
        x = jnp.maximum(y, 0.0).reshape(sp + (cout,))
    return jnp.transpose(x, (0, 4, 1, 2, 3))


# ----------------------------------- main --------------------------------------

if __name__ == "__main__":
    IN_C, OUT_C = 4, 16               # (16 - 4) % 3 == 0 -> cremental = 4
    K, STRIDE, PAD = 3, 1, 1
    N, D, H, W = 2, 8, 8, 8

    key = jax.random.PRNGKey(0)
    k_x, k_p = jax.random.split(key)
    x = jax.random.normal(k_x, (N, IN_C, D, H, W), jnp.float32)   # NCDHW input
    params = init_params(k_p, IN_C, OUT_C, K)

    fwd = jax.jit(lambda xx: split_conv3d_forward(xx, params, K, STRIDE, PAD))
    out = jax.block_until_ready(fwd(x))
    assert out.shape == (N, OUT_C, D, H, W), out.shape

    ref = jax.block_until_ready(_reference_forward(x, params, K, STRIDE, PAD))
    err = float(jnp.max(jnp.abs(out - ref)))
    if not np.isfinite(err) or err > 2e-3:
        raise AssertionError(f"mismatch vs reference: max abs err = {err}")

    print("KERNEL_OK")
</pallas_src>

<mosaic_0001>
module attributes {stable_mosaic.version = 11 : i64} {
  func.func @kernel(%arg0: memref<4x1024xf32, #tpu.memory_space<vmem>>, %arg1: memref<3x1x1024xi32, #tpu.memory_space<vmem>>, %arg2: memref<3x8x4xf32, #tpu.memory_space<vmem>>, %arg3: memref<8x1xf32, #tpu.memory_space<vmem>>, %arg4: memref<8x1xf32, #tpu.memory_space<vmem>>, %arg5: memref<3x12x8xf32, #tpu.memory_space<vmem>>, %arg6: memref<12x1xf32, #tpu.memory_space<vmem>>, %arg7: memref<12x1xf32, #tpu.memory_space<vmem>>, %arg8: memref<3x16x12xf32, #tpu.memory_space<vmem>>, %arg9: memref<16x1xf32, #tpu.memory_space<vmem>>, %arg10: memref<16x1xf32, #tpu.memory_space<vmem>>, %arg11: memref<16x1024xf32, #tpu.memory_space<vmem>>) attributes {dimension_semantics = [], scalar_prefetch = 0 : i64, scratch_operands = 0 : i64, tpu.core_type = #tpu.core_type<tc>} {
    %c0 = arith.constant 0 : index
    %c0_0 = arith.constant 0 : index
    %0 = vector.load %arg0[%c0, %c0_0] : memref<4x1024xf32, #tpu.memory_space<vmem>>, vector<4x1024xf32>
    %c0_1 = arith.constant 0 : index
    %c0_2 = arith.constant 0 : index
    %c0_3 = arith.constant 0 : index
    %1 = vector.load %arg1[%c0_1, %c0_2, %c0_3] : memref<3x1x1024xi32, #tpu.memory_space<vmem>>, vector<1x1x1024xi32>
    %2 = vector.shape_cast %1 : vector<1x1x1024xi32> to vector<1x1024xi32>
    %cst = arith.constant 0.000000e+00 : f32
    %3 = vector.broadcast %cst : f32 to vector<8x1024xf32>
    %c64_i32 = arith.constant 64 : i32
    %4 = tpu.dynamic_rotate %0 by %c64_i32 dim 1 : vector<4x1024xf32>, i32 -> vector<4x1024xf32>
    %c-1_i32 = arith.constant -1 : i32
    %5 = vector.broadcast %c-1_i32 : i32 to vector<1x1024xi32>
    %6 = arith.addi %2, %5 : vector<1x1024xi32>
    %c0_i32 = arith.constant 0 : i32
    %7 = vector.broadcast %c0_i32 : i32 to vector<1x1024xi32>
    %8 = arith.cmpi sge, %6, %7 : vector<1x1024xi32>
    %c-1_i32_4 = arith.constant -1 : i32
    %9 = vector.broadcast %c-1_i32_4 : i32 to vector<1x1024xi32>
    %10 = arith.addi %2, %9 : vector<1x1024xi32>
    %c8_i32 = arith.constant 8 : i32
    %11 = vector.broadcast %c8_i32 : i32 to vector<1x1024xi32>
    %12 = arith.cmpi slt, %10, %11 : vector<1x1024xi32>
    %13 = arith.andi %8, %12 : vector<1x1024xi1>
    %14 = arith.extui %13 : vector<1x1024xi1> to vector<1x1024xi32>
    %15 = arith.sitofp %14 : vector<1x1024xi32> to vector<1x1024xf32>
    %16 = vector.broadcast %15 : vector<1x1024xf32> to vector<4x1024xf32>
    %17 = arith.mulf %4, %16 : vector<4x1024xf32>
    %c0_5 = arith.constant 0 : index
    %c0_6 = arith.constant 0 : index
    %c0_7 = arith.constant 0 : index
    %18 = vector.load %arg2[%c0_5, %c0_6, %c0_7] : memref<3x8x4xf32, #tpu.memory_space<vmem>>, vector<1x8x4xf32>
    %19 = vector.shape_cast %18 : vector<1x8x4xf32> to vector<8x4xf32>
    %cst_8 = arith.constant dense<0.000000e+00> : vector<8x1024xf32>
    %20 = tpu.matmul %19, %17, %cst_8 {dimension_numbers = #tpu.dot_dimension_numbers<[1], [0], [0], [1], [0, 0, 1, 1], [], []>} : vector<8x4xf32>, vector<4x1024xf32>, vector<8x1024xf32> -> vector<8x1024xf32>
    %21 = arith.addf %3, %20 : vector<8x1024xf32>
    %c1 = arith.constant 1 : index
    %c0_9 = arith.constant 0 : index
    %c0_10 = arith.constant 0 : index
    %22 = vector.load %arg2[%c1, %c0_9, %c0_10] : memref<3x8x4xf32, #tpu.memory_space<vmem>>, vector<1x8x4xf32>
    %23 = vector.shape_cast %22 : vector<1x8x4xf32> to vector<8x4xf32>
    %cst_11 = arith.constant dense<0.000000e+00> : vector<8x1024xf32>
    %24 = tpu.matmul %23, %0, %cst_11 {dimension_numbers = #tpu.dot_dimension_numbers<[1], [0], [0], [1], [0, 0, 1, 1], [], []>} : vector<8x4xf32>, vector<4x1024xf32>, vector<8x1024xf32> -> vector<8x1024xf32>
    %25 = arith.addf %21, %24 : vector<8x1024xf32>
    %c960_i32 = arith.constant 960 : i32
    %26 = tpu.dynamic_rotate %0 by %c960_i32 dim 1 : vector<4x1024xf32>, i32 -> vector<4x1024xf32>
    %c1_i32 = arith.constant 1 : i32
    %27 = vector.broadcast %c1_i32 : i32 to vector<1x1024xi32>
    %28 = arith.addi %2, %27 : vector<1x1024xi32>
    %c0_i32_12 = arith.constant 0 : i32
    %29 = vector.broadcast %c0_i32_12 : i32 to vector<1x1024xi32>
    %30 = arith.cmpi sge, %28, %29 : vector<1x1024xi32>
    %c1_i32_13 = arith.constant 1 : i32
    %31 = vector.broadcast %c1_i32_13 : i32 to vector<1x1024xi32>
    %32 = arith.addi %2, %31 : vector<1x1024xi32>
    %c8_i32_14 = arith.constant 8 : i32
    %33 = vector.broadcast %c8_i32_14 : i32 to vector<1x1024xi32>
    %34 = arith.cmpi slt, %32, %33 : vector<1x1024xi32>
    %35 = arith.andi %30, %34 : vector<1x1024xi1>
    %36 = arith.extui %35 : vector<1x1024xi1> to vector<1x1024xi32>
    %37 = arith.sitofp %36 : vector<1x1024xi32> to vector<1x1024xf32>
    %38 = vector.broadcast %37 : vector<1x1024xf32> to vector<4x1024xf32>
    %39 = arith.mulf %26, %38 : vector<4x1024xf32>
    %c2 = arith.constant 2 : index
    %c0_15 = arith.constant 0 : index
    %c0_16 = arith.constant 0 : index
    %40 = vector.load %arg2[%c2, %c0_15, %c0_16] : memref<3x8x4xf32, #tpu.memory_space<vmem>>, vector<1x8x4xf32>
    %41 = vector.shape_cast %40 : vector<1x8x4xf32> to vector<8x4xf32>
    %cst_17 = arith.constant dense<0.000000e+00> : vector<8x1024xf32>
    %42 = tpu.matmul %41, %39, %cst_17 {dimension_numbers = #tpu.dot_dimension_numbers<[1], [0], [0], [1], [0, 0, 1, 1], [], []>} : vector<8x4xf32>, vector<4x1024xf32>, vector<8x1024xf32> -> vector<8x1024xf32>
    %43 = arith.addf %25, %42 : vector<8x1024xf32>
    %cst_18 = arith.constant dense<0.000000e+00> : vector<8xf32>
    %44 = vector.multi_reduction <add>, %43, %cst_18 [1] : vector<8x1024xf32> to vector<8xf32>
    %45 = vector.shape_cast %44 : vector<8xf32> to vector<8x1xf32>
    %cst_19 = arith.constant 9.765625E-4 : f32
    %46 = vector.broadcast %cst_19 : f32 to vector<8x1xf32>
    %47 = arith.mulf %45, %46 : vector<8x1xf32>
    %48 = vector.broadcast %47 : vector<8x1xf32> to vector<8x1024xf32>
    %49 = arith.subf %43, %48 : vector<8x1024xf32>
    %50 = arith.mulf %49, %49 : vector<8x1024xf32>
    %cst_20 = arith.constant dense<0.000000e+00> : vector<8xf32>
    %51 = vector.multi_reduction <add>, %50, %cst_20 [1] : vector<8x1024xf32> to vector<8xf32>
    %52 = vector.shape_cast %51 : vector<8xf32> to vector<8x1xf32>
    %cst_21 = arith.constant 9.765625E-4 : f32
    %53 = vector.broadcast %cst_21 : f32 to vector<8x1xf32>
    %54 = arith.mulf %52, %53 : vector<8x1xf32>
    %c0_22 = arith.constant 0 : index
    %c0_23 = arith.constant 0 : index
    %55 = vector.load %arg3[%c0_22, %c0_23] : memref<8x1xf32, #tpu.memory_space<vmem>>, vector<8x1xf32>
    %cst_24 = arith.constant 9.99999974E-6 : f32
    %56 = vector.broadcast %cst_24 : f32 to vector<8x1xf32>
    %57 = arith.addf %54, %56 : vector<8x1xf32>
    %58 = math.rsqrt %57 : vector<8x1xf32>
    %59 = arith.mulf %55, %58 : vector<8x1xf32>
    %60 = vector.broadcast %59 : vector<8x1xf32> to vector<8x1024xf32>
    %61 = arith.mulf %49, %60 : vector<8x1024xf32>
    %c0_25 = arith.constant 0 : index
    %c0_26 = arith.constant 0 : index
    %62 = vector.load %arg4[%c0_25, %c0_26] : memref<8x1xf32, #tpu.memory_space<vmem>>, vector<8x1xf32>
    %63 = vector.broadcast %62 : vector<8x1xf32> to vector<8x1024xf32>
    %64 = arith.addf %61, %63 : vector<8x1024xf32>
    %cst_27 = arith.constant 0.000000e+00 : f32
    %65 = vector.broadcast %cst_27 : f32 to vector<8x1024xf32>
    %66 = arith.maximumf %64, %65 : vector<8x1024xf32>
    %c1_28 = arith.constant 1 : index
    %c0_29 = arith.constant 0 : index
    %c0_30 = arith.constant 0 : index
    %67 = vector.load %arg1[%c1_28, %c0_29, %c0_30] : memref<3x1x1024xi32, #tpu.memory_space<vmem>>, vector<1x1x1024xi32>
    %68 = vector.shape_cast %67 : vector<1x1x1024xi32> to vector<1x1024xi32>
    %cst_31 = arith.constant 0.000000e+00 : f32
    %69 = vector.broadcast %cst_31 : f32 to vector<12x1024xf32>
    %c8_i32_32 = arith.constant 8 : i32
    %70 = tpu.dynamic_rotate %66 by %c8_i32_32 dim 1 : vector<8x1024xf32>, i32 -> vector<8x1024xf32>
    %c-1_i32_33 = arith.constant -1 : i32
    %71 = vector.broadcast %c-1_i32_33 : i32 to vector<1x1024xi32>
    %72 = arith.addi %68, %71 : vector<1x1024xi32>
    %c0_i32_34 = arith.constant 0 : i32
    %73 = vector.broadcast %c0_i32_34 : i32 to vector<1x1024xi32>
    %74 = arith.cmpi sge, %72, %73 : vector<1x1024xi32>
    %c-1_i32_35 = arith.constant -1 : i32
    %75 = vector.broadcast %c-1_i32_35 : i32 to vector<1x1024xi32>
    %76 = arith.addi %68, %75 : vector<1x1024xi32>
    %c8_i32_36 = arith.constant 8 : i32
    %77 = vector.broadcast %c8_i32_36 : i32 to vector<1x1024xi32>
    %78 = arith.cmpi slt, %76, %77 : vector<1x1024xi32>
    %79 = arith.andi %74, %78 : vector<1x1024xi1>
    %80 = arith.extui %79 : vector<1x1024xi1> to vector<1x1024xi32>
    %81 = arith.sitofp %80 : vector<1x1024xi32> to vector<1x1024xf32>
    %82 = vector.broadcast %81 : vector<1x1024xf32> to vector<8x1024xf32>
    %83 = arith.mulf %70, %82 : vector<8x1024xf32>
    %c0_37 = arith.constant 0 : index
    %c0_38 = arith.constant 0 : index
    %c0_39 = arith.constant 0 : index
    %84 = vector.load %arg5[%c0_37, %c0_38, %c0_39] : memref<3x12x8xf32, #tpu.memory_space<vmem>>, vector<1x12x8xf32>
    %85 = vector.shape_cast %84 : vector<1x12x8xf32> to vector<12x8xf32>
    %cst_40 = arith.constant dense<0.000000e+00> : vector<12x1024xf32>
    %86 = tpu.matmul %85, %83, %cst_40 {dimension_numbers = #tpu.dot_dimension_numbers<[1], [0], [0], [1], [0, 0, 1, 1], [], []>} : vector<12x8xf32>, vector<8x1024xf32>, vector<12x1024xf32> -> vector<12x1024xf32>
    %87 = arith.addf %69, %86 : vector<12x1024xf32>
    %c1_41 = arith.constant 1 : index
    %c0_42 = arith.constant 0 : index
    %c0_43 = arith.constant 0 : index
    %88 = vector.load %arg5[%c1_41, %c0_42, %c0_43] : memref<3x12x8xf32, #tpu.memory_space<vmem>>, vector<1x12x8xf32>
    %89 = vector.shape_cast %88 : vector<1x12x8xf32> to vector<12x8xf32>
    %cst_44 = arith.constant dense<0.000000e+00> : vector<12x1024xf32>
    %90 = tpu.matmul %89, %66, %cst_44 {dimension_numbers = #tpu.dot_dimension_numbers<[1], [0], [0], [1], [0, 0, 1, 1], [], []>} : vector<12x8xf32>, vector<8x1024xf32>, vector<12x1024xf32> -> vector<12x1024xf32>
    %91 = arith.addf %87, %90 : vector<12x1024xf32>
    %c1016_i32 = arith.constant 1016 : i32
    %92 = tpu.dynamic_rotate %66 by %c1016_i32 dim 1 : vector<8x1024xf32>, i32 -> vector<8x1024xf32>
    %c1_i32_45 = arith.constant 1 : i32
    %93 = vector.broadcast %c1_i32_45 : i32 to vector<1x1024xi32>
    %94 = arith.addi %68, %93 : vector<1x1024xi32>
    %c0_i32_46 = arith.constant 0 : i32
    %95 = vector.broadcast %c0_i32_46 : i32 to vector<1x1024xi32>
    %96 = arith.cmpi sge, %94, %95 : vector<1x1024xi32>
    %c1_i32_47 = arith.constant 1 : i32
    %97 = vector.broadcast %c1_i32_47 : i32 to vector<1x1024xi32>
    %98 = arith.addi %68, %97 : vector<1x1024xi32>
    %c8_i32_48 = arith.constant 8 : i32
    %99 = vector.broadcast %c8_i32_48 : i32 to vector<1x1024xi32>
    %100 = arith.cmpi slt, %98, %99 : vector<1x1024xi32>
    %101 = arith.andi %96, %100 : vector<1x1024xi1>
    %102 = arith.extui %101 : vector<1x1024xi1> to vector<1x1024xi32>
    %103 = arith.sitofp %102 : vector<1x1024xi32> to vector<1x1024xf32>
    %104 = vector.broadcast %103 : vector<1x1024xf32> to vector<8x1024xf32>
    %105 = arith.mulf %92, %104 : vector<8x1024xf32>
    %c2_49 = arith.constant 2 : index
    %c0_50 = arith.constant 0 : index
    %c0_51 = arith.constant 0 : index
    %106 = vector.load %arg5[%c2_49, %c0_50, %c0_51] : memref<3x12x8xf32, #tpu.memory_space<vmem>>, vector<1x12x8xf32>
    %107 = vector.shape_cast %106 : vector<1x12x8xf32> to vector<12x8xf32>
    %cst_52 = arith.constant dense<0.000000e+00> : vector<12x1024xf32>
    %108 = tpu.matmul %107, %105, %cst_52 {dimension_numbers = #tpu.dot_dimension_numbers<[1], [0], [0], [1], [0, 0, 1, 1], [], []>} : vector<12x8xf32>, vector<8x1024xf32>, vector<12x1024xf32> -> vector<12x1024xf32>
    %109 = arith.addf %91, %108 : vector<12x1024xf32>
    %cst_53 = arith.constant dense<0.000000e+00> : vector<12xf32>
    %110 = vector.multi_reduction <add>, %109, %cst_53 [1] : vector<12x1024xf32> to vector<12xf32>
    %111 = vector.shape_cast %110 : vector<12xf32> to vector<12x1xf32>
    %cst_54 = arith.constant 9.765625E-4 : f32
    %112 = vector.broadcast %cst_54 : f32 to vector<12x1xf32>
    %113 = arith.mulf %111, %112 : vector<12x1xf32>
    %114 = vector.broadcast %113 : vector<12x1xf32> to vector<12x1024xf32>
    %115 = arith.subf %109, %114 : vector<12x1024xf32>
    %116 = arith.mulf %115, %115 : vector<12x1024xf32>
    %cst_55 = arith.constant dense<0.000000e+00> : vector<12xf32>
    %117 = vector.multi_reduction <add>, %116, %cst_55 [1] : vector<12x1024xf32> to vector<12xf32>
    %118 = vector.shape_cast %117 : vector<12xf32> to vector<12x1xf32>
    %cst_56 = arith.constant 9.765625E-4 : f32
    %119 = vector.broadcast %cst_56 : f32 to vector<12x1xf32>
    %120 = arith.mulf %118, %119 : vector<12x1xf32>
    %c0_57 = arith.constant 0 : index
    %c0_58 = arith.constant 0 : index
    %121 = vector.load %arg6[%c0_57, %c0_58] : memref<12x1xf32, #tpu.memory_space<vmem>>, vector<12x1xf32>
    %cst_59 = arith.constant 9.99999974E-6 : f32
    %122 = vector.broadcast %cst_59 : f32 to vector<12x1xf32>
    %123 = arith.addf %120, %122 : vector<12x1xf32>
    %124 = math.rsqrt %123 : vector<12x1xf32>
    %125 = arith.mulf %121, %124 : vector<12x1xf32>
    %126 = vector.broadcast %125 : vector<12x1xf32> to vector<12x1024xf32>
    %127 = arith.mulf %115, %126 : vector<12x1024xf32>
    %c0_60 = arith.constant 0 : index
    %c0_61 = arith.constant 0 : index
    %128 = vector.load %arg7[%c0_60, %c0_61] : memref<12x1xf32, #tpu.memory_space<vmem>>, vector<12x1xf32>
    %129 = vector.broadcast %128 : vector<12x1xf32> to vector<12x1024xf32>
    %130 = arith.addf %127, %129 : vector<12x1024xf32>
    %cst_62 = arith.constant 0.000000e+00 : f32
    %131 = vector.broadcast %cst_62 : f32 to vector<12x1024xf32>
    %132 = arith.maximumf %130, %131 : vector<12x1024xf32>
    %c2_63 = arith.constant 2 : index
    %c0_64 = arith.constant 0 : index
    %c0_65 = arith.constant 0 : index
    %133 = vector.load %arg1[%c2_63, %c0_64, %c0_65] : memref<3x1x1024xi32, #tpu.memory_space<vmem>>, vector<1x1x1024xi32>
    %134 = vector.shape_cast %133 : vector<1x1x1024xi32> to vector<1x1024xi32>
    %cst_66 = arith.constant 0.000000e+00 : f32
    %135 = vector.broadcast %cst_66 : f32 to vector<16x1024xf32>
    %c1_i32_67 = arith.constant 1 : i32
    %136 = tpu.dynamic_rotate %132 by %c1_i32_67 dim 1 : vector<12x1024xf32>, i32 -> vector<12x1024xf32>
    %c-1_i32_68 = arith.constant -1 : i32
    %137 = vector.broadcast %c-1_i32_68 : i32 to vector<1x1024xi32>
    %138 = arith.addi %134, %137 : vector<1x1024xi32>
    %c0_i32_69 = arith.constant 0 : i32
    %139 = vector.broadcast %c0_i32_69 : i32 to vector<1x1024xi32>
    %140 = arith.cmpi sge, %138, %139 : vector<1x1024xi32>
    %c-1_i32_70 = arith.constant -1 : i32
    %141 = vector.broadcast %c-1_i32_70 : i32 to vector<1x1024xi32>
    %142 = arith.addi %134, %141 : vector<1x1024xi32>
    %c8_i32_71 = arith.constant 8 : i32
    %143 = vector.broadcast %c8_i32_71 : i32 to vector<1x1024xi32>
    %144 = arith.cmpi slt, %142, %143 : vector<1x1024xi32>
    %145 = arith.andi %140, %144 : vector<1x1024xi1>
    %146 = arith.extui %145 : vector<1x1024xi1> to vector<1x1024xi32>
    %147 = arith.sitofp %146 : vector<1x1024xi32> to vector<1x1024xf32>
    %148 = vector.broadcast %147 : vector<1x1024xf32> to vector<12x1024xf32>
    %149 = arith.mulf %136, %148 : vector<12x1024xf32>
    %c0_72 = arith.constant 0 : index
    %c0_73 = arith.constant 0 : index
    %c0_74 = arith.constant 0 : index
    %150 = vector.load %arg8[%c0_72, %c0_73, %c0_74] : memref<3x16x12xf32, #tpu.memory_space<vmem>>, vector<1x16x12xf32>
    %151 = vector.shape_cast %150 : vector<1x16x12xf32> to vector<16x12xf32>
    %cst_75 = arith.constant dense<0.000000e+00> : vector<16x1024xf32>
    %152 = tpu.matmul %151, %149, %cst_75 {dimension_numbers = #tpu.dot_dimension_numbers<[1], [0], [0], [1], [0, 0, 1, 1], [], []>} : vector<16x12xf32>, vector<12x1024xf32>, vector<16x1024xf32> -> vector<16x1024xf32>
    %153 = arith.addf %135, %152 : vector<16x1024xf32>
    %c1_76 = arith.constant 1 : index
    %c0_77 = arith.constant 0 : index
    %c0_78 = arith.constant 0 : index
    %154 = vector.load %arg8[%c1_76, %c0_77, %c0_78] : memref<3x16x12xf32, #tpu.memory_space<vmem>>, vector<1x16x12xf32>
    %155 = vector.shape_cast %154 : vector<1x16x12xf32> to vector<16x12xf32>
    %cst_79 = arith.constant dense<0.000000e+00> : vector<16x1024xf32>
    %156 = tpu.matmul %155, %132, %cst_79 {dimension_numbers = #tpu.dot_dimension_numbers<[1], [0], [0], [1], [0, 0, 1, 1], [], []>} : vector<16x12xf32>, vector<12x1024xf32>, vector<16x1024xf32> -> vector<16x1024xf32>
    %157 = arith.addf %153, %156 : vector<16x1024xf32>
    %c1023_i32 = arith.constant 1023 : i32
    %158 = tpu.dynamic_rotate %132 by %c1023_i32 dim 1 : vector<12x1024xf32>, i32 -> vector<12x1024xf32>
    %c1_i32_80 = arith.constant 1 : i32
    %159 = vector.broadcast %c1_i32_80 : i32 to vector<1x1024xi32>
    %160 = arith.addi %134, %159 : vector<1x1024xi32>
    %c0_i32_81 = arith.constant 0 : i32
    %161 = vector.broadcast %c0_i32_81 : i32 to vector<1x1024xi32>
    %162 = arith.cmpi sge, %160, %161 : vector<1x1024xi32>
    %c1_i32_82 = arith.constant 1 : i32
    %163 = vector.broadcast %c1_i32_82 : i32 to vector<1x1024xi32>
    %164 = arith.addi %134, %163 : vector<1x1024xi32>
    %c8_i32_83 = arith.constant 8 : i32
    %165 = vector.broadcast %c8_i32_83 : i32 to vector<1x1024xi32>
    %166 = arith.cmpi slt, %164, %165 : vector<1x1024xi32>
    %167 = arith.andi %162, %166 : vector<1x1024xi1>
    %168 = arith.extui %167 : vector<1x1024xi1> to vector<1x1024xi32>
    %169 = arith.sitofp %168 : vector<1x1024xi32> to vector<1x1024xf32>
    %170 = vector.broadcast %169 : vector<1x1024xf32> to vector<12x1024xf32>
    %171 = arith.mulf %158, %170 : vector<12x1024xf32>
    %c2_84 = arith.constant 2 : index
    %c0_85 = arith.constant 0 : index
    %c0_86 = arith.constant 0 : index
    %172 = vector.load %arg8[%c2_84, %c0_85, %c0_86] : memref<3x16x12xf32, #tpu.memory_space<vmem>>, vector<1x16x12xf32>
    %173 = vector.shape_cast %172 : vector<1x16x12xf32> to vector<16x12xf32>
    %cst_87 = arith.constant dense<0.000000e+00> : vector<16x1024xf32>
    %174 = tpu.matmul %173, %171, %cst_87 {dimension_numbers = #tpu.dot_dimension_numbers<[1], [0], [0], [1], [0, 0, 1, 1], [], []>} : vector<16x12xf32>, vector<12x1024xf32>, vector<16x1024xf32> -> vector<16x1024xf32>
    %175 = arith.addf %157, %174 : vector<16x1024xf32>
    %cst_88 = arith.constant dense<0.000000e+00> : vector<16xf32>
    %176 = vector.multi_reduction <add>, %175, %cst_88 [1] : vector<16x1024xf32> to vector<16xf32>
    %177 = vector.shape_cast %176 : vector<16xf32> to vector<16x1xf32>
    %cst_89 = arith.constant 9.765625E-4 : f32
    %178 = vector.broadcast %cst_89 : f32 to vector<16x1xf32>
    %179 = arith.mulf %177, %178 : vector<16x1xf32>
    %180 = vector.broadcast %179 : vector<16x1xf32> to vector<16x1024xf32>
    %181 = arith.subf %175, %180 : vector<16x1024xf32>
    %182 = arith.mulf %181, %181 : vector<16x1024xf32>
    %cst_90 = arith.constant dense<0.000000e+00> : vector<16xf32>
    %183 = vector.multi_reduction <add>, %182, %cst_90 [1] : vector<16x1024xf32> to vector<16xf32>
    %184 = vector.shape_cast %183 : vector<16xf32> to vector<16x1xf32>
    %cst_91 = arith.constant 9.765625E-4 : f32
    %185 = vector.broadcast %cst_91 : f32 to vector<16x1xf32>
    %186 = arith.mulf %184, %185 : vector<16x1xf32>
    %c0_92 = arith.constant 0 : index
    %c0_93 = arith.constant 0 : index
    %187 = vector.load %arg9[%c0_92, %c0_93] : memref<16x1xf32, #tpu.memory_space<vmem>>, vector<16x1xf32>
    %cst_94 = arith.constant 9.99999974E-6 : f32
    %188 = vector.broadcast %cst_94 : f32 to vector<16x1xf32>
    %189 = arith.addf %186, %188 : vector<16x1xf32>
    %190 = math.rsqrt %189 : vector<16x1xf32>
    %191 = arith.mulf %187, %190 : vector<16x1xf32>
    %192 = vector.broadcast %191 : vector<16x1xf32> to vector<16x1024xf32>
    %193 = arith.mulf %181, %192 : vector<16x1024xf32>
    %c0_95 = arith.constant 0 : index
    %c0_96 = arith.constant 0 : index
    %194 = vector.load %arg10[%c0_95, %c0_96] : memref<16x1xf32, #tpu.memory_space<vmem>>, vector<16x1xf32>
    %195 = vector.broadcast %194 : vector<16x1xf32> to vector<16x1024xf32>
    %196 = arith.addf %193, %195 : vector<16x1024xf32>
    %cst_97 = arith.constant 0.000000e+00 : f32
    %197 = vector.broadcast %cst_97 : f32 to vector<16x1024xf32>
    %198 = arith.maximumf %196, %197 : vector<16x1024xf32>
    %c0_98 = arith.constant 0 : index
    %c0_99 = arith.constant 0 : index
    %199 = vector.load %arg11[%c0_98, %c0_99] : memref<16x1024xf32, #tpu.memory_space<vmem>>, vector<16x1024xf32>
    tpu.vector_store %arg11[%c0_98, %c0_99], %198 {strides = array<i32>} : memref<16x1024xf32, #tpu.memory_space<vmem>>, vector<16x1024xf32>,
    return
  }
}

</mosaic_0001>

<llo_original>
// kernel: _lambda_.1
$region0: #{_lambda_.1}
  #allocation0 [shape = 'u32[]', space=smem, size = 0x4, offset = 0x4, fixed_abs, tag = 'smem constant byte address 0x4 - core index']
  #allocation1 [shape = 'u32[144,128]{1,0:T(1,128)}', space=vmem, size = 0x12000, scoped, tag = 'internal scratch']
  %s0 = inlined_call_operand.vmem [shape: f32[4,1024], index: 0, kind: input, shape index: {}]
  %s1 = inlined_call_operand.vmem [shape: s32[3,1,1024], index: 1, kind: input, shape index: {}]
  %s2 = inlined_call_operand.vmem [shape: f32[3,8,4], index: 2, kind: input, shape index: {}]
  %s3 = inlined_call_operand.vmem [shape: f32[8,1], index: 3, kind: input, shape index: {}]
  %s4 = inlined_call_operand.vmem [shape: f32[8,1], index: 4, kind: input, shape index: {}]
  %s5 = inlined_call_operand.vmem [shape: f32[3,12,8], index: 5, kind: input, shape index: {}]
  %s6 = inlined_call_operand.vmem [shape: f32[12,1], index: 6, kind: input, shape index: {}]
  %s7 = inlined_call_operand.vmem [shape: f32[12,1], index: 7, kind: input, shape index: {}]
  %s8 = inlined_call_operand.vmem [shape: f32[3,16,12], index: 8, kind: input, shape index: {}]
  %s9 = inlined_call_operand.vmem [shape: f32[16,1], index: 9, kind: input, shape index: {}]
  %s10 = inlined_call_operand.vmem [shape: f32[16,1], index: 10, kind: input, shape index: {}]
  %s11 = inlined_call_operand.vmem [shape: f32[16,1024], index: 11, kind: output, shape index: {}]
  %s12 = sld [smem:[#allocation0]]
  $region54: #{_lambda_.1} parent=0
    _
  %s14 = ssub.s32 1, %s12
  %s15 = scalar_select 0, %s14, %s12
  // Predicated region
  $region2: #{_lambda_.1} parent=0 // pred_check
    _
  $region3: #{_lambda_.1} parent=0 // pred_check_branch
    %17 = sbr.rel (0) target = $region5
  $region4: #{_lambda_.1} parent=0 // pred_region
    _
  $region5: #{_lambda_.1} parent=0 // pred_fallthru
    _
  // Predicated region
  $region6: #{_lambda_.1} parent=0 // pred_check
    _
  $region7: #{_lambda_.1} parent=0 // pred_check_branch
    %19 = sbr.rel (0) target = $region9
  $region8: #{_lambda_.1} parent=0 // pred_region
    _
  $region9: #{_lambda_.1} parent=0 // pred_fallthru
    _
  // Predicated region
  $region10: #{_lambda_.1} parent=0 // pred_check
    _
  $region11: #{_lambda_.1} parent=0 // pred_check_branch
    %21 = sbr.rel (0) target = $region13
  $region12: #{_lambda_.1} parent=0 // pred_region
    _
  $region13: #{_lambda_.1} parent=0 // pred_fallthru
    _
  // Predicated region
  $region14: #{_lambda_.1} parent=0 // pred_check
    _
  $region15: #{_lambda_.1} parent=0 // pred_check_branch
    %23 = sbr.rel (0) target = $region17
  $region16: #{_lambda_.1} parent=0 // pred_region
    _
  $region17: #{_lambda_.1} parent=0 // pred_fallthru
    _
  // Predicated region
  $region18: #{_lambda_.1} parent=0 // pred_check
    _
  $region19: #{_lambda_.1} parent=0 // pred_check_branch
    %25 = sbr.rel (0) target = $region21
  $region20: #{_lambda_.1} parent=0 // pred_region
    _
  $region21: #{_lambda_.1} parent=0 // pred_fallthru
    _
  // Predicated region
  $region22: #{_lambda_.1} parent=0 // pred_check
    _
  $region23: #{_lambda_.1} parent=0 // pred_check_branch
    %27 = sbr.rel (0) target = $region25
  $region24: #{_lambda_.1} parent=0 // pred_region
    _
  $region25: #{_lambda_.1} parent=0 // pred_fallthru
    _
  // Predicated region
  $region26: #{_lambda_.1} parent=0 // pred_check
    _
  $region27: #{_lambda_.1} parent=0 // pred_check_branch
    %29 = sbr.rel (0) target = $region29
  $region28: #{_lambda_.1} parent=0 // pred_region
    _
  $region29: #{_lambda_.1} parent=0 // pred_fallthru
    _
  // Predicated region
  $region30: #{_lambda_.1} parent=0 // pred_check
    _
  $region31: #{_lambda_.1} parent=0 // pred_check_branch
    %31 = sbr.rel (0) target = $region33
  $region32: #{_lambda_.1} parent=0 // pred_region
    _
  $region33: #{_lambda_.1} parent=0 // pred_fallthru
    _
  // Predicated region
  $region34: #{_lambda_.1} parent=0 // pred_check
    _
  $region35: #{_lambda_.1} parent=0 // pred_check_branch
    %33 = sbr.rel (0) target = $region37
  $region36: #{_lambda_.1} parent=0 // pred_region
    _
  $region37: #{_lambda_.1} parent=0 // pred_fallthru
    _
  // Predicated region
  $region38: #{_lambda_.1} parent=0 // pred_check
    _
  $region39: #{_lambda_.1} parent=0 // pred_check_branch
    %35 = sbr.rel (0) target = $region41
  $region40: #{_lambda_.1} parent=0 // pred_region
    _
  $region41: #{_lambda_.1} parent=0 // pred_fallthru
    _
  // Predicated region
  $region42: #{_lambda_.1} parent=0 // pred_check
    _
  $region43: #{_lambda_.1} parent=0 // pred_check_branch
    %37 = sbr.rel (0) target = $region45
  $region44: #{_lambda_.1} parent=0 // pred_region
    _
  $region45: #{_lambda_.1} parent=0 // pred_fallthru
    _
  %v38 = vld [vmem:[%s0] sm:$0xff]
  %v39 = vld [vmem:[%s0 + $0x8] sm:$0xff]
  %v40 = vld [vmem:[%s0 + $0x10] sm:$0xff]
  %v41 = vld [vmem:[%s0 + $0x18] sm:$0xff]
  %v42 = vld [vmem:[%s1] sm:$0xff]
  %v47 = vcombine.high %v38, %v38
  %v48 = vcombine.high %v39, %v39
  %v49 = vcombine.high %v40, %v40
  %v50 = vcombine.high %v41, %v41
  %55 = vrot.lane.b32.xlu0 %v38, 64
  %v56 = vpop.permute.xlu0 %55
  %57 = vrot.lane.b32.xlu0 %v47, 64
  %v58 = vpop.permute.xlu0 %57
  %59 = vrot.lane.b32.xlu0 %v39, 64
  %v60 = vpop.permute.xlu0 %59
  %61 = vrot.lane.b32.xlu0 %v48, 64
  %v62 = vpop.permute.xlu0 %61
  %63 = vrot.lane.b32.xlu0 %v40, 64
  %v64 = vpop.permute.xlu0 %63
  %65 = vrot.lane.b32.xlu0 %v49, 64
  %v66 = vpop.permute.xlu0 %65
  %67 = vrot.lane.b32.xlu0 %v41, 64
  %v68 = vpop.permute.xlu0 %67
  %69 = vrot.lane.b32.xlu0 %v50, 64
  %v70 = vpop.permute.xlu0 %69
  %v71 = vlaneseq
  %v72 = vand.u32 %v71, 127
  %vm73 = vcmp.lt.s32.totalorder %v72, 64
  %v74 = vsel %vm73, %v68, %v70
  %v75 = vsel %vm73, %v66, %v68
  %v76 = vsel %vm73, %v64, %v66
  %v77 = vsel %vm73, %v62, %v64
  %v78 = vsel %vm73, %v60, %v62
  %v79 = vsel %vm73, %v58, %v60
  %v80 = vsel %vm73, %v56, %v58
  %v81 = vsel %vm73, %v70, %v56
  %v82 = vadd.s32 %v42, 4294967295
  %vm83 = vcmp.ge.s32.totalorder %v82, 0
  %vm84 = vcmp.lt.s32.totalorder %v82, 8
  %vm85 = vmand %vm83, %vm84
  %v86 = vsel %vm85, 1, 0
  %v87 = vcvt.s32.f32 %v86
  %v89 = vlaneseq
  %v90 = vshrl.u32 %v89, 7
  %v91 = vsub.s32 0, %v90
  %v92 = vrot.slane %v87, %v91
  %v93 = vlaneseq
  %v94 = vshrl.u32 %v93, 7
  %v95 = vsub.s32 1, %v94
  %v96 = vrot.slane %v87, %v95
  %v97 = vlaneseq
  %v98 = vshrl.u32 %v97, 7
  %v99 = vsub.s32 2, %v98
  %v100 = vrot.slane %v87, %v99
  %v101 = vlaneseq
  %v102 = vshrl.u32 %v101, 7
  %v103 = vsub.s32 3, %v102
  %v104 = vrot.slane %v87, %v103
  %v105 = vlaneseq
  %v106 = vshrl.u32 %v105, 7
  %v107 = vsub.s32 4, %v106
  %v108 = vrot.slane %v87, %v107
  %v109 = vlaneseq
  %v110 = vshrl.u32 %v109, 7
  %v111 = vsub.s32 5, %v110
  %v112 = vrot.slane %v87, %v111
  %v113 = vlaneseq
  %v114 = vshrl.u32 %v113, 7
  %v115 = vsub.s32 6, %v114
  %v116 = vrot.slane %v87, %v115
  %v117 = vlaneseq
  %v118 = vshrl.u32 %v117, 7
  %v119 = vsub.s32 7, %v118
  %v120 = vrot.slane %v87, %v119
  %v129 = vmul.f32 %v81, %v92
  %v130 = vmul.f32 %v80, %v96
  %v131 = vmul.f32 %v79, %v100
  %v132 = vmul.f32 %v78, %v104
  %v133 = vmul.f32 %v77, %v108
  %v134 = vmul.f32 %v76, %v112
  %v135 = vmul.f32 %v75, %v116
  %v136 = vmul.f32 %v74, %v120
  %v137 = vld [vmem:[%s2] sm:$0xff]
  %s138 = scalar_lea.vmem %s2, 8
  %v139 = vld [vmem:[%s138] sm:$0xff]
  %vm140 = vcmask 31744
  %v142 = vsel %vm140, %v139, 0
  %vm144 = vcmask 1043456
  %v145 = vsel %vm144, %v38, 0
  %v147 = vsel %vm144, %v47, 0
  %v149 = vsel %vm144, %v39, 0
  %v151 = vsel %vm144, %v48, 0
  %v153 = vsel %vm144, %v40, 0
  %v155 = vsel %vm144, %v49, 0
  %v157 = vsel %vm144, %v41, 0
  %v159 = vsel %vm144, %v50, 0
  %161 = vmatprep.subr.mxu0 %v147
  %162 = vmatpush1.msra.mxu0 %v145
  %163 = vmatprep.subr.mxu0 0.0
  %164 = vmatpush1.msra.mxu0 0.0
  %165 = vmatprep.subr.mxu0 0.0
  %166 = vmatpush1.msra.mxu0 0.0
  %167 = vmatprep.subr.mxu0 0.0
  %168 = vmatpush1.msra.mxu0 0.0
  %169 = vmatprep.subr.mxu0 0.0
  %170 = vmatpush1.msra.mxu0 0.0
  %171 = vmatprep.subr.mxu0 0.0
  %172 = vmatpush1.msra.mxu0 0.0
  %173 = vmatprep.subr.mxu0 0.0
  %174 = vmatpush1.msra.mxu0 0.0
  %175 = vmatprep.subr.mxu0 0.0
  %176 = vmatpush1.msra.mxu0 0.0
  %177 = vmatprep.subr.mxu0 0.0
  %178 = vmatpush1.msra.mxu0 0.0
  %179 = vmatprep.subr.mxu0 0.0
  %180 = vmatpush1.msra.mxu0 0.0
  %181 = vmatprep.subr.mxu0 0.0
  %182 = vmatpush1.msra.mxu0 0.0
  %183 = vmatprep.subr.mxu0 0.0
  %184 = vmatpush1.msra.mxu0 0.0
  %185 = vmatprep.subr.mxu0 0.0
  %186 = vmatpush1.msra.mxu0 0.0
  %187 = vmatprep.subr.mxu0 0.0
  %188 = vmatpush1.msra.mxu0 0.0
  %189 = vmatprep.subr.mxu0 0.0
  %190 = vmatpush1.msra.mxu0 0.0
  %191 = vmatprep.subr.mxu0 0.0
  %192 = vmatpush1.msra.mxu0 0.0
  %193 = vmatprep.subr.mxu0 0.0
  %194 = vmatpush1.msra.mxu0 0.0
  %195 = vmatprep.subr.mxu0 0.0
  %196 = vmatpush1.msra.mxu0 0.0
  %197 = vmatprep.subr.mxu0 0.0
  %198 = vmatpush1.msra.mxu0 0.0
  %199 = vmatprep.subr.mxu0 0.0
  %200 = vmatpush1.msra.mxu0 0.0
  %201 = vmatprep.subr.mxu0 0.0
  %202 = vmatpush1.msra.mxu0 0.0
  %203 = vmatprep.subr.mxu0 0.0
  %204 = vmatpush1.msra.mxu0 0.0
  %205 = vmatprep.subr.mxu0 0.0
  %206 = vmatpush1.msra.mxu0 0.0
  %207 = vmatprep.subr.mxu0 0.0
  %208 = vmatpush1.msra.mxu0 0.0
  %209 = vmatprep.subr.mxu0 0.0
  %210 = vmatpush1.msra.mxu0 0.0
  %211 = vmatprep.subr.mxu0 0.0
  %212 = vmatpush1.msra.mxu0 0.0
  %213 = vmatprep.subr.mxu0 0.0
  %214 = vmatpush1.msra.mxu0 0.0
  %215 = vmatprep.subr.mxu0 0.0
  %216 = vmatpush1.msra.mxu0 0.0
  %217 = vmatprep.subr.mxu0 0.0
  %218 = vmatpush1.msra.mxu0 0.0
  %219 = vmatprep.subr.mxu0 0.0
  %220 = vmatpush1.msra.mxu0 0.0
  %221 = vmatprep.subr.mxu0 0.0
  %222 = vmatpush1.msra.mxu0 0.0
  %223 = vmatprep.subr.mxu0 0.0
  %224 = vmatpush1.msra.mxu0 0.0
  %225 = vmatprep.mubr.f32.mxu0 0.0
  %226 = vmatmul.mubr.f32.gmra.mrb[0].mxu0 %v142
  %v227 = vpop.f32.mrb[0].mxu0
  %v228 = vadd.f32 0.0, %v227
  %v229 = vpop.f32.mrb[0].mxu0
  %v230 = vadd.f32 0.0, %v229
  %231 = vdwg.mxu0
  %232 = vmatprep.subr.mxu0 %v151
  %233 = vmatpush1.msra.mxu0 %v149
  %234 = vmatprep.subr.mxu0 0.0
  %235 = vmatpush1.msra.mxu0 0.0
  %236 = vmatprep.subr.mxu0 0.0
  %237 = vmatpush1.msra.mxu0 0.0
  %238 = vmatprep.subr.mxu0 0.0
  %239 = vmatpush1.msra.mxu0 0.0
  %240 = vmatprep.subr.mxu0 0.0
  %241 = vmatpush1.msra.mxu0 0.0
  %242 = vmatprep.subr.mxu0 0.0
  %243 = vmatpush1.msra.mxu0 0.0
  %244 = vmatprep.subr.mxu0 0.0
  %245 = vmatpush1.msra.mxu0 0.0
  %246 = vmatprep.subr.mxu0 0.0
  %247 = vmatpush1.msra.mxu0 0.0
  %248 = vmatprep.subr.mxu0 0.0
  %249 = vmatpush1.msra.mxu0 0.0
  %250 = vmatprep.subr.mxu0 0.0
  %251 = vmatpush1.msra.mxu0 0.0
  %252 = vmatprep.subr.mxu0 0.0
  %253 = vmatpush1.msra.mxu0 0.0
  %254 = vmatprep.subr.mxu0 0.0
  %255 = vmatpush1.msra.mxu0 0.0
  %256 = vmatprep.subr.mxu0 0.0
  %257 = vmatpush1.msra.mxu0 0.0
  %258 = vmatprep.subr.mxu0 0.0
  %259 = vmatpush1.msra.mxu0 0.0
  %260 = vmatprep.subr.mxu0 0.0
  %261 = vmatpush1.msra.mxu0 0.0
  %262 = vmatprep.subr.mxu0 0.0
  %263 = vmatpush1.msra.mxu0 0.0
  %264 = vmatprep.subr.mxu0 0.0
  %265 = vmatpush1.msra.mxu0 0.0
  %266 = vmatprep.subr.mxu0 0.0
  %267 = vmatpush1.msra.mxu0 0.0
  %268 = vmatprep.subr.mxu0 0.0
  %269 = vmatpush1.msra.mxu0 0.0
  %270 = vmatprep.subr.mxu0 0.0
  %271 = vmatpush1.msra.mxu0 0.0
  %272 = vmatprep.subr.mxu0 0.0
  %273 = vmatpush1.msra.mxu0 0.0
  %274 = vmatprep.subr.mxu0 0.0
  %275 = vmatpush1.msra.mxu0 0.0
  %276 = vmatprep.subr.mxu0 0.0
  %277 = vmatpush1.msra.mxu0 0.0
  %278 = vmatprep.subr.mxu0 0.0
  %279 = vmatpush1.msra.mxu0 0.0
  %280 = vmatprep.subr.mxu0 0.0
  %281 = vmatpush1.msra.mxu0 0.0
  %282 = vmatprep.subr.mxu0 0.0
  %283 = vmatpush1.msra.mxu0 0.0
  %284 = vmatprep.subr.mxu0 0.0
  %285 = vmatpush1.msra.mxu0 0.0
  %286 = vmatprep.subr.mxu0 0.0
  %287 = vmatpush1.msra.mxu0 0.0
  %288 = vmatprep.subr.mxu0 0.0
  %289 = vmatpush1.msra.mxu0 0.0
  %290 = vmatprep.subr.mxu0 0.0
  %291 = vmatpush1.msra.mxu0 0.0
  %292 = vmatprep.subr.mxu0 0.0
  %293 = vmatpush1.msra.mxu0 0.0
  %294 = vmatprep.subr.mxu0 0.0
  %295 = vmatpush1.msra.mxu0 0.0
  %296 = vmatprep.mubr.f32.mxu0 0.0
  %297 = vmatmul.mubr.f32.gmra.mrb[0].mxu0 %v142
  %v298 = vpop.f32.mrb[0].mxu0
  %v299 = vadd.f32 0.0, %v298
  %v300 = vpop.f32.mrb[0].mxu0
  %v301 = vadd.f32 0.0, %v300
  %302 = vdwg.mxu0
  %303 = vmatprep.subr.mxu0 %v155
  %304 = vmatpush1.msra.mxu0 %v153
  %305 = vmatprep.subr.mxu0 0.0
  %306 = vmatpush1.msra.mxu0 0.0
  %307 = vmatprep.subr.mxu0 0.0
  %308 = vmatpush1.msra.mxu0 0.0
  %309 = vmatprep.subr.mxu0 0.0
  %310 = vmatpush1.msra.mxu0 0.0
  %311 = vmatprep.subr.mxu0 0.0
  %312 = vmatpush1.msra.mxu0 0.0
  %313 = vmatprep.subr.mxu0 0.0
  %314 = vmatpush1.msra.mxu0 0.0
  %315 = vmatprep.subr.mxu0 0.0
  %316 = vmatpush1.msra.mxu0 0.0
  %317 = vmatprep.subr.mxu0 0.0
  %318 = vmatpush1.msra.mxu0 0.0
  %319 = vmatprep.subr.mxu0 0.0
  %320 = vmatpush1.msra.mxu0 0.0
  %321 = vmatprep.subr.mxu0 0.0
  %322 = vmatpush1.msra.mxu0 0.0
  %323 = vmatprep.subr.mxu0 0.0
  %324 = vmatpush1.msra.mxu0 0.0
  %325 = vmatprep.subr.mxu0 0.0
  %326 = vmatpush1.msra.mxu0 0.0
  %327 = vmatprep.subr.mxu0 0.0
  %328 = vmatpush1.msra.mxu0 0.0
  %329 = vmatprep.subr.mxu0 0.0
  %330 = vmatpush1.msra.mxu0 0.0
  %331 = vmatprep.subr.mxu0 0.0
  %332 = vmatpush1.msra.mxu0 0.0
  %333 = vmatprep.subr.mxu0 0.0
  %334 = vmatpush1.msra.mxu0 0.0
  %335 = vmatprep.subr.mxu0 0.0
  %336 = vmatpush1.msra.mxu0 0.0
  %337 = vmatprep.subr.mxu0 0.0
  %338 = vmatpush1.msra.mxu0 0.0
  %339 = vmatprep.subr.mxu0 0.0
  %340 = vmatpush1.msra.mxu0 0.0
  %341 = vmatprep.subr.mxu0 0.0
  %342 = vmatpush1.msra.mxu0 0.0
  %343 = vmatprep.subr.mxu0 0.0
  %344 = vmatpush1.msra.mxu0 0.0
  %345 = vmatprep.subr.mxu0 0.0
  %346 = vmatpush1.msra.mxu0 0.0
  %347 = vmatprep.subr.mxu0 0.0
  %348 = vmatpush1.msra.mxu0 0.0
  %349 = vmatprep.subr.mxu0 0.0
  %350 = vmatpush1.msra.mxu0 0.0
  %351 = vmatprep.subr.mxu0 0.0
  %352 = vmatpush1.msra.mxu0 0.0
  %353 = vmatprep.subr.mxu0 0.0
  %354 = vmatpush1.msra.mxu0 0.0
  %355 = vmatprep.subr.mxu0 0.0
  %356 = vmatpush1.msra.mxu0 0.0
  %357 = vmatprep.subr.mxu0 0.0
  %358 = vmatpush1.msra.mxu0 0.0
  %359 = vmatprep.subr.mxu0 0.0
  %360 = vmatpush1.msra.mxu0 0.0
  %361 = vmatprep.subr.mxu0 0.0
  %362 = vmatpush1.msra.mxu0 0.0
  %363 = vmatprep.subr.mxu0 0.0
  %364 = vmatpush1.msra.mxu0 0.0
  %365 = vmatprep.subr.mxu0 0.0
  %366 = vmatpush1.msra.mxu0 0.0
  %367 = vmatprep.mubr.f32.mxu0 0.0
  %368 = vmatmul.mubr.f32.gmra.mrb[0].mxu0 %v142
  %v369 = vpop.f32.mrb[0].mxu0
  %v370 = vadd.f32 0.0, %v369
  %v371 = vpop.f32.mrb[0].mxu0
  %v372 = vadd.f32 0.0, %v371
  %373 = vdwg.mxu0
  %374 = vmatprep.subr.mxu0 %v159
  %375 = vmatpush1.msra.mxu0 %v157
  %376 = vmatprep.subr.mxu0 0.0
  %377 = vmatpush1.msra.mxu0 0.0
  %378 = vmatprep.subr.mxu0 0.0
  %379 = vmatpush1.msra.mxu0 0.0
  %380 = vmatprep.subr.mxu0 0.0
  %381 = vmatpush1.msra.mxu0 0.0
  %382 = vmatprep.subr.mxu0 0.0
  %383 = vmatpush1.msra.mxu0 0.0
  %384 = vmatprep.subr.mxu0 0.0
  %385 = vmatpush1.msra.mxu0 0.0
  %386 = vmatprep.subr.mxu0 0.0
  %387 = vmatpush1.msra.mxu0 0.0
  %388 = vmatprep.subr.mxu0 0.0
  %389 = vmatpush1.msra.mxu0 0.0
  %390 = vmatprep.subr.mxu0 0.0
  %391 = vmatpush1.msra.mxu0 0.0
  %392 = vmatprep.subr.mxu0 0.0
  %393 = vmatpush1.msra.mxu0 0.0
  %394 = vmatprep.subr.mxu0 0.0
  %395 = vmatpush1.msra.mxu0 0.0
  %396 = vmatprep.subr.mxu0 0.0
  %397 = vmatpush1.msra.mxu0 0.0
  %398 = vmatprep.subr.mxu0 0.0
  %399 = vmatpush1.msra.mxu0 0.0
  %400 = vmatprep.subr.mxu0 0.0
  %401 = vmatpush1.msra.mxu0 0.0
  %402 = vmatprep.subr.mxu0 0.0
  %403 = vmatpush1.msra.mxu0 0.0
  %404 = vmatprep.subr.mxu0 0.0
  %405 = vmatpush1.msra.mxu0 0.0
  %406 = vmatprep.subr.mxu0 0.0
  %407 = vmatpush1.msra.mxu0 0.0
  %408 = vmatprep.subr.mxu0 0.0
  %409 = vmatpush1.msra.mxu0 0.0
  %410 = vmatprep.subr.mxu0 0.0
  %411 = vmatpush1.msra.mxu0 0.0
  %412 = vmatprep.subr.mxu0 0.0
  %413 = vmatpush1.msra.mxu0 0.0
  %414 = vmatprep.subr.mxu0 0.0
  %415 = vmatpush1.msra.mxu0 0.0
  %416 = vmatprep.subr.mxu0 0.0
  %417 = vmatpush1.msra.mxu0 0.0
  %418 = vmatprep.subr.mxu0 0.0
  %419 = vmatpush1.msra.mxu0 0.0
  %420 = vmatprep.subr.mxu0 0.0
  %421 = vmatpush1.msra.mxu0 0.0
  %422 = vmatprep.subr.mxu0 0.0
  %423 = vmatpush1.msra.mxu0 0.0
  %424 = vmatprep.subr.mxu0 0.0
  %425 = vmatpush1.msra.mxu0 0.0
  %426 = vmatprep.subr.mxu0 0.0
  %427 = vmatpush1.msra.mxu0 0.0
  %428 = vmatprep.subr.mxu0 0.0
  %429 = vmatpush1.msra.mxu0 0.0
  %430 = vmatprep.subr.mxu0 0.0
  %431 = vmatpush1.msra.mxu0 0.0
  %432 = vmatprep.subr.mxu0 0.0
  %433 = vmatpush1.msra.mxu0 0.0
  %434 = vmatprep.subr.mxu0 0.0
  %435 = vmatpush1.msra.mxu0 0.0
  %436 = vmatprep.subr.mxu0 0.0
  %437 = vmatpush1.msra.mxu0 0.0
  %438 = vmatprep.mubr.f32.mxu0 0.0
  %439 = vmatmul.mubr.f32.gmra.mrb[0].mxu0 %v142
  %v440 = vpop.f32.mrb[0].mxu0
  %v441 = vadd.f32 0.0, %v440
  %v442 = vpop.f32.mrb[0].mxu0
  %v443 = vadd.f32 0.0, %v442
  %444 = vdwg.mxu0
  %v446 = vsel %vm140, %v137, 0
  %v449 = vsel %vm144, %v129, 0
  %v452 = vsel %vm144, %v130, 0
  %v455 = vsel %vm144, %v131, 0
  %v458 = vsel %vm144, %v132, 0
  %v461 = vsel %vm144, %v133, 0
  %v464 = vsel %vm144, %v134, 0
  %v467 = vsel %vm144, %v135, 0
  %v470 = vsel %vm144, %v136, 0
  %472 = vmatprep.subr.mxu0 %v452
  %473 = vmatpush1.msra.mxu0 %v449
  %474 = vmatprep.subr.mxu0 0.0
  %475 = vmatpush1.msra.mxu0 0.0
  %476 = vmatprep.subr.mxu0 0.0
  %477 = vmatpush1.msra.mxu0 0.0
  %478 = vmatprep.subr.mxu0 0.0
  %479 = vmatpush1.msra.mxu0 0.0
  %480 = vmatprep.subr.mxu0 0.0
  %481 = vmatpush1.msra.mxu0 0.0
  %482 = vmatprep.subr.mxu0 0.0
  %483 = vmatpush1.msra.mxu0 0.0
  %484 = vmatprep.subr.mxu0 0.0
  %485 = vmatpush1.msra.mxu0 0.0
  %486 = vmatprep.subr.mxu0 0.0
  %487 = vmatpush1.msra.mxu0 0.0
  %488 = vmatprep.subr.mxu0 0.0
  %489 = vmatpush1.msra.mxu0 0.0
  %490 = vmatprep.subr.mxu0 0.0
  %491 = vmatpush1.msra.mxu0 0.0
  %492 = vmatprep.subr.mxu0 0.0
  %493 = vmatpush1.msra.mxu0 0.0
  %494 = vmatprep.subr.mxu0 0.0
  %495 = vmatpush1.msra.mxu0 0.0
  %496 = vmatprep.subr.mxu0 0.0
  %497 = vmatpush1.msra.mxu0 0.0
  %498 = vmatprep.subr.mxu0 0.0
  %499 = vmatpush1.msra.mxu0 0.0
  %500 = vmatprep.subr.mxu0 0.0
  %501 = vmatpush1.msra.mxu0 0.0
  %502 = vmatprep.subr.mxu0 0.0
  %503 = vmatpush1.msra.mxu0 0.0
  %504 = vmatprep.subr.mxu0 0.0
  %505 = vmatpush1.msra.mxu0 0.0
  %506 = vmatprep.subr.mxu0 0.0
  %507 = vmatpush1.msra.mxu0 0.0
  %508 = vmatprep.subr.mxu0 0.0
  %509 = vmatpush1.msra.mxu0 0.0
  %510 = vmatprep.subr.mxu0 0.0
  %511 = vmatpush1.msra.mxu0 0.0
  %512 = vmatprep.subr.mxu0 0.0
  %513 = vmatpush1.msra.mxu0 0.0
  %514 = vmatprep.subr.mxu0 0.0
  %515 = vmatpush1.msra.mxu0 0.0
  %516 = vmatprep.subr.mxu0 0.0
  %517 = vmatpush1.msra.mxu0 0.0
  %518 = vmatprep.subr.mxu0 0.0
  %519 = vmatpush1.msra.mxu0 0.0
  %520 = vmatprep.subr.mxu0 0.0
  %521 = vmatpush1.msra.mxu0 0.0
  %522 = vmatprep.subr.mxu0 0.0
  %523 = vmatpush1.msra.mxu0 0.0
  %524 = vmatprep.subr.mxu0 0.0
  %525 = vmatpush1.msra.mxu0 0.0
  %526 = vmatprep.subr.mxu0 0.0
  %527 = vmatpush1.msra.mxu0 0.0
  %528 = vmatprep.subr.mxu0 0.0
  %529 = vmatpush1.msra.mxu0 0.0
  %530 = vmatprep.subr.mxu0 0.0
  %531 = vmatpush1.msra.mxu0 0.0
  %532 = vmatprep.subr.mxu0 0.0
  %533 = vmatpush1.msra.mxu0 0.0
  %534 = vmatprep.subr.mxu0 0.0
  %535 = vmatpush1.msra.mxu0 0.0
  %536 = vmatprep.mubr.f32.mxu0 0.0
  %537 = vmatmul.mubr.f32.gmra.mrb[0].mxu0 %v446
  %v538 = vpop.f32.mrb[0].mxu0
  %v539 = vadd.f32 %v228, %v538
  %v540 = vpop.f32.mrb[0].mxu0
  %v541 = vadd.f32 %v230, %v540
  %542 = vdwg.mxu0
  %543 = vmatprep.subr.mxu0 %v458
  %544 = vmatpush1.msra.mxu0 %v455
  %545 = vmatprep.subr.mxu0 0.0
  %546 = vmatpush1.msra.mxu0 0.0
  %547 = vmatprep.subr.mxu0 0.0
  %548 = vmatpush1.msra.mxu0 0.0
  %549 = vmatprep.subr.mxu0 0.0
  %550 = vmatpush1.msra.mxu0 0.0
  %551 = vmatprep.subr.mxu0 0.0
  %552 = vmatpush1.msra.mxu0 0.0
  %553 = vmatprep.subr.mxu0 0.0
  %554 = vmatpush1.msra.mxu0 0.0
  %555 = vmatprep.subr.mxu0 0.0
  %556 = vmatpush1.msra.mxu0 0.0
  %557 = vmatprep.subr.mxu0 0.0
  %558 = vmatpush1.msra.mxu0 0.0
  %559 = vmatprep.subr.mxu0 0.0
  %560 = vmatpush1.msra.mxu0 0.0
  %561 = vmatprep.subr.mxu0 0.0
  %562 = vmatpush1.msra.mxu0 0.0
  %563 = vmatprep.subr.mxu0 0.0
  %564 = vmatpush1.msra.mxu0 0.0
  %565 = vmatprep.subr.mxu0 0.0
  %566 = vmatpush1.msra.mxu0 0.0
  %567 = vmatprep.subr.mxu0 0.0
  %568 = vmatpush1.msra.mxu0 0.0
  %569 = vmatprep.subr.mxu0 0.0
  %570 = vmatpush1.msra.mxu0 0.0
  %571 = vmatprep.subr.mxu0 0.0
  %572 = vmatpush1.msra.mxu0 0.0
  %573 = vmatprep.subr.mxu0 0.0
  %574 = vmatpush1.msra.mxu0 0.0
  %575 = vmatprep.subr.mxu0 0.0
  %576 = vmatpush1.msra.mxu0 0.0
  %577 = vmatprep.subr.mxu0 0.0
  %578 = vmatpush1.msra.mxu0 0.0
  %579 = vmatprep.subr.mxu0 0.0
  %580 = vmatpush1.msra.mxu0 0.0
  %581 = vmatprep.subr.mxu0 0.0
  %582 = vmatpush1.msra.mxu0 0.0
  %583 = vmatprep.subr.mxu0 0.0
  %584 = vmatpush1.msra.mxu0 0.0
  %585 = vmatprep.subr.mxu0 0.0
  %586 = vmatpush1.msra.mxu0 0.0
  %587 = vmatprep.subr.mxu0 0.0
  %588 = vmatpush1.msra.mxu0 0.0
  %589 = vmatprep.subr.mxu0 0.0
  %590 = vmatpush1.msra.mxu0 0.0
  %591 = vmatprep.subr.mxu0 0.0
  %592 = vmatpush1.msra.mxu0 0.0
  %593 = vmatprep.subr.mxu0 0.0
  %594 = vmatpush1.msra.mxu0 0.0
  %595 = vmatprep.subr.mxu0 0.0
  %596 = vmatpush1.msra.mxu0 0.0
  %597 = vmatprep.subr.mxu0 0.0
  %598 = vmatpush1.msra.mxu0 0.0
  %599 = vmatprep.subr.mxu0 0.0
  %600 = vmatpush1.msra.mxu0 0.0
  %601 = vmatprep.subr.mxu0 0.0
  %602 = vmatpush1.msra.mxu0 0.0
  %603 = vmatprep.subr.mxu0 0.0
  %604 = vmatpush1.msra.mxu0 0.0
  %605 = vmatprep.subr.mxu0 0.0
  %606 = vmatpush1.msra.mxu0 0.0
  %607 = vmatprep.mubr.f32.mxu0 0.0
  %608 = vmatmul.mubr.f32.gmra.mrb[0].mxu0 %v446
  %v609 = vpop.f32.mrb[0].mxu0
  %v610 = vadd.f32 %v299, %v609
  %v611 = vpop.f32.mrb[0].mxu0
  %v612 = vadd.f32 %v301, %v611
  %613 = vdwg.mxu0
  %614 = vmatprep.subr.mxu0 %v464
  %615 = vmatpush1.msra.mxu0 %v461
  %616 = vmatprep.subr.mxu0 0.0
  %617 = vmatpush1.msra.mxu0 0.0
  %618 = vmatprep.subr.mxu0 0.0
  %619 = vmatpush1.msra.mxu0 0.0
  %620 = vmatprep.subr.mxu0 0.0
  %621 = vmatpush1.msra.mxu0 0.0
  %622 = vmatprep.subr.mxu0 0.0
  %623 = vmatpush1.msra.mxu0 0.0
  %624 = vmatprep.subr.mxu0 0.0
  %625 = vmatpush1.msra.mxu0 0.0
  %626 = vmatprep.subr.mxu0 0.0
  %627 = vmatpush1.msra.mxu0 0.0
  %628 = vmatprep.subr.mxu0 0.0
  %629 = vmatpush1.msra.mxu0 0.0
  %630 = vmatprep.subr.mxu0 0.0
  %631 = vmatpush1.msra.mxu0 0.0
  %632 = vmatprep.subr.mxu0 0.0
  %633 = vmatpush1.msra.mxu0 0.0
  %634 = vmatprep.subr.mxu0 0.0
  %635 = vmatpush1.msra.mxu0 0.0
  %636 = vmatprep.subr.mxu0 0.0
  %637 = vmatpush1.msra.mxu0 0.0
  %638 = vmatprep.subr.mxu0 0.0
  %639 = vmatpush1.msra.mxu0 0.0
  %640 = vmatprep.subr.mxu0 0.0
  %641 = vmatpush1.msra.mxu0 0.0
  %642 = vmatprep.subr.mxu0 0.0
  %643 = vmatpush1.msra.mxu0 0.0
  %644 = vmatprep.subr.mxu0 0.0
  %645 = vmatpush1.msra.mxu0 0.0
  %646 = vmatprep.subr.mxu0 0.0
  %647 = vmatpush1.msra.mxu0 0.0
  %648 = vmatprep.subr.mxu0 0.0
  %649 = vmatpush1.msra.mxu0 0.0
  %650 = vmatprep.subr.mxu0 0.0
  %651 = vmatpush1.msra.mxu0 0.0
  %652 = vmatprep.subr.mxu0 0.0
  %653 = vmatpush1.msra.mxu0 0.0
  %654 = vmatprep.subr.mxu0 0.0
  %655 = vmatpush1.msra.mxu0 0.0
  %656 = vmatprep.subr.mxu0 0.0
  %657 = vmatpush1.msra.mxu0 0.0
  %658 = vmatprep.subr.mxu0 0.0
  %659 = vmatpush1.msra.mxu0 0.0
  %660 = vmatprep.subr.mxu0 0.0
  %661 = vmatpush1.msra.mxu0 0.0
  %662 = vmatprep.subr.mxu0 0.0
  %663 = vmatpush1.msra.mxu0 0.0
  %664 = vmatprep.subr.mxu0 0.0
  %665 = vmatpush1.msra.mxu0 0.0
  %666 = vmatprep.subr.mxu0 0.0
  %667 = vmatpush1.msra.mxu0 0.0
  %668 = vmatprep.subr.mxu0 0.0
  %669 = vmatpush1.msra.mxu0 0.0
  %670 = vmatprep.subr.mxu0 0.0
  %671 = vmatpush1.msra.mxu0 0.0
  %672 = vmatprep.subr.mxu0 0.0
  %673 = vmatpush1.msra.mxu0 0.0
  %674 = vmatprep.subr.mxu0 0.0
  %675 = vmatpush1.msra.mxu0 0.0
  %676 = vmatprep.subr.mxu0 0.0
  %677 = vmatpush1.msra.mxu0 0.0
  %678 = vmatprep.mubr.f32.mxu0 0.0
  %679 = vmatmul.mubr.f32.gmra.mrb[0].mxu0 %v446
  %v680 = vpop.f32.mrb[0].mxu0
  %v681 = vadd.f32 %v370, %v680
  %v682 = vpop.f32.mrb[0].mxu0
  %v683 = vadd.f32 %v372, %v682
  %684 = vdwg.mxu0
  %685 = vmatprep.subr.mxu0 %v470
  %686 = vmatpush1.msra.mxu0 %v467
  %687 = vmatprep.subr.mxu0 0.0
  %688 = vmatpush1.msra.mxu0 0.0
  %689 = vmatprep.subr.mxu0 0.0
  %690 = vmatpush1.msra.mxu0 0.0
  %691 = vmatprep.subr.mxu0 0.0
  %692 = vmatpush1.msra.mxu0 0.0
  %693 = vmatprep.subr.mxu0 0.0
  %694 = vmatpush1.msra.mxu0 0.0
  %695 = vmatprep.subr.mxu0 0.0
  %696 = vmatpush1.msra.mxu0 0.0
  %697 = vmatprep.subr.mxu0 0.0
  %698 = vmatpush1.msra.mxu0 0.0
  %699 = vmatprep.subr.mxu0 0.0
  %700 = vmatpush1.msra.mxu0 0.0
  %701 = vmatprep.subr.mxu0 0.0
  %702 = vmatpush1.msra.mxu0 0.0
  %703 = vmatprep.subr.mxu0 0.0
  %704 = vmatpush1.msra.mxu0 0.0
  %705 = vmatprep.subr.mxu0 0.0
  %706 = vmatpush1.msra.mxu0 0.0
  %707 = vmatprep.subr.mxu0 0.0
  %708 = vmatpush1.msra.mxu0 0.0
  %709 = vmatprep.subr.mxu0 0.0
  %710 = vmatpush1.msra.mxu0 0.0
  %711 = vmatprep.subr.mxu0 0.0
  %712 = vmatpush1.msra.mxu0 0.0
  %713 = vmatprep.subr.mxu0 0.0
  %714 = vmatpush1.msra.mxu0 0.0
  %715 = vmatprep.subr.mxu0 0.0
  %716 = vmatpush1.msra.mxu0 0.0
  %717 = vmatprep.subr.mxu0 0.0
  %718 = vmatpush1.msra.mxu0 0.0
  %719 = vmatprep.subr.mxu0 0.0
  %720 = vmatpush1.msra.mxu0 0.0
  %721 = vmatprep.subr.mxu0 0.0
  %722 = vmatpush1.msra.mxu0 0.0
  %723 = vmatprep.subr.mxu0 0.0
  %724 = vmatpush1.msra.mxu0 0.0
  %725 = vmatprep.subr.mxu0 0.0
  %726 = vmatpush1.msra.mxu0 0.0
  %727 = vmatprep.subr.mxu0 0.0
  %728 = vmatpush1.msra.mxu0 0.0
  %729 = vmatprep.subr.mxu0 0.0
  %730 = vmatpush1.msra.mxu0 0.0
  %731 = vmatprep.subr.mxu0 0.0
  %732 = vmatpush1.msra.mxu0 0.0
  %733 = vmatprep.subr.mxu0 0.0
  %734 = vmatpush1.msra.mxu0 0.0
  %735 = vmatprep.subr.mxu0 0.0
  %736 = vmatpush1.msra.mxu0 0.0
  %737 = vmatprep.subr.mxu0 0.0
  %738 = vmatpush1.msra.mxu0 0.0
  %739 = vmatprep.subr.mxu0 0.0
  %740 = vmatpush1.msra.mxu0 0.0
  %741 = vmatprep.subr.mxu0 0.0
  %742 = vmatpush1.msra.mxu0 0.0
  %743 = vmatprep.subr.mxu0 0.0
  %744 = vmatpush1.msra.mxu0 0.0
  %745 = vmatprep.subr.mxu0 0.0
  %746 = vmatpush1.msra.mxu0 0.0
  %747 = vmatprep.subr.mxu0 0.0
  %748 = vmatpush1.msra.mxu0 0.0
  %749 = vmatprep.mubr.f32.mxu0 0.0
  %750 = vmatmul.mubr.f32.gmra.mrb[0].mxu0 %v446
  %v751 = vpop.f32.mrb[0].mxu0
  %v752 = vadd.f32 %v441, %v751
  %v753 = vpop.f32.mrb[0].mxu0
  %v754 = vadd.f32 %v443, %v753
  %755 = vdwg.mxu0
  %v756 = vadd.s32 %v42, 1
  %vm757 = vcmp.ge.s32.totalorder %v756, 0
  %vm758 = vcmp.lt.s32.totalorder %v756, 8
  %vm759 = vmand %vm757, %vm758
  %v760 = vsel %vm759, 1, 0
  %v761 = vcvt.s32.f32 %v760
  %v763 = vlaneseq
  %v764 = vshrl.u32 %v763, 7
  %v765 = vsub.s32 0, %v764
  %v766 = vrot.slane %v761, %v765
  %v767 = vlaneseq
  %v768 = vshrl.u32 %v767, 7
  %v769 = vsub.s32 1, %v768
  %v770 = vrot.slane %v761, %v769
  %v771 = vlaneseq
  %v772 = vshrl.u32 %v771, 7
  %v773 = vsub.s32 2, %v772
  %v774 = vrot.slane %v761, %v773
  %v775 = vlaneseq
  %v776 = vshrl.u32 %v775, 7
  %v777 = vsub.s32 3, %v776
  %v778 = vrot.slane %v761, %v777
  %v779 = vlaneseq
  %v780 = vshrl.u32 %v779, 7
  %v781 = vsub.s32 4, %v780
  %v782 = vrot.slane %v761, %v781
  %v783 = vlaneseq
  %v784 = vshrl.u32 %v783, 7
  %v785 = vsub.s32 5, %v784
  %v786 = vrot.slane %v761, %v785
  %v787 = vlaneseq
  %v788 = vshrl.u32 %v787, 7
  %v789 = vsub.s32 6, %v788
  %v790 = vrot.slane %v761, %v789
  %v791 = vlaneseq
  %v792 = vshrl.u32 %v791, 7
  %v793 = vsub.s32 7, %v792
  %v794 = vrot.slane %v761, %v793
  %v803 = vmul.f32 %v80, %v766
  %v804 = vmul.f32 %v79, %v770
  %v805 = vmul.f32 %v78, %v774
  %v806 = vmul.f32 %v77, %v778
  %v807 = vmul.f32 %v76, %v782
  %v808 = vmul.f32 %v75, %v786
  %v809 = vmul.f32 %v74, %v790
  %v810 = vmul.f32 %v81, %v794
  %s811 = scalar_lea.vmem %s2, 16
  %v812 = vld [vmem:[%s811] sm:$0xff]
  %v814 = vsel %vm140, %v812, 0
  %v817 = vsel %vm144, %v803, 0
  %v820 = vsel %vm144, %v804, 0
  %v823 = vsel %vm144, %v805, 0
  %v826 = vsel %vm144, %v806, 0
  %v829 = vsel %vm144, %v807, 0
  %v832 = vsel %vm144, %v808, 0
  %v835 = vsel %vm144, %v809, 0
  %v838 = vsel %vm144, %v810, 0
  %840 = vmatprep.subr.mxu0 %v820
  %841 = vmatpush1.msra.mxu0 %v817
  %842 = vmatprep.subr.mxu0 0.0
  %843 = vmatpush1.msra.mxu0 0.0
  %844 = vmatprep.subr.mxu0 0.0
  %845 = vmatpush1.msra.mxu0 0.0
  %846 = vmatprep.subr.mxu0 0.0
  %847 = vmatpush1.msra.mxu0 0.0
  %848 = vmatprep.subr.mxu0 0.0
  %849 = vmatpush1.msra.mxu0 0.0
  %850 = vmatprep.subr.mxu0 0.0
  %851 = vmatpush1.msra.mxu0 0.0
  %852 = vmatprep.subr.mxu0 0.0
  %853 = vmatpush1.msra.mxu0 0.0
  %854 = vmatprep.subr.mxu0 0.0
  %855 = vmatpush1.msra.mxu0 0.0
  %856 = vmatprep.subr.mxu0 0.0
  %857 = vmatpush1.msra.mxu0 0.0
  %858 = vmatprep.subr.mxu0 0.0
  %859 = vmatpush1.msra.mxu0 0.0
  %860 = vmatprep.subr.mxu0 0.0
  %861 = vmatpush1.msra.mxu0 0.0
  %862 = vmatprep.subr.mxu0 0.0
  %863 = vmatpush1.msra.mxu0 0.0
  %864 = vmatprep.subr.mxu0 0.0
  %865 = vmatpush1.msra.mxu0 0.0
  %866 = vmatprep.subr.mxu0 0.0
  %867 = vmatpush1.msra.mxu0 0.0
  %868 = vmatprep.subr.mxu0 0.0
  %869 = vmatpush1.msra.mxu0 0.0
  %870 = vmatprep.subr.mxu0 0.0
  %871 = vmatpush1.msra.mxu0 0.0
  %872 = vmatprep.subr.mxu0 0.0
  %873 = vmatpush1.msra.mxu0 0.0
  %874 = vmatprep.subr.mxu0 0.0
  %875 = vmatpush1.msra.mxu0 0.0
  %876 = vmatprep.subr.mxu0 0.0
  %877 = vmatpush1.msra.mxu0 0.0
  %878 = vmatprep.subr.mxu0 0.0
  %879 = vmatpush1.msra.mxu0 0.0
  %880 = vmatprep.subr.mxu0 0.0
  %881 = vmatpush1.msra.mxu0 0.0
  %882 = vmatprep.subr.mxu0 0.0
  %883 = vmatpush1.msra.mxu0 0.0
  %884 = vmatprep.subr.mxu0 0.0
  %885 = vmatpush1.msra.mxu0 0.0
  %886 = vmatprep.subr.mxu0 0.0
  %887 = vmatpush1.msra.mxu0 0.0
  %888 = vmatprep.subr.mxu0 0.0
  %889 = vmatpush1.msra.mxu0 0.0
  %890 = vmatprep.subr.mxu0 0.0
  %891 = vmatpush1.msra.mxu0 0.0
  %892 = vmatprep.subr.mxu0 0.0
  %893 = vmatpush1.msra.mxu0 0.0
  %894 = vmatprep.subr.mxu0 0.0
  %895 = vmatpush1.msra.mxu0 0.0
  %896 = vmatprep.subr.mxu0 0.0
  %897 = vmatpush1.msra.mxu0 0.0
  %898 = vmatprep.subr.mxu0 0.0
  %899 = vmatpush1.msra.mxu0 0.0
  %900 = vmatprep.subr.mxu0 0.0
  %901 = vmatpush1.msra.mxu0 0.0
  %902 = vmatprep.subr.mxu0 0.0
  %903 = vmatpush1.msra.mxu0 0.0
  %904 = vmatprep.mubr.f32.mxu0 0.0
  %905 = vmatmul.mubr.f32.gmra.mrb[0].mxu0 %v814
  %v906 = vpop.f32.mrb[0].mxu0
  %v907 = vadd.f32 0.0, %v906
  %v908 = vpop.f32.mrb[0].mxu0
  %v909 = vadd.f32 0.0, %v908
  %910 = vdwg.mxu0
  %911 = vmatprep.subr.mxu0 %v826
  %912 = vmatpush1.msra.mxu0 %v823
  %913 = vmatprep.subr.mxu0 0.0
  %914 = vmatpush1.msra.mxu0 0.0
  %915 = vmatprep.subr.mxu0 0.0
  %916 = vmatpush1.msra.mxu0 0.0
  %917 = vmatprep.subr.mxu0 0.0
  %918 = vmatpush1.msra.mxu0 0.0
  %919 = vmatprep.subr.mxu0 0.0
  %920 = vmatpush1.msra.mxu0 0.0
  %921 = vmatprep.subr.mxu0 0.0
  %922 = vmatpush1.msra.mxu0 0.0
  %923 = vmatprep.subr.mxu0 0.0
  %924 = vmatpush1.msra.mxu0 0.0
  %925 = vmatprep.subr.mxu0 0.0
  %926 = vmatpush1.msra.mxu0 0.0
  %927 = vmatprep.subr.mxu0 0.0
  %928 = vmatpush1.msra.mxu0 0.0
  %929 = vmatprep.subr.mxu0 0.0
  %930 = vmatpush1.msra.mxu0 0.0
  %931 = vmatprep.subr.mxu0 0.0
  %932 = vmatpush1.msra.mxu0 0.0
  %933 = vmatprep.subr.mxu0 0.0
  %934 = vmatpush1.msra.mxu0 0.0
  %935 = vmatprep.subr.mxu0 0.0
  %936 = vmatpush1.msra.mxu0 0.0
  %937 = vmatprep.subr.mxu0 0.0
  %938 = vmatpush1.msra.mxu0 0.0
  %939 = vmatprep.subr.mxu0 0.0
  %940 = vmatpush1.msra.mxu0 0.0
  %941 = vmatprep.subr.mxu0 0.0
  %942 = vmatpush1.msra.mxu0 0.0
  %943 = vmatprep.subr.mxu0 0.0
  %944 = vmatpush1.msra.mxu0 0.0
  %945 = vmatprep.subr.mxu0 0.0
  %946 = vmatpush1.msra.mxu0 0.0
  %947 = vmatprep.subr.mxu0 0.0
  %948 = vmatpush1.msra.mxu0 0.0
  %949 = vmatprep.subr.mxu0 0.0
  %950 = vmatpush1.msra.mxu0 0.0
  %951 = vmatprep.subr.mxu0 0.0
  %952 = vmatpush1.msra.mxu0 0.0
  %953 = vmatprep.subr.mxu0 0.0
  %954 = vmatpush1.msra.mxu0 0.0
  %955 = vmatprep.subr.mxu0 0.0
  %956 = vmatpush1.msra.mxu0 0.0
  %957 = vmatprep.subr.mxu0 0.0
  %958 = vmatpush1.msra.mxu0 0.0
  %959 = vmatprep.subr.mxu0 0.0
  %960 = vmatpush1.msra.mxu0 0.0
  %961 = vmatprep.subr.mxu0 0.0
  %962 = vmatpush1.msra.mxu0 0.0
  %963 = vmatprep.subr.mxu0 0.0
  %964 = vmatpush1.msra.mxu0 0.0
  %965 = vmatprep.subr.mxu0 0.0
  %966 = vmatpush1.msra.mxu0 0.0
  %967 = vmatprep.subr.mxu0 0.0
  %968 = vmatpush1.msra.mxu0 0.0
  %969 = vmatprep.subr.mxu0 0.0
  %970 = vmatpush1.msra.mxu0 0.0
  %971 = vmatprep.subr.mxu0 0.0
  %972 = vmatpush1.msra.mxu0 0.0
  %973 = vmatprep.subr.mxu0 0.0
  %974 = vmatpush1.msra.mxu0 0.0
  %975 = vmatprep.mubr.f32.mxu0 0.0
  %976 = vmatmul.mubr.f32.gmra.mrb[0].mxu0 %v814
  %v977 = vpop.f32.mrb[0].mxu0
  %v978 = vadd.f32 0.0, %v977
  %v979 = vpop.f32.mrb[0].mxu0
  %v980 = vadd.f32 0.0, %v979
  %981 = vdwg.mxu0
  %982 = vmatprep.subr.mxu0 %v832
  %983 = vmatpush1.msra.mxu0 %v829
  %984 = vmatprep.subr.mxu0 0.0
  %985 = vmatpush1.msra.mxu0 0.0
  %986 = vmatprep.subr.mxu0 0.0
  %987 = vmatpush1.msra.mxu0 0.0
  %988 = vmatprep.subr.mxu0 0.0
  %989 = vmatpush1.msra.mxu0 0.0
  %990 = vmatprep.subr.mxu0 0.0
  %991 = vmatpush1.msra.mxu0 0.0
  %992 = vmatprep.subr.mxu0 0.0
  %993 = vmatpush1.msra.mxu0 0.0
  %994 = vmatprep.subr.mxu0 0.0
  %995 = vmatpush1.msra.mxu0 0.0
  %996 = vmatprep.subr.mxu0 0.0
  %997 = vmatpush1.msra.mxu0 0.0
  %998 = vmatprep.subr.mxu0 0.0
  %999 = vmatpush1.msra.mxu0 0.0
  %1000 = vmatprep.subr.mxu0 0.0
  %1001 = vmatpush1.msra.mxu0 0.0
  %1002 = vmatprep.subr.mxu0 0.0
  %1003 = vmatpush1.msra.mxu0 0.0
  %1004 = vmatprep.subr.mxu0 0.0
  %1005 = vmatpush1.msra.mxu0 0.0
  %1006 = vmatprep.subr.mxu0 0.0
  %1007 = vmatpush1.msra.mxu0 0.0
  %1008 = vmatprep.subr.mxu0 0.0
  %1009 = vmatpush1.msra.mxu0 0.0
  %1010 = vmatprep.subr.mxu0 0.0
  %1011 = vmatpush1.msra.mxu0 0.0
  %1012 = vmatprep.subr.mxu0 0.0
  %1013 = vmatpush1.msra.mxu0 0.0
  %1014 = vmatprep.subr.mxu0 0.0
  %1015 = vmatpush1.msra.mxu0 0.0
  %1016 = vmatprep.subr.mxu0 0.0
  %1017 = vmatpush1.msra.mxu0 0.0
  %1018 = vmatprep.subr.mxu0 0.0
  %1019 = vmatpush1.msra.mxu0 0.0
  %1020 = vmatprep.subr.mxu0 0.0
  %1021 = vmatpush1.msra.mxu0 0.0
  %1022 = vmatprep.subr.mxu0 0.0
  %1023 = vmatpush1.msra.mxu0 0.0
  %1024 = vmatprep.subr.mxu0 0.0
  %1025 = vmatpush1.msra.mxu0 0.0
  %1026 = vmatprep.subr.mxu0 0.0
  %1027 = vmatpush1.msra.mxu0 0.0
  %1028 = vmatprep.subr.mxu0 0.0
  %1029 = vmatpush1.msra.mxu0 0.0
  %1030 = vmatprep.subr.mxu0 0.0
  %1031 = vmatpush1.msra.mxu0 0.0
  %1032 = vmatprep.subr.mxu0 0.0
  %1033 = vmatpush1.msra.mxu0 0.0
  %1034 = vmatprep.subr.mxu0 0.0
  %1035 = vmatpush1.msra.mxu0 0.0
  %1036 = vmatprep.subr.mxu0 0.0
  %1037 = vmatpush1.msra.mxu0 0.0
  %1038 = vmatprep.subr.mxu0 0.0
  %1039 = vmatpush1.msra.mxu0 0.0
  %1040 = vmatprep.subr.mxu0 0.0
  %1041 = vmatpush1.msra.mxu0 0.0
  %1042 = vmatprep.subr.mxu0 0.0
  %1043 = vmatpush1.msra.mxu0 0.0
  %1044 = vmatprep.subr.mxu0 0.0
  %1045 = vmatpush1.msra.mxu0 0.0
  %1046 = vmatprep.mubr.f32.mxu0 0.0
  %1047 = vmatmul.mubr.f32.gmra.mrb[0].mxu0 %v814
  %v1048 = vpop.f32.mrb[0].mxu0
  %v1049 = vadd.f32 0.0, %v1048
  %v1050 = vpop.f32.mrb[0].mxu0
  %v1051 = vadd.f32 0.0, %v1050
  %1052 = vdwg.mxu0
  %1053 = vmatprep.subr.mxu0 %v838
  %1054 = vmatpush1.msra.mxu0 %v835
  %1055 = vmatprep.subr.mxu0 0.0
  %1056 = vmatpush1.msra.mxu0 0.0
  %1057 = vmatprep.subr.mxu0 0.0
  %1058 = vmatpush1.msra.mxu0 0.0
  %1059 = vmatprep.subr.mxu0 0.0
  %1060 = vmatpush1.msra.mxu0 0.0
  %1061 = vmatprep.subr.mxu0 0.0
  %1062 = vmatpush1.msra.mxu0 0.0
  %1063 = vmatprep.subr.mxu0 0.0
  %1064 = vmatpush1.msra.mxu0 0.0
  %1065 = vmatprep.subr.mxu0 0.0
  %1066 = vmatpush1.msra.mxu0 0.0
  %1067 = vmatprep.subr.mxu0 0.0
  %1068 = vmatpush1.msra.mxu0 0.0
  %1069 = vmatprep.subr.mxu0 0.0
  %1070 = vmatpush1.msra.mxu0 0.0
  %1071 = vmatprep.subr.mxu0 0.0
  %1072 = vmatpush1.msra.mxu0 0.0
  %1073 = vmatprep.subr.mxu0 0.0
  %1074 = vmatpush1.msra.mxu0 0.0
  %1075 = vmatprep.subr.mxu0 0.0
  %1076 = vmatpush1.msra.mxu0 0.0
  %1077 = vmatprep.subr.mxu0 0.0
  %1078 = vmatpush1.msra.mxu0 0.0
  %1079 = vmatprep.subr.mxu0 0.0
  %1080 = vmatpush1.msra.mxu0 0.0
  %1081 = vmatprep.subr.mxu0 0.0
  %1082 = vmatpush1.msra.mxu0 0.0
  %1083 = vmatprep.subr.mxu0 0.0
  %1084 = vmatpush1.msra.mxu0 0.0
  %1085 = vmatprep.subr.mxu0 0.0
  %1086 = vmatpush1.msra.mxu0 0.0
  %1087 = vmatprep.subr.mxu0 0.0
  %1088 = vmatpush1.msra.mxu0 0.0
  %1089 = vmatprep.subr.mxu0 0.0
  %1090 = vmatpush1.msra.mxu0 0.0
  %1091 = vmatprep.subr.mxu0 0.0
  %1092 = vmatpush1.msra.mxu0 0.0
  %1093 = vmatprep.subr.mxu0 0.0
  %1094 = vmatpush1.msra.mxu0 0.0
  %1095 = vmatprep.subr.mxu0 0.0
  %1096 = vmatpush1.msra.mxu0 0.0
  %1097 = vmatprep.subr.mxu0 0.0
  %1098 = vmatpush1.msra.mxu0 0.0
  %1099 = vmatprep.subr.mxu0 0.0
  %1100 = vmatpush1.msra.mxu0 0.0
  %1101 = vmatprep.subr.mxu0 0.0
  %1102 = vmatpush1.msra.mxu0 0.0
  %1103 = vmatprep.subr.mxu0 0.0
  %1104 = vmatpush1.msra.mxu0 0.0
  %1105 = vmatprep.subr.mxu0 0.0
  %1106 = vmatpush1.msra.mxu0 0.0
  %1107 = vmatprep.subr.mxu0 0.0
  %1108 = vmatpush1.msra.mxu0 0.0
  %1109 = vmatprep.subr.mxu0 0.0
  %1110 = vmatpush1.msra.mxu0 0.0
  %1111 = vmatprep.subr.mxu0 0.0
  %1112 = vmatpush1.msra.mxu0 0.0
  %1113 = vmatprep.subr.mxu0 0.0
  %1114 = vmatpush1.msra.mxu0 0.0
  %1115 = vmatprep.subr.mxu0 0.0
  %1116 = vmatpush1.msra.mxu0 0.0
  %1117 = vmatprep.mubr.f32.mxu0 0.0
  %1118 = vmatmul.mubr.f32.gmra.mrb[0].mxu0 %v814
  %v1119 = vpop.f32.mrb[0].mxu0
  %v1120 = vadd.f32 0.0, %v1119
  %v1121 = vpop.f32.mrb[0].mxu0
  %v1122 = vadd.f32 0.0, %v1121
  %1123 = vdwg.mxu0
  %v1124 = vadd.f32 %v539, %v907
  %v1125 = vadd.f32 %v541, %v909
  %v1126 = vadd.f32 %v610, %v978
  %v1127 = vadd.f32 %v612, %v980
  %v1128 = vadd.f32 %v681, %v1049
  %v1129 = vadd.f32 %v683, %v1051
  %v1130 = vadd.f32 %v752, %v1120
  %v1131 = vadd.f32 %v754, %v1122
  %v1132 = vadd.f32 %v1124, %v1125
  %v1133 = vadd.f32 %v1132, %v1126
  %v1134 = vadd.f32 %v1133, %v1127
  %v1135 = vadd.f32 %v1134, %v1128
  %v1136 = vadd.f32 %v1135, %v1129
  %v1137 = vadd.f32 %v1136, %v1130
  %v1138 = vadd.f32 %v1137, %v1131
  %1139 = vadd.xlane.f32.xlu0 %v1138
  %v1140 = vpop.xlane.xlu0 %1139
  %v1141 = vmul.f32 %v1140, 0.0009765625
  %v1142 = vsub.f32 %v1124, %v1141
  %v1143 = vsub.f32 %v1125, %v1141
  %v1144 = vsub.f32 %v1126, %v1141
  %v1145 = vsub.f32 %v1127, %v1141
  %v1146 = vsub.f32 %v1128, %v1141
  %v1147 = vsub.f32 %v1129, %v1141
  %v1148 = vsub.f32 %v1130, %v1141
  %v1149 = vsub.f32 %v1131, %v1141
  %v1150 = vmul.f32 %v1142, %v1142
  %v1151 = vmul.f32 %v1143, %v1143
  %v1152 = vmul.f32 %v1144, %v1144
  %v1153 = vmul.f32 %v1145, %v1145
  %v1154 = vmul.f32 %v1146, %v1146
  %v1155 = vmul.f32 %v1147, %v1147
  %v1156 = vmul.f32 %v1148, %v1148
  %v1157 = vmul.f32 %v1149, %v1149
  %v1158 = vadd.f32 %v1150, %v1151
  %v1159 = vadd.f32 %v1158, %v1152
  %v1160 = vadd.f32 %v1159, %v1153
  %v1161 = vadd.f32 %v1160, %v1154
  %v1162 = vadd.f32 %v1161, %v1155
  %v1163 = vadd.f32 %v1162, %v1156
  %v1164 = vadd.f32 %v1163, %v1157
  %1165 = vadd.xlane.f32.xlu0 %v1164
  %v1166 = vpop.xlane.xlu0 %1165
  %v1167 = vmul.f32 %v1166, 0.0009765625
  %v1168 = vld [vmem:[%s3] sm:$0xff]
  %v1169 = vadd.f32 %v1167, 1e-05
  %v1170 = vrsqrt.pop %v1169
  %v1171 = vmul.f32 %v1168, %v1170
  %1173 = vset.pattern.permute.xlu0 0
  %1174 = vperm.xlu0 %1173, %v1171
  %v1175 = vpop.permute.xlu0 %1174
  %v1177 = vmul.f32 %v1142, %v1175
  %v1178 = vmul.f32 %v1143, %v1175
  %v1179 = vmul.f32 %v1144, %v1175
  %v1180 = vmul.f32 %v1145, %v1175
  %v1181 = vmul.f32 %v1146, %v1175
  %v1182 = vmul.f32 %v1147, %v1175
  %v1183 = vmul.f32 %v1148, %v1175
  %v1184 = vmul.f32 %v1149, %v1175
  %v1185 = vld [vmem:[%s4] sm:$0xff]
  %1187 = vset.pattern.permute.xlu0 0
  %1188 = vperm.xlu0 %1187, %v1185
  %v1189 = vpop.permute.xlu0 %1188
  %v1191 = vadd.f32 %v1177, %v1189
  %v1192 = vadd.f32 %v1178, %v1189
  %v1193 = vadd.f32 %v1179, %v1189
  %v1194 = vadd.f32 %v1180, %v1189
  %v1195 = vadd.f32 %v1181, %v1189
  %v1196 = vadd.f32 %v1182, %v1189
  %v1197 = vadd.f32 %v1183, %v1189
  %v1198 = vadd.f32 %v1184, %v1189
  %v1199 = vmax.f32 %v1191, 0.0
  %v1200 = vmax.f32 %v1192, 0.0
  %v1201 = vmax.f32 %v1193, 0.0
  %v1202 = vmax.f32 %v1194, 0.0
  %v1203 = vmax.f32 %v1195, 0.0
  %v1204 = vmax.f32 %v1196, 0.0
  %v1205 = vmax.f32 %v1197, 0.0
  %v1206 = vmax.f32 %v1198, 0.0
  %s1207 = scalar_lea.vmem %s1, 8
  %v1208 = vld [vmem:[%s1207] sm:$0xff]
  %1209 = vrot.lane.b32.xlu0 %v1199, 8
  %v1210 = vpop.permute.xlu0 %1209
  %1211 = vrot.lane.b32.xlu0 %v1200, 8
  %v1212 = vpop.permute.xlu0 %1211
  %1213 = vrot.lane.b32.xlu0 %v1201, 8
  %v1214 = vpop.permute.xlu0 %1213
  %1215 = vrot.lane.b32.xlu0 %v1202, 8
  %v1216 = vpop.permute.xlu0 %1215
  %1217 = vrot.lane.b32.xlu0 %v1203, 8
  %v1218 = vpop.permute.xlu0 %1217
  %1219 = vrot.lane.b32.xlu0 %v1204, 8
  %v1220 = vpop.permute.xlu0 %1219
  %1221 = vrot.lane.b32.xlu0 %v1205, 8
  %v1222 = vpop.permute.xlu0 %1221
  %1223 = vrot.lane.b32.xlu0 %v1206, 8
  %v1224 = vpop.permute.xlu0 %1223
  %vm1225 = vcmp.lt.s32.totalorder %v72, 8
  %v1226 = vsel %vm1225, %v1222, %v1224
  %v1227 = vsel %vm1225, %v1220, %v1222
  %v1228 = vsel %vm1225, %v1218, %v1220
  %v1229 = vsel %vm1225, %v1216, %v1218
  %v1230 = vsel %vm1225, %v1214, %v1216
  %v1231 = vsel %vm1225, %v1212, %v1214
  %v1232 = vsel %vm1225, %v1210, %v1212
  %v1233 = vsel %vm1225, %v1224, %v1210
  %v1234 = vadd.s32 %v1208, 4294967295
  %vm1235 = vcmp.ge.s32.totalorder %v1234, 0
  %vm1236 = vcmp.lt.s32.totalorder %v1234, 8
  %vm1237 = vmand %vm1235, %vm1236
  %v1238 = vsel %vm1237, 1, 0
  %v1239 = vcvt.s32.f32 %v1238
  %v1241 = vlaneseq
  %v1242 = vshrl.u32 %v1241, 7
  %v1243 = vsub.s32 0, %v1242
  %v1244 = vrot.slane %v1239, %v1243
  %v1245 = vlaneseq
  %v1246 = vshrl.u32 %v1245, 7
  %v1247 = vsub.s32 1, %v1246
  %v1248 = vrot.slane %v1239, %v1247
  %v1249 = vlaneseq
  %v1250 = vshrl.u32 %v1249, 7
  %v1251 = vsub.s32 2, %v1250
  %v1252 = vrot.slane %v1239, %v1251
  %v1253 = vlaneseq
  %v1254 = vshrl.u32 %v1253, 7
  %v1255 = vsub.s32 3, %v1254
  %v1256 = vrot.slane %v1239, %v1255
  %v1257 = vlaneseq
  %v1258 = vshrl.u32 %v1257, 7
  %v1259 = vsub.s32 4, %v1258
  %v1260 = vrot.slane %v1239, %v1259
  %v1261 = vlaneseq
  %v1262 = vshrl.u32 %v1261, 7
  %v1263 = vsub.s32 5, %v1262
  %v1264 = vrot.slane %v1239, %v1263
  %v1265 = vlaneseq
  %v1266 = vshrl.u32 %v1265, 7
  %v1267 = vsub.s32 6, %v1266
  %v1268 = vrot.slane %v1239, %v1267
  %v1269 = vlaneseq
  %v1270 = vshrl.u32 %v1269, 7
  %v1271 = vsub.s32 7, %v1270
  %v1272 = vrot.slane %v1239, %v1271
  %v1281 = vmul.f32 %v1233, %v1244
  %v1282 = vmul.f32 %v1232, %v1248
  %v1283 = vmul.f32 %v1231, %v1252
  %v1284 = vmul.f32 %v1230, %v1256
  %v1285 = vmul.f32 %v1229, %v1260
  %v1286 = vmul.f32 %v1228, %v1264
  %v1287 = vmul.f32 %v1227, %v1268
  %v1288 = vmul.f32 %v1226, %v1272
  %v1289 = vld [vmem:[%s5] sm:$0xff]
  %v1290 = vld [vmem:[%s5 + $0x8] sm:$0xf]
  %s1291 = scalar_lea.vmem %s5, 16
  %v1292 = vld [vmem:[%s1291] sm:$0xff]
  %v1293 = vld [vmem:[%s1291 + $0x8] sm:$0xf]
  %vm1294 = vcmask 64512
  %v1296 = vsel %vm1294, %v1292, 0
  %v1299 = vsel %vm1294, %v1293, 0
  %1301 = vmatprep.subr.mxu0 %v1200
  %1302 = vmatpush1.msra.mxu0 %v1199
  %1303 = vmatprep.subr.mxu0 0.0
  %1304 = vmatpush1.msra.mxu0 0.0
  %1305 = vmatprep.subr.mxu0 0.0
  %1306 = vmatpush1.msra.mxu0 0.0
  %1307 = vmatprep.subr.mxu0 0.0
  %1308 = vmatpush1.msra.mxu0 0.0
  %1309 = vmatprep.subr.mxu0 0.0
  %1310 = vmatpush1.msra.mxu0 0.0
  %1311 = vmatprep.subr.mxu0 0.0
  %1312 = vmatpush1.msra.mxu0 0.0
  %1313 = vmatprep.subr.mxu0 0.0
  %1314 = vmatpush1.msra.mxu0 0.0
  %1315 = vmatprep.subr.mxu0 0.0
  %1316 = vmatpush1.msra.mxu0 0.0
  %1317 = vmatprep.subr.mxu0 0.0
  %1318 = vmatpush1.msra.mxu0 0.0
  %1319 = vmatprep.subr.mxu0 0.0
  %1320 = vmatpush1.msra.mxu0 0.0
  %1321 = vmatprep.subr.mxu0 0.0
  %1322 = vmatpush1.msra.mxu0 0.0
  %1323 = vmatprep.subr.mxu0 0.0
  %1324 = vmatpush1.msra.mxu0 0.0
  %1325 = vmatprep.subr.mxu0 0.0
  %1326 = vmatpush1.msra.mxu0 0.0
  %1327 = vmatprep.subr.mxu0 0.0
  %1328 = vmatpush1.msra.mxu0 0.0
  %1329 = vmatprep.subr.mxu0 0.0
  %1330 = vmatpush1.msra.mxu0 0.0
  %1331 = vmatprep.subr.mxu0 0.0
  %1332 = vmatpush1.msra.mxu0 0.0
  %1333 = vmatprep.subr.mxu0 0.0
  %1334 = vmatpush1.msra.mxu0 0.0
  %1335 = vmatprep.subr.mxu0 0.0
  %1336 = vmatpush1.msra.mxu0 0.0
  %1337 = vmatprep.subr.mxu0 0.0
  %1338 = vmatpush1.msra.mxu0 0.0
  %1339 = vmatprep.subr.mxu0 0.0
  %1340 = vmatpush1.msra.mxu0 0.0
  %1341 = vmatprep.subr.mxu0 0.0
  %1342 = vmatpush1.msra.mxu0 0.0
  %1343 = vmatprep.subr.mxu0 0.0
  %1344 = vmatpush1.msra.mxu0 0.0
  %1345 = vmatprep.subr.mxu0 0.0
  %1346 = vmatpush1.msra.mxu0 0.0
  %1347 = vmatprep.subr.mxu0 0.0
  %1348 = vmatpush1.msra.mxu0 0.0
  %1349 = vmatprep.subr.mxu0 0.0
  %1350 = vmatpush1.msra.mxu0 0.0
  %1351 = vmatprep.subr.mxu0 0.0
  %1352 = vmatpush1.msra.mxu0 0.0
  %1353 = vmatprep.subr.mxu0 0.0
  %1354 = vmatpush1.msra.mxu0 0.0
  %1355 = vmatprep.subr.mxu0 0.0
  %1356 = vmatpush1.msra.mxu0 0.0
  %1357 = vmatprep.subr.mxu0 0.0
  %1358 = vmatpush1.msra.mxu0 0.0
  %1359 = vmatprep.subr.mxu0 0.0
  %1360 = vmatpush1.msra.mxu0 0.0
  %1361 = vmatprep.subr.mxu0 0.0
  %1362 = vmatpush1.msra.mxu0 0.0
  %1363 = vmatprep.subr.mxu0 0.0
  %1364 = vmatpush1.msra.mxu0 0.0
  %1365 = vmatprep.mubr.f32.mxu0 0.0
  %1366 = vmatmul.mubr.f32.gmra.mrb[0].mxu0 %v1296
  %v1367 = vpop.f32.mrb[0].mxu0
  %v1368 = vadd.f32 0.0, %v1367
  %v1369 = vpop.f32.mrb[0].mxu0
  %v1370 = vadd.f32 0.0, %v1369
  %1371 = vmatprep.mubr.f32.mxu0 0.0
  %1372 = vmatmul.mubr.f32.gmra.mrb[0].mxu0 %v1299
  %v1373 = vpop.f32.mrb[0].mxu0
  %v1374 = vadd.f32 0.0, %v1373
  %v1375 = vpop.f32.mrb[0].mxu0
  %v1376 = vadd.f32 0.0, %v1375
  %1377 = vdwg.mxu0
  %1378 = vmatprep.subr.mxu0 %v1202
  %1379 = vmatpush1.msra.mxu0 %v1201
  %1380 = vmatprep.subr.mxu0 0.0
  %1381 = vmatpush1.msra.mxu0 0.0
  %1382 = vmatprep.subr.mxu0 0.0
  %1383 = vmatpush1.msra.mxu0 0.0
  %1384 = vmatprep.subr.mxu0 0.0
  %1385 = vmatpush1.msra.mxu0 0.0
  %1386 = vmatprep.subr.mxu0 0.0
  %1387 = vmatpush1.msra.mxu0 0.0
  %1388 = vmatprep.subr.mxu0 0.0
  %1389 = vmatpush1.msra.mxu0 0.0
  %1390 = vmatprep.subr.mxu0 0.0
  %1391 = vmatpush1.msra.mxu0 0.0
  %1392 = vmatprep.subr.mxu0 0.0
  %1393 = vmatpush1.msra.mxu0 0.0
  %1394 = vmatprep.subr.mxu0 0.0
  %1395 = vmatpush1.msra.mxu0 0.0
  %1396 = vmatprep.subr.mxu0 0.0
  %1397 = vmatpush1.msra.mxu0 0.0
  %1398 = vmatprep.subr.mxu0 0.0
  %1399 = vmatpush1.msra.mxu0 0.0
  %1400 = vmatprep.subr.mxu0 0.0
  %1401 = vmatpush1.msra.mxu0 0.0
  %1402 = vmatprep.subr.mxu0 0.0
  %1403 = vmatpush1.msra.mxu0 0.0
  %1404 = vmatprep.subr.mxu0 0.0
  %1405 = vmatpush1.msra.mxu0 0.0
  %1406 = vmatprep.subr.mxu0 0.0
  %1407 = vmatpush1.msra.mxu0 0.0
  %1408 = vmatprep.subr.mxu0 0.0
  %1409 = vmatpush1.msra.mxu0 0.0
  %1410 = vmatprep.subr.mxu0 0.0
  %1411 = vmatpush1.msra.mxu0 0.0
  %1412 = vmatprep.subr.mxu0 0.0
  %1413 = vmatpush1.msra.mxu0 0.0
  %1414 = vmatprep.subr.mxu0 0.0
  %1415 = vmatpush1.msra.mxu0 0.0
  %1416 = vmatprep.subr.mxu0 0.0
  %1417 = vmatpush1.msra.mxu0 0.0
  %1418 = vmatprep.subr.mxu0 0.0
  %1419 = vmatpush1.msra.mxu0 0.0
  %1420 = vmatprep.subr.mxu0 0.0
  %1421 = vmatpush1.msra.mxu0 0.0
  %1422 = vmatprep.subr.mxu0 0.0
  %1423 = vmatpush1.msra.mxu0 0.0
  %1424 = vmatprep.subr.mxu0 0.0
  %1425 = vmatpush1.msra.mxu0 0.0
  %1426 = vmatprep.subr.mxu0 0.0
  %1427 = vmatpush1.msra.mxu0 0.0
  %1428 = vmatprep.subr.mxu0 0.0
  %1429 = vmatpush1.msra.mxu0 0.0
  %1430 = vmatprep.subr.mxu0 0.0
  %1431 = vmatpush1.msra.mxu0 0.0
  %1432 = vmatprep.subr.mxu0 0.0
  %1433 = vmatpush1.msra.mxu0 0.0
  %1434 = vmatprep.subr.mxu0 0.0
  %1435 = vmatpush1.msra.mxu0 0.0
  %1436 = vmatprep.subr.mxu0 0.0
  %1437 = vmatpush1.msra.mxu0 0.0
  %1438 = vmatprep.subr.mxu0 0.0
  %1439 = vmatpush1.msra.mxu0 0.0
  %1440 = vmatprep.subr.mxu0 0.0
  %1441 = vmatpush1.msra.mxu0 0.0
  %1442 = vmatprep.mubr.f32.mxu0 0.0
  %1443 = vmatmul.mubr.f32.gmra.mrb[0].mxu0 %v1296
  %v1444 = vpop.f32.mrb[0].mxu0
  %v1445 = vadd.f32 0.0, %v1444
  %v1446 = vpop.f32.mrb[0].mxu0
  %v1447 = vadd.f32 0.0, %v1446
  %1448 = vmatprep.mubr.f32.mxu0 0.0
  %1449 = vmatmul.mubr.f32.gmra.mrb[0].mxu0 %v1299
  %v1450 = vpop.f32.mrb[0].mxu0
  %v1451 = vadd.f32 0.0, %v1450
  %v1452 = vpop.f32.mrb[0].mxu0
  %v1453 = vadd.f32 0.0, %v1452
  %1454 = vdwg.mxu0
  %1455 = vmatprep.subr.mxu0 %v1204
  %1456 = vmatpush1.msra.mxu0 %v1203
  %1457 = vmatprep.subr.mxu0 0.0
  %1458 = vmatpush1.msra.mxu0 0.0
  %1459 = vmatprep.subr.mxu0 0.0
  %1460 = vmatpush1.msra.mxu0 0.0
  %1461 = vmatprep.subr.mxu0 0.0
  %1462 = vmatpush1.msra.mxu0 0.0
  %1463 = vmatprep.subr.mxu0 0.0
  %1464 = vmatpush1.msra.mxu0 0.0
  %1465 = vmatprep.subr.mxu0 0.0
  %1466 = vmatpush1.msra.mxu0 0.0
  %1467 = vmatprep.subr.mxu0 0.0
  %1468 = vmatpush1.msra.mxu0 0.0
  %1469 = vmatprep.subr.mxu0 0.0
  %1470 = vmatpush1.msra.mxu0 0.0
  %1471 = vmatprep.subr.mxu0 0.0
  %1472 = vmatpush1.msra.mxu0 0.0
  %1473 = vmatprep.subr.mxu0 0.0
  %1474 = vmatpush1.msra.mxu0 0.0
  %1475 = vmatprep.subr.mxu0 0.0
  %1476 = vmatpush1.msra.mxu0 0.0
  %1477 = vmatprep.subr.mxu0 0.0
  %1478 = vmatpush1.msra.mxu0 0.0
  %1479 = vmatprep.subr.mxu0 0.0
  %1480 = vmatpush1.msra.mxu0 0.0
  %1481 = vmatprep.subr.mxu0 0.0
  %1482 = vmatpush1.msra.mxu0 0.0
  %1483 = vmatprep.subr.mxu0 0.0
  %1484 = vmatpush1.msra.mxu0 0.0
  %1485 = vmatprep.subr.mxu0 0.0
  %1486 = vmatpush1.msra.mxu0 0.0
  %1487 = vmatprep.subr.mxu0 0.0
  %1488 = vmatpush1.msra.mxu0 0.0
  %1489 = vmatprep.subr.mxu0 0.0
  %1490 = vmatpush1.msra.mxu0 0.0
  %1491 = vmatprep.subr.mxu0 0.0
  %1492 = vmatpush1.msra.mxu0 0.0
  %1493 = vmatprep.subr.mxu0 0.0
  %1494 = vmatpush1.msra.mxu0 0.0
  %1495 = vmatprep.subr.mxu0 0.0
  %1496 = vmatpush1.msra.mxu0 0.0
  %1497 = vmatprep.subr.mxu0 0.0
  %1498 = vmatpush1.msra.mxu0 0.0
  %1499 = vmatprep.subr.mxu0 0.0
  %1500 = vmatpush1.msra.mxu0 0.0
  %1501 = vmatprep.subr.mxu0 0.0
  %1502 = vmatpush1.msra.mxu0 0.0
  %1503 = vmatprep.subr.mxu0 0.0
  %1504 = vmatpush1.msra.mxu0 0.0
  %1505 = vmatprep.subr.mxu0 0.0
  %1506 = vmatpush1.msra.mxu0 0.0
  %1507 = vmatprep.subr.mxu0 0.0
  %1508 = vmatpush1.msra.mxu0 0.0
  %1509 = vmatprep.subr.mxu0 0.0
  %1510 = vmatpush1.msra.mxu0 0.0
  %1511 = vmatprep.subr.mxu0 0.0
  %1512 = vmatpush1.msra.mxu0 0.0
  %1513 = vmatprep.subr.mxu0 0.0
  %1514 = vmatpush1.msra.mxu0 0.0
  %1515 = vmatprep.subr.mxu0 0.0
  %1516 = vmatpush1.msra.mxu0 0.0
  %1517 = vmatprep.subr.mxu0 0.0
  %1518 = vmatpush1.msra.mxu0 0.0
  %1519 = vmatprep.mubr.f32.mxu0 0.0
  %1520 = vmatmul.mubr.f32.gmra.mrb[0].mxu0 %v1296
  %v1521 = vpop.f32.mrb[0].mxu0
  %v1522 = vadd.f32 0.0, %v1521
  %v1523 = vpop.f32.mrb[0].mxu0
  %v1524 = vadd.f32 0.0, %v1523
  %1525 = vmatprep.mubr.f32.mxu0 0.0
  %1526 = vmatmul.mubr.f32.gmra.mrb[0].mxu0 %v1299
  %v1527 = vpop.f32.mrb[0].mxu0
  %v1528 = vadd.f32 0.0, %v1527
  %v1529 = vpop.f32.mrb[0].mxu0
  %v1530 = vadd.f32 0.0, %v1529
  %1531 = vdwg.mxu0
  %1532 = vmatprep.subr.mxu0 %v1206
  %1533 = vmatpush1.msra.mxu0 %v1205
  %1534 = vmatprep.subr.mxu0 0.0
  %1535 = vmatpush1.msra.mxu0 0.0
  %1536 = vmatprep.subr.mxu0 0.0
  %1537 = vmatpush1.msra.mxu0 0.0
  %1538 = vmatprep.subr.mxu0 0.0
  %1539 = vmatpush1.msra.mxu0 0.0
  %1540 = vmatprep.subr.mxu0 0.0
  %1541 = vmatpush1.msra.mxu0 0.0
  %1542 = vmatprep.subr.mxu0 0.0
  %1543 = vmatpush1.msra.mxu0 0.0
  %1544 = vmatprep.subr.mxu0 0.0
  %1545 = vmatpush1.msra.mxu0 0.0
  %1546 = vmatprep.subr.mxu0 0.0
  %1547 = vmatpush1.msra.mxu0 0.0
  %1548 = vmatprep.subr.mxu0 0.0
  %1549 = vmatpush1.msra.mxu0 0.0
  %1550 = vmatprep.subr.mxu0 0.0
  %1551 = vmatpush1.msra.mxu0 0.0
  %1552 = vmatprep.subr.mxu0 0.0
  %1553 = vmatpush1.msra.mxu0 0.0
  %1554 = vmatprep.subr.mxu0 0.0
  %1555 = vmatpush1.msra.mxu0 0.0
  %1556 = vmatprep.subr.mxu0 0.0
  %1557 = vmatpush1.msra.mxu0 0.0
  %1558 = vmatprep.subr.mxu0 0.0
  %1559 = vmatpush1.msra.mxu0 0.0
  %1560 = vmatprep.subr.mxu0 0.0
  %1561 = vmatpush1.msra.mxu0 0.0
  %1562 = vmatprep.subr.mxu0 0.0
  %1563 = vmatpush1.msra.mxu0 0.0
  %1564 = vmatprep.subr.mxu0 0.0
  %1565 = vmatpush1.msra.mxu0 0.0
  %1566 = vmatprep.subr.mxu0 0.0
  %1567 = vmatpush1.msra.mxu0 0.0
  %1568 = vmatprep.subr.mxu0 0.0
  %1569 = vmatpush1.msra.mxu0 0.0
  %1570 = vmatprep.subr.mxu0 0.0
  %1571 = vmatpush1.msra.mxu0 0.0
  %1572 = vmatprep.subr.mxu0 0.0
  %1573 = vmatpush1.msra.mxu0 0.0
  %1574 = vmatprep.subr.mxu0 0.0
  %1575 = vmatpush1.msra.mxu0 0.0
  %1576 = vmatprep.subr.mxu0 0.0
  %1577 = vmatpush1.msra.mxu0 0.0
  %1578 = vmatprep.subr.mxu0 0.0
  %1579 = vmatpush1.msra.mxu0 0.0
  %1580 = vmatprep.subr.mxu0 0.0
  %1581 = vmatpush1.msra.mxu0 0.0
  %1582 = vmatprep.subr.mxu0 0.0
  %1583 = vmatpush1.msra.mxu0 0.0
  %1584 = vmatprep.subr.mxu0 0.0
  %1585 = vmatpush1.msra.mxu0 0.0
  %1586 = vmatprep.subr.mxu0 0.0
  %1587 = vmatpush1.msra.mxu0 0.0
  %1588 = vmatprep.subr.mxu0 0.0
  %1589 = vmatpush1.msra.mxu0 0.0
  %1590 = vmatprep.subr.mxu0 0.0
  %1591 = vmatpush1.msra.mxu0 0.0
  %1592 = vmatprep.subr.mxu0 0.0
  %1593 = vmatpush1.msra.mxu0 0.0
  %1594 = vmatprep.subr.mxu0 0.0
  %1595 = vmatpush1.msra.mxu0 0.0
  %1596 = vmatprep.mubr.f32.mxu0 0.0
  %1597 = vmatmul.mubr.f32.gmra.mrb[0].mxu0 %v1296
  %v1598 = vpop.f32.mrb[0].mxu0
  %v1599 = vadd.f32 0.0, %v1598
  %v1600 = vpop.f32.mrb[0].mxu0
  %v1601 = vadd.f32 0.0, %v1600
  %1602 = vmatprep.mubr.f32.mxu0 0.0
  %1603 = vmatmul.mubr.f32.gmra.mrb[0].mxu0 %v1299
  %v1604 = vpop.f32.mrb[0].mxu0
  %v1605 = vadd.f32 0.0, %v1604
  %v1606 = vpop.f32.mrb[0].mxu0
  %v1607 = vadd.f32 0.0, %v1606
  %1608 = vdwg.mxu0
  %v1610 = vsel %vm1294, %v1289, 0
  %v1613 = vsel %vm1294, %v1290, 0
  %1615 = vmatprep.subr.mxu0 %v1282
  %1616 = vmatpush1.msra.mxu0 %v1281
  %1617 = vmatprep.subr.mxu0 0.0
  %1618 = vmatpush1.msra.mxu0 0.0
  %1619 = vmatprep.subr.mxu0 0.0
  %1620 = vmatpush1.msra.mxu0 0.0
  %1621 = vmatprep.subr.mxu0 0.0
  %1622 = vmatpush1.msra.mxu0 0.0
  %1623 = vmatprep.subr.mxu0 0.0
  %1624 = vmatpush1.msra.mxu0 0.0
  %1625 = vmatprep.subr.mxu0 0.0
  %1626 = vmatpush1.msra.mxu0 0.0
  %1627 = vmatprep.subr.mxu0 0.0
  %1628 = vmatpush1.msra.mxu0 0.0
  %1629 = vmatprep.subr.mxu0 0.0
  %1630 = vmatpush1.msra.mxu0 0.0
  %1631 = vmatprep.subr.mxu0 0.0
  %1632 = vmatpush1.msra.mxu0 0.0
  %1633 = vmatprep.subr.mxu0 0.0
  %1634 = vmatpush1.msra.mxu0 0.0
  %1635 = vmatprep.subr.mxu0 0.0
  %1636 = vmatpush1.msra.mxu0 0.0
  %1637 = vmatprep.subr.mxu0 0.0
  %1638 = vmatpush1.msra.mxu0 0.0
  %1639 = vmatprep.subr.mxu0 0.0
  %1640 = vmatpush1.msra.mxu0 0.0
  %1641 = vmatprep.subr.mxu0 0.0
  %1642 = vmatpush1.msra.mxu0 0.0
  %1643 = vmatprep.subr.mxu0 0.0
  %1644 = vmatpush1.msra.mxu0 0.0
  %1645 = vmatprep.subr.mxu0 0.0
  %1646 = vmatpush1.msra.mxu0 0.0
  %1647 = vmatprep.subr.mxu0 0.0
  %1648 = vmatpush1.msra.mxu0 0.0
  %1649 = vmatprep.subr.mxu0 0.0
  %1650 = vmatpush1.msra.mxu0 0.0
  %1651 = vmatprep.subr.mxu0 0.0
  %1652 = vmatpush1.msra.mxu0 0.0
  %1653 = vmatprep.subr.mxu0 0.0
  %1654 = vmatpush1.msra.mxu0 0.0
  %1655 = vmatprep.subr.mxu0 0.0
  %1656 = vmatpush1.msra.mxu0 0.0
  %1657 = vmatprep.subr.mxu0 0.0
  %1658 = vmatpush1.msra.mxu0 0.0
  %1659 = vmatprep.subr.mxu0 0.0
  %1660 = vmatpush1.msra.mxu0 0.0
  %1661 = vmatprep.subr.mxu0 0.0
  %1662 = vmatpush1.msra.mxu0 0.0
  %1663 = vmatprep.subr.mxu0 0.0
  %1664 = vmatpush1.msra.mxu0 0.0
  %1665 = vmatprep.subr.mxu0 0.0
  %1666 = vmatpush1.msra.mxu0 0.0
  %1667 = vmatprep.subr.mxu0 0.0
  %1668 = vmatpush1.msra.mxu0 0.0
  %1669 = vmatprep.subr.mxu0 0.0
  %1670 = vmatpush1.msra.mxu0 0.0
  %1671 = vmatprep.subr.mxu0 0.0
  %1672 = vmatpush1.msra.mxu0 0.0
  %1673 = vmatprep.subr.mxu0 0.0
  %1674 = vmatpush1.msra.mxu0 0.0
  %1675 = vmatprep.subr.mxu0 0.0
  %1676 = vmatpush1.msra.mxu0 0.0
  %1677 = vmatprep.subr.mxu0 0.0
  %1678 = vmatpush1.msra.mxu0 0.0
  %1679 = vmatprep.mubr.f32.mxu0 0.0
  %1680 = vmatmul.mubr.f32.gmra.mrb[0].mxu0 %v1610
  %v1681 = vpop.f32.mrb[0].mxu0
  %v1682 = vadd.f32 %v1368, %v1681
  %v1683 = vpop.f32.mrb[0].mxu0
  %v1684 = vadd.f32 %v1370, %v1683
  %1685 = vmatprep.mubr.f32.mxu0 0.0
  %1686 = vmatmul.mubr.f32.gmra.mrb[0].mxu0 %v1613
  %v1687 = vpop.f32.mrb[0].mxu0
  %v1688 = vadd.f32 %v1374, %v1687
  %v1689 = vpop.f32.mrb[0].mxu0
  %v1690 = vadd.f32 %v1376, %v1689
  %1691 = vdwg.mxu0
  %1692 = vmatprep.subr.mxu0 %v1284
  %1693 = vmatpush1.msra.mxu0 %v1283
  %1694 = vmatprep.subr.mxu0 0.0
  %1695 = vmatpush1.msra.mxu0 0.0
  %1696 = vmatprep.subr.mxu0 0.0
  %1697 = vmatpush1.msra.mxu0 0.0
  %1698 = vmatprep.subr.mxu0 0.0
  %1699 = vmatpush1.msra.mxu0 0.0
  %1700 = vmatprep.subr.mxu0 0.0
  %1701 = vmatpush1.msra.mxu0 0.0
  %1702 = vmatprep.subr.mxu0 0.0
  %1703 = vmatpush1.msra.mxu0 0.0
  %1704 = vmatprep.subr.mxu0 0.0
  %1705 = vmatpush1.msra.mxu0 0.0
  %1706 = vmatprep.subr.mxu0 0.0
  %1707 = vmatpush1.msra.mxu0 0.0
  %1708 = vmatprep.subr.mxu0 0.0
  %1709 = vmatpush1.msra.mxu0 0.0
  %1710 = vmatprep.subr.mxu0 0.0
  %1711 = vmatpush1.msra.mxu0 0.0
  %1712 = vmatprep.subr.mxu0 0.0
  %1713 = vmatpush1.msra.mxu0 0.0
  %1714 = vmatprep.subr.mxu0 0.0
  %1715 = vmatpush1.msra.mxu0 0.0
  %1716 = vmatprep.subr.mxu0 0.0
  %1717 = vmatpush1.msra.mxu0 0.0
  %1718 = vmatprep.subr.mxu0 0.0
  %1719 = vmatpush1.msra.mxu0 0.0
  %1720 = vmatprep.subr.mxu0 0.0
  %1721 = vmatpush1.msra.mxu0 0.0
  %1722 = vmatprep.subr.mxu0 0.0
  %1723 = vmatpush1.msra.mxu0 0.0
  %1724 = vmatprep.subr.mxu0 0.0
  %1725 = vmatpush1.msra.mxu0 0.0
  %1726 = vmatprep.subr.mxu0 0.0
  %1727 = vmatpush1.msra.mxu0 0.0
  %1728 = vmatprep.subr.mxu0 0.0
  %1729 = vmatpush1.msra.mxu0 0.0
  %1730 = vmatprep.subr.mxu0 0.0
  %1731 = vmatpush1.msra.mxu0 0.0
  %1732 = vmatprep.subr.mxu0 0.0
  %1733 = vmatpush1.msra.mxu0 0.0
  %1734 = vmatprep.subr.mxu0 0.0
  %1735 = vmatpush1.msra.mxu0 0.0
  %1736 = vmatprep.subr.mxu0 0.0
  %1737 = vmatpush1.msra.mxu0 0.0
  %1738 = vmatprep.subr.mxu0 0.0
  %1739 = vmatpush1.msra.mxu0 0.0
  %1740 = vmatprep.subr.mxu0 0.0
  %1741 = vmatpush1.msra.mxu0 0.0
  %1742 = vmatprep.subr.mxu0 0.0
  %1743 = vmatpush1.msra.mxu0 0.0
  %1744 = vmatprep.subr.mxu0 0.0
  %1745 = vmatpush1.msra.mxu0 0.0
  %1746 = vmatprep.subr.mxu0 0.0
  %1747 = vmatpush1.msra.mxu0 0.0
  %1748 = vmatprep.subr.mxu0 0.0
  %1749 = vmatpush1.msra.mxu0 0.0
  %1750 = vmatprep.subr.mxu0 0.0
  %1751 = vmatpush1.msra.mxu0 0.0
  %1752 = vmatprep.subr.mxu0 0.0
  %1753 = vmatpush1.msra.mxu0 0.0
  %1754 = vmatprep.subr.mxu0 0.0
  %1755 = vmatpush1.msra.mxu0 0.0
  %1756 = vmatprep.mubr.f32.mxu0 0.0
  %1757 = vmatmul.mubr.f32.gmra.mrb[0].mxu0 %v1610
  %v1758 = vpop.f32.mrb[0].mxu0
  %v1759 = vadd.f32 %v1445, %v1758
  %v1760 = vpop.f32.mrb[0].mxu0
  %v1761 = vadd.f32 %v1447, %v1760
  %1762 = vmatprep.mubr.f32.mxu0 0.0
  %1763 = vmatmul.mubr.f32.gmra.mrb[0].mxu0 %v1613
  %v1764 = vpop.f32.mrb[0].mxu0
  %v1765 = vadd.f32 %v1451, %v1764
  %v1766 = vpop.f32.mrb[0].mxu0
  %v1767 = vadd.f32 %v1453, %v1766
  %1768 = vdwg.mxu0
  %1769 = vmatprep.subr.mxu0 %v1286
  %1770 = vmatpush1.msra.mxu0 %v1285
  %1771 = vmatprep.subr.mxu0 0.0
  %1772 = vmatpush1.msra.mxu0 0.0
  %1773 = vmatprep.subr.mxu0 0.0
  %1774 = vmatpush1.msra.mxu0 0.0
  %1775 = vmatprep.subr.mxu0 0.0
  %1776 = vmatpush1.msra.mxu0 0.0
  %1777 = vmatprep.subr.mxu0 0.0
  %1778 = vmatpush1.msra.mxu0 0.0
  %1779 = vmatprep.subr.mxu0 0.0
  %1780 = vmatpush1.msra.mxu0 0.0
  %1781 = vmatprep.subr.mxu0 0.0
  %1782 = vmatpush1.msra.mxu0 0.0
  %1783 = vmatprep.subr.mxu0 0.0
  %1784 = vmatpush1.msra.mxu0 0.0
  %1785 = vmatprep.subr.mxu0 0.0
  %1786 = vmatpush1.msra.mxu0 0.0
  %1787 = vmatprep.subr.mxu0 0.0
  %1788 = vmatpush1.msra.mxu0 0.0
  %1789 = vmatprep.subr.mxu0 0.0
  %1790 = vmatpush1.msra.mxu0 0.0
  %1791 = vmatprep.subr.mxu0 0.0
  %1792 = vmatpush1.msra.mxu0 0.0
  %1793 = vmatprep.subr.mxu0 0.0
  %1794 = vmatpush1.msra.mxu0 0.0
  %1795 = vmatprep.subr.mxu0 0.0
  %1796 = vmatpush1.msra.mxu0 0.0
  %1797 = vmatprep.subr.mxu0 0.0
  %1798 = vmatpush1.msra.mxu0 0.0
  %1799 = vmatprep.subr.mxu0 0.0
  %1800 = vmatpush1.msra.mxu0 0.0
  %1801 = vmatprep.subr.mxu0 0.0
  %1802 = vmatpush1.msra.mxu0 0.0
  %1803 = vmatprep.subr.mxu0 0.0
  %1804 = vmatpush1.msra.mxu0 0.0
  %1805 = vmatprep.subr.mxu0 0.0
  %1806 = vmatpush1.msra.mxu0 0.0
  %1807 = vmatprep.subr.mxu0 0.0
  %1808 = vmatpush1.msra.mxu0 0.0
  %1809 = vmatprep.subr.mxu0 0.0
  %1810 = vmatpush1.msra.mxu0 0.0
  %1811 = vmatprep.subr.mxu0 0.0
  %1812 = vmatpush1.msra.mxu0 0.0
  %1813 = vmatprep.subr.mxu0 0.0
  %1814 = vmatpush1.msra.mxu0 0.0
  %1815 = vmatprep.subr.mxu0 0.0
  %1816 = vmatpush1.msra.mxu0 0.0
  %1817 = vmatprep.subr.mxu0 0.0
  %1818 = vmatpush1.msra.mxu0 0.0
  %1819 = vmatprep.subr.mxu0 0.0
  %1820 = vmatpush1.msra.mxu0 0.0
  %1821 = vmatprep.subr.mxu0 0.0
  %1822 = vmatpush1.msra.mxu0 0.0
  %1823 = vmatprep.subr.mxu0 0.0
  %1824 = vmatpush1.msra.mxu0 0.0
  %1825 = vmatprep.subr.mxu0 0.0
  %1826 = vmatpush1.msra.mxu0 0.0
  %1827 = vmatprep.subr.mxu0 0.0
  %1828 = vmatpush1.msra.mxu0 0.0
  %1829 = vmatprep.subr.mxu0 0.0
  %1830 = vmatpush1.msra.mxu0 0.0
  %1831 = vmatprep.subr.mxu0 0.0
  %1832 = vmatpush1.msra.mxu0 0.0
  %1833 = vmatprep.mubr.f32.mxu0 0.0
  %1834 = vmatmul.mubr.f32.gmra.mrb[0].mxu0 %v1610
  %v1835 = vpop.f32.mrb[0].mxu0
  %v1836 = vadd.f32 %v1522, %v1835
  %v1837 = vpop.f32.mrb[0].mxu0
  %v1838 = vadd.f32 %v1524, %v1837
  %1839 = vmatprep.mubr.f32.mxu0 0.0
  %1840 = vmatmul.mubr.f32.gmra.mrb[0].mxu0 %v1613
  %v1841 = vpop.f32.mrb[0].mxu0
  %v1842 = vadd.f32 %v1528, %v1841
  %v1843 = vpop.f32.mrb[0].mxu0
  %v1844 = vadd.f32 %v1530, %v1843
  %1845 = vdwg.mxu0
  %1846 = vmatprep.subr.mxu0 %v1288
  %1847 = vmatpush1.msra.mxu0 %v1287
  %1848 = vmatprep.subr.mxu0 0.0
  %1849 = vmatpush1.msra.mxu0 0.0
  %1850 = vmatprep.subr.mxu0 0.0
  %1851 = vmatpush1.msra.mxu0 0.0
  %1852 = vmatprep.subr.mxu0 0.0
  %1853 = vmatpush1.msra.mxu0 0.0
  %1854 = vmatprep.subr.mxu0 0.0
  %1855 = vmatpush1.msra.mxu0 0.0
  %1856 = vmatprep.subr.mxu0 0.0
  %1857 = vmatpush1.msra.mxu0 0.0
  %1858 = vmatprep.subr.mxu0 0.0
  %1859 = vmatpush1.msra.mxu0 0.0
  %1860 = vmatprep.subr.mxu0 0.0
  %1861 = vmatpush1.msra.mxu0 0.0
  %1862 = vmatprep.subr.mxu0 0.0
  %1863 = vmatpush1.msra.mxu0 0.0
  %1864 = vmatprep.subr.mxu0 0.0
  %1865 = vmatpush1.msra.mxu0 0.0
  %1866 = vmatprep.subr.mxu0 0.0
  %1867 = vmatpush1.msra.mxu0 0.0
  %1868 = vmatprep.subr.mxu0 0.0
  %1869 = vmatpush1.msra.mxu0 0.0
  %1870 = vmatprep.subr.mxu0 0.0
  %1871 = vmatpush1.msra.mxu0 0.0
  %1872 = vmatprep.subr.mxu0 0.0
  %1873 = vmatpush1.msra.mxu0 0.0
  %1874 = vmatprep.subr.mxu0 0.0
  %1875 = vmatpush1.msra.mxu0 0.0
  %1876 = vmatprep.subr.mxu0 0.0
  %1877 = vmatpush1.msra.mxu0 0.0
  %1878 = vmatprep.subr.mxu0 0.0
  %1879 = vmatpush1.msra.mxu0 0.0
  %1880 = vmatprep.subr.mxu0 0.0
  %1881 = vmatpush1.msra.mxu0 0.0
  %1882 = vmatprep.subr.mxu0 0.0
  %1883 = vmatpush1.msra.mxu0 0.0
  %1884 = vmatprep.subr.mxu0 0.0
  %1885 = vmatpush1.msra.mxu0 0.0
  %1886 = vmatprep.subr.mxu0 0.0
  %1887 = vmatpush1.msra.mxu0 0.0
  %1888 = vmatprep.subr.mxu0 0.0
  %1889 = vmatpush1.msra.mxu0 0.0
  %1890 = vmatprep.subr.mxu0 0.0
  %1891 = vmatpush1.msra.mxu0 0.0
  %1892 = vmatprep.subr.mxu0 0.0
  %1893 = vmatpush1.msra.mxu0 0.0
  %1894 = vmatprep.subr.mxu0 0.0
  %1895 = vmatpush1.msra.mxu0 0.0
  %1896 = vmatprep.subr.mxu0 0.0
  %1897 = vmatpush1.msra.mxu0 0.0
  %1898 = vmatprep.subr.mxu0 0.0
  %1899 = vmatpush1.msra.mxu0 0.0
  %1900 = vmatprep.subr.mxu0 0.0
  %1901 = vmatpush1.msra.mxu0 0.0
  %1902 = vmatprep.subr.mxu0 0.0
  %1903 = vmatpush1.msra.mxu0 0.0
  %1904 = vmatprep.subr.mxu0 0.0
  %1905 = vmatpush1.msra.mxu0 0.0
  %1906 = vmatprep.subr.mxu0 0.0
  %1907 = vmatpush1.msra.mxu0 0.0
  %1908 = vmatprep.subr.mxu0 0.0
  %1909 = vmatpush1.msra.mxu0 0.0
  %1910 = vmatprep.mubr.f32.mxu0 0.0
  %1911 = vmatmul.mubr.f32.gmra.mrb[0].mxu0 %v1610
  %v1912 = vpop.f32.mrb[0].mxu0
  %v1913 = vadd.f32 %v1599, %v1912
  %v1914 = vpop.f32.mrb[0].mxu0
  %v1915 = vadd.f32 %v1601, %v1914
  %1916 = vmatprep.mubr.f32.mxu0 0.0
  %1917 = vmatmul.mubr.f32.gmra.mrb[0].mxu0 %v1613
  %v1918 = vpop.f32.mrb[0].mxu0
  %v1919 = vadd.f32 %v1605, %v1918
  %v1920 = vpop.f32.mrb[0].mxu0
  %v1921 = vadd.f32 %v1607, %v1920
  %1922 = vdwg.mxu0
  %1923 = vrot.lane.b32.xlu0 %v1199, 120
  %v1924 = vpop.permute.xlu0 %1923
  %1925 = vrot.lane.b32.xlu0 %v1200, 120
  %v1926 = vpop.permute.xlu0 %1925
  %1927 = vrot.lane.b32.xlu0 %v1201, 120
  %v1928 = vpop.permute.xlu0 %1927
  %1929 = vrot.lane.b32.xlu0 %v1202, 120
  %v1930 = vpop.permute.xlu0 %1929
  %1931 = vrot.lane.b32.xlu0 %v1203, 120
  %v1932 = vpop.permute.xlu0 %1931
  %1933 = vrot.lane.b32.xlu0 %v1204, 120
  %v1934 = vpop.permute.xlu0 %1933
  %1935 = vrot.lane.b32.xlu0 %v1205, 120
  %v1936 = vpop.permute.xlu0 %1935
  %1937 = vrot.lane.b32.xlu0 %v1206, 120
  %v1938 = vpop.permute.xlu0 %1937
  %vm1939 = vcmp.lt.s32.totalorder %v72, 120
  %v1940 = vsel %vm1939, %v1936, %v1938
  %v1941 = vsel %vm1939, %v1934, %v1936
  %v1942 = vsel %vm1939, %v1932, %v1934
  %v1943 = vsel %vm1939, %v1930, %v1932
  %v1944 = vsel %vm1939, %v1928, %v1930
  %v1945 = vsel %vm1939, %v1926, %v1928
  %v1946 = vsel %vm1939, %v1924, %v1926
  %v1947 = vsel %vm1939, %v1938, %v1924
  %v1948 = vadd.s32 %v1208, 1
  %vm1949 = vcmp.ge.s32.totalorder %v1948, 0
  %vm1950 = vcmp.lt.s32.totalorder %v1948, 8
  %vm1951 = vmand %vm1949, %vm1950
  %v1952 = vsel %vm1951, 1, 0
  %v1953 = vcvt.s32.f32 %v1952
  %v1955 = vlaneseq
  %v1956 = vshrl.u32 %v1955, 7
  %v1957 = vsub.s32 0, %v1956
  %v1958 = vrot.slane %v1953, %v1957
  %v1959 = vlaneseq
  %v1960 = vshrl.u32 %v1959, 7
  %v1961 = vsub.s32 1, %v1960
  %v1962 = vrot.slane %v1953, %v1961
  %v1963 = vlaneseq
  %v1964 = vshrl.u32 %v1963, 7
  %v1965 = vsub.s32 2, %v1964
  %v1966 = vrot.slane %v1953, %v1965
  %v1967 = vlaneseq
  %v1968 = vshrl.u32 %v1967, 7
  %v1969 = vsub.s32 3, %v1968
  %v1970 = vrot.slane %v1953, %v1969
  %v1971 = vlaneseq
  %v1972 = vshrl.u32 %v1971, 7
  %v1973 = vsub.s32 4, %v1972
  %v1974 = vrot.slane %v1953, %v1973
  %v1975 = vlaneseq
  %v1976 = vshrl.u32 %v1975, 7
  %v1977 = vsub.s32 5, %v1976
  %v1978 = vrot.slane %v1953, %v1977
  %v1979 = vlaneseq
  %v1980 = vshrl.u32 %v1979, 7
  %v1981 = vsub.s32 6, %v1980
  %v1982 = vrot.slane %v1953, %v1981
  %v1983 = vlaneseq
  %v1984 = vshrl.u32 %v1983, 7
  %v1985 = vsub.s32 7, %v1984
  %v1986 = vrot.slane %v1953, %v1985
  %v1995 = vmul.f32 %v1946, %v1958
  %v1996 = vmul.f32 %v1945, %v1962
  %v1997 = vmul.f32 %v1944, %v1966
  %v1998 = vmul.f32 %v1943, %v1970
  %v1999 = vmul.f32 %v1942, %v1974
  %v2000 = vmul.f32 %v1941, %v1978
  %v2001 = vmul.f32 %v1940, %v1982
  %v2002 = vmul.f32 %v1947, %v1986
  %s2003 = scalar_lea.vmem %s5, 32
  %v2004 = vld [vmem:[%s2003] sm:$0xff]
  %v2005 = vld [vmem:[%s2003 + $0x8] sm:$0xf]
  %v2007 = vsel %vm1294, %v2004, 0
  %v2010 = vsel %vm1294, %v2005, 0
  %2012 = vmatprep.subr.mxu0 %v1996
  %2013 = vmatpush1.msra.mxu0 %v1995
  %2014 = vmatprep.subr.mxu0 0.0
  %2015 = vmatpush1.msra.mxu0 0.0
  %2016 = vmatprep.subr.mxu0 0.0
  %2017 = vmatpush1.msra.mxu0 0.0
  %2018 = vmatprep.subr.mxu0 0.0
  %2019 = vmatpush1.msra.mxu0 0.0
  %2020 = vmatprep.subr.mxu0 0.0
  %2021 = vmatpush1.msra.mxu0 0.0
  %2022 = vmatprep.subr.mxu0 0.0
  %2023 = vmatpush1.msra.mxu0 0.0
  %2024 = vmatprep.subr.mxu0 0.0
  %2025 = vmatpush1.msra.mxu0 0.0
  %2026 = vmatprep.subr.mxu0 0.0
  %2027 = vmatpush1.msra.mxu0 0.0
  %2028 = vmatprep.subr.mxu0 0.0
  %2029 = vmatpush1.msra.mxu0 0.0
  %2030 = vmatprep.subr.mxu0 0.0
  %2031 = vmatpush1.msra.mxu0 0.0
  %2032 = vmatprep.subr.mxu0 0.0
  %2033 = vmatpush1.msra.mxu0 0.0
  %2034 = vmatprep.subr.mxu0 0.0
  %2035 = vmatpush1.msra.mxu0 0.0
  %2036 = vmatprep.subr.mxu0 0.0
  %2037 = vmatpush1.msra.mxu0 0.0
  %2038 = vmatprep.subr.mxu0 0.0
  %2039 = vmatpush1.msra.mxu0 0.0
  %2040 = vmatprep.subr.mxu0 0.0
  %2041 = vmatpush1.msra.mxu0 0.0
  %2042 = vmatprep.subr.mxu0 0.0
  %2043 = vmatpush1.msra.mxu0 0.0
  %2044 = vmatprep.subr.mxu0 0.0
  %2045 = vmatpush1.msra.mxu0 0.0
  %2046 = vmatprep.subr.mxu0 0.0
  %2047 = vmatpush1.msra.mxu0 0.0
  %2048 = vmatprep.subr.mxu0 0.0
  %2049 = vmatpush1.msra.mxu0 0.0
  %2050 = vmatprep.subr.mxu0 0.0
  %2051 = vmatpush1.msra.mxu0 0.0
  %2052 = vmatprep.subr.mxu0 0.0
  %2053 = vmatpush1.msra.mxu0 0.0
  %2054 = vmatprep.subr.mxu0 0.0
  %2055 = vmatpush1.msra.mxu0 0.0
  %2056 = vmatprep.subr.mxu0 0.0
  %2057 = vmatpush1.msra.mxu0 0.0
  %2058 = vmatprep.subr.mxu0 0.0
  %2059 = vmatpush1.msra.mxu0 0.0
  %2060 = vmatprep.subr.mxu0 0.0
  %2061 = vmatpush1.msra.mxu0 0.0
  %2062 = vmatprep.subr.mxu0 0.0
  %2063 = vmatpush1.msra.mxu0 0.0
  %2064 = vmatprep.subr.mxu0 0.0
  %2065 = vmatpush1.msra.mxu0 0.0
  %2066 = vmatprep.subr.mxu0 0.0
  %2067 = vmatpush1.msra.mxu0 0.0
  %2068 = vmatprep.subr.mxu0 0.0
  %2069 = vmatpush1.msra.mxu0 0.0
  %2070 = vmatprep.subr.mxu0 0.0
  %2071 = vmatpush1.msra.mxu0 0.0
  %2072 = vmatprep.subr.mxu0 0.0
  %2073 = vmatpush1.msra.mxu0 0.0
  %2074 = vmatprep.subr.mxu0 0.0
  %2075 = vmatpush1.msra.mxu0 0.0
  %2076 = vmatprep.mubr.f32.mxu0 0.0
  %2077 = vmatmul.mubr.f32.gmra.mrb[0].mxu0 %v2007
  %v2078 = vpop.f32.mrb[0].mxu0
  %v2079 = vadd.f32 0.0, %v2078
  %v2080 = vpop.f32.mrb[0].mxu0
  %v2081 = vadd.f32 0.0, %v2080
  %2082 = vmatprep.mubr.f32.mxu0 0.0
  %2083 = vmatmul.mubr.f32.gmra.mrb[0].mxu0 %v2010
  %v2084 = vpop.f32.mrb[0].mxu0
  %v2085 = vadd.f32 0.0, %v2084
  %v2086 = vpop.f32.mrb[0].mxu0
  %v2087 = vadd.f32 0.0, %v2086
  %2088 = vdwg.mxu0
  %2089 = vmatprep.subr.mxu0 %v1998
  %2090 = vmatpush1.msra.mxu0 %v1997
  %2091 = vmatprep.subr.mxu0 0.0
  %2092 = vmatpush1.msra.mxu0 0.0
  %2093 = vmatprep.subr.mxu0 0.0
  %2094 = vmatpush1.msra.mxu0 0.0
  %2095 = vmatprep.subr.mxu0 0.0
  %2096 = vmatpush1.msra.mxu0 0.0
  %2097 = vmatprep.subr.mxu0 0.0
  %2098 = vmatpush1.msra.mxu0 0.0
  %2099 = vmatprep.subr.mxu0 0.0
  %2100 = vmatpush1.msra.mxu0 0.0
  %2101 = vmatprep.subr.mxu0 0.0
  %2102 = vmatpush1.msra.mxu0 0.0
  %2103 = vmatprep.subr.mxu0 0.0
  %2104 = vmatpush1.msra.mxu0 0.0
  %2105 = vmatprep.subr.mxu0 0.0
  %2106 = vmatpush1.msra.mxu0 0.0
  %2107 = vmatprep.subr.mxu0 0.0
  %2108 = vmatpush1.msra.mxu0 0.0
  %2109 = vmatprep.subr.mxu0 0.0
  %2110 = vmatpush1.msra.mxu0 0.0
  %2111 = vmatprep.subr.mxu0 0.0
  %2112 = vmatpush1.msra.mxu0 0.0
  %2113 = vmatprep.subr.mxu0 0.0
  %2114 = vmatpush1.msra.mxu0 0.0
  %2115 = vmatprep.subr.mxu0 0.0
  %2116 = vmatpush1.msra.mxu0 0.0
  %2117 = vmatprep.subr.mxu0 0.0
  %2118 = vmatpush1.msra.mxu0 0.0
  %2119 = vmatprep.subr.mxu0 0.0
  %2120 = vmatpush1.msra.mxu0 0.0
  %2121 = vmatprep.subr.mxu0 0.0
  %2122 = vmatpush1.msra.mxu0 0.0
  %2123 = vmatprep.subr.mxu0 0.0
  %2124 = vmatpush1.msra.mxu0 0.0
  %2125 = vmatprep.subr.mxu0 0.0
  %2126 = vmatpush1.msra.mxu0 0.0
  %2127 = vmatprep.subr.mxu0 0.0
  %2128 = vmatpush1.msra.mxu0 0.0
  %2129 = vmatprep.subr.mxu0 0.0
  %2130 = vmatpush1.msra.mxu0 0.0
  %2131 = vmatprep.subr.mxu0 0.0
  %2132 = vmatpush1.msra.mxu0 0.0
  %2133 = vmatprep.subr.mxu0 0.0
  %2134 = vmatpush1.msra.mxu0 0.0
  %2135 = vmatprep.subr.mxu0 0.0
  %2136 = vmatpush1.msra.mxu0 0.0
  %2137 = vmatprep.subr.mxu0 0.0
  %2138 = vmatpush1.msra.mxu0 0.0
  %2139 = vmatprep.subr.mxu0 0.0
  %2140 = vmatpush1.msra.mxu0 0.0
  %2141 = vmatprep.subr.mxu0 0.0
  %2142 = vmatpush1.msra.mxu0 0.0
  %2143 = vmatprep.subr.mxu0 0.0
  %2144 = vmatpush1.msra.mxu0 0.0
  %2145 = vmatprep.subr.mxu0 0.0
  %2146 = vmatpush1.msra.mxu0 0.0
  %2147 = vmatprep.subr.mxu0 0.0
  %2148 = vmatpush1.msra.mxu0 0.0
  %2149 = vmatprep.subr.mxu0 0.0
  %2150 = vmatpush1.msra.mxu0 0.0
  %2151 = vmatprep.subr.mxu0 0.0
  %2152 = vmatpush1.msra.mxu0 0.0
  %2153 = vmatprep.mubr.f32.mxu0 0.0
  %2154 = vmatmul.mubr.f32.gmra.mrb[0].mxu0 %v2007
  %v2155 = vpop.f32.mrb[0].mxu0
  %v2156 = vadd.f32 0.0, %v2155
  %v2157 = vpop.f32.mrb[0].mxu0
  %v2158 = vadd.f32 0.0, %v2157
  %2159 = vmatprep.mubr.f32.mxu0 0.0
  %2160 = vmatmul.mubr.f32.gmra.mrb[0].mxu0 %v2010
  %v2161 = vpop.f32.mrb[0].mxu0
  %v2162 = vadd.f32 0.0, %v2161
  %v2163 = vpop.f32.mrb[0].mxu0
  %v2164 = vadd.f32 0.0, %v2163
  %2165 = vdwg.mxu0
  %2166 = vmatprep.subr.mxu0 %v2000
  %2167 = vmatpush1.msra.mxu0 %v1999
  %2168 = vmatprep.subr.mxu0 0.0
  %2169 = vmatpush1.msra.mxu0 0.0
  %2170 = vmatprep.subr.mxu0 0.0
  %2171 = vmatpush1.msra.mxu0 0.0
  %2172 = vmatprep.subr.mxu0 0.0
  %2173 = vmatpush1.msra.mxu0 0.0
  %2174 = vmatprep.subr.mxu0 0.0
  %2175 = vmatpush1.msra.mxu0 0.0
  %2176 = vmatprep.subr.mxu0 0.0
  %2177 = vmatpush1.msra.mxu0 0.0
  %2178 = vmatprep.subr.mxu0 0.0
  %2179 = vmatpush1.msra.mxu0 0.0
  %2180 = vmatprep.subr.mxu0 0.0
  %2181 = vmatpush1.msra.mxu0 0.0
  %2182 = vmatprep.subr.mxu0 0.0
  %2183 = vmatpush1.msra.mxu0 0.0
  %2184 = vmatprep.subr.mxu0 0.0
  %2185 = vmatpush1.msra.mxu0 0.0
  %2186 = vmatprep.subr.mxu0 0.0
  %2187 = vmatpush1.msra.mxu0 0.0
  %2188 = vmatprep.subr.mxu0 0.0
  %2189 = vmatpush1.msra.mxu0 0.0
  %2190 = vmatprep.subr.mxu0 0.0
  %2191 = vmatpush1.msra.mxu0 0.0
  %2192 = vmatprep.subr.mxu0 0.0
  %2193 = vmatpush1.msra.mxu0 0.0
  %2194 = vmatprep.subr.mxu0 0.0
  %2195 = vmatpush1.msra.mxu0 0.0
  %2196 = vmatprep.subr.mxu0 0.0
  %2197 = vmatpush1.msra.mxu0 0.0
  %2198 = vmatprep.subr.mxu0 0.0
  %2199 = vmatpush1.msra.mxu0 0.0
  %2200 = vmatprep.subr.mxu0 0.0
  %2201 = vmatpush1.msra.mxu0 0.0
  %2202 = vmatprep.subr.mxu0 0.0
  %2203 = vmatpush1.msra.mxu0 0.0
  %2204 = vmatprep.subr.mxu0 0.0
  %2205 = vmatpush1.msra.mxu0 0.0
  %2206 = vmatprep.subr.mxu0 0.0
  %2207 = vmatpush1.msra.mxu0 0.0
  %2208 = vmatprep.subr.mxu0 0.0
  %2209 = vmatpush1.msra.mxu0 0.0
  %2210 = vmatprep.subr.mxu0 0.0
  %2211 = vmatpush1.msra.mxu0 0.0
  %2212 = vmatprep.subr.mxu0 0.0
  %2213 = vmatpush1.msra.mxu0 0.0
  %2214 = vmatprep.subr.mxu0 0.0
  %2215 = vmatpush1.msra.mxu0 0.0
  %2216 = vmatprep.subr.mxu0 0.0
  %2217 = vmatpush1.msra.mxu0 0.0
  %2218 = vmatprep.subr.mxu0 0.0
  %2219 = vmatpush1.msra.mxu0 0.0
  %2220 = vmatprep.subr.mxu0 0.0
  %2221 = vmatpush1.msra.mxu0 0.0
  %2222 = vmatprep.subr.mxu0 0.0
  %2223 = vmatpush1.msra.mxu0 0.0
  %2224 = vmatprep.subr.mxu0 0.0
  %2225 = vmatpush1.msra.mxu0 0.0
  %2226 = vmatprep.subr.mxu0 0.0
  %2227 = vmatpush1.msra.mxu0 0.0
  %2228 = vmatprep.subr.mxu0 0.0
  %2229 = vmatpush1.msra.mxu0 0.0
  %2230 = vmatprep.mubr.f32.mxu0 0.0
  %2231 = vmatmul.mubr.f32.gmra.mrb[0].mxu0 %v2007
  %v2232 = vpop.f32.mrb[0].mxu0
  %v2233 = vadd.f32 0.0, %v2232
  %v2234 = vpop.f32.mrb[0].mxu0
  %v2235 = vadd.f32 0.0, %v2234
  %2236 = vmatprep.mubr.f32.mxu0 0.0
  %2237 = vmatmul.mubr.f32.gmra.mrb[0].mxu0 %v2010
  %v2238 = vpop.f32.mrb[0].mxu0
  %v2239 = vadd.f32 0.0, %v2238
  %v2240 = vpop.f32.mrb[0].mxu0
  %v2241 = vadd.f32 0.0, %v2240
  %2242 = vdwg.mxu0
  %2243 = vmatprep.subr.mxu0 %v2002
  %2244 = vmatpush1.msra.mxu0 %v2001
  %2245 = vmatprep.subr.mxu0 0.0
  %2246 = vmatpush1.msra.mxu0 0.0
  %2247 = vmatprep.subr.mxu0 0.0
  %2248 = vmatpush1.msra.mxu0 0.0
  %2249 = vmatprep.subr.mxu0 0.0
  %2250 = vmatpush1.msra.mxu0 0.0
  %2251 = vmatprep.subr.mxu0 0.0
  %2252 = vmatpush1.msra.mxu0 0.0
  %2253 = vmatprep.subr.mxu0 0.0
  %2254 = vmatpush1.msra.mxu0 0.0
  %2255 = vmatprep.subr.mxu0 0.0
  %2256 = vmatpush1.msra.mxu0 0.0
  %2257 = vmatprep.subr.mxu0 0.0
  %2258 = vmatpush1.msra.mxu0 0.0
  %2259 = vmatprep.subr.mxu0 0.0
  %2260 = vmatpush1.msra.mxu0 0.0
  %2261 = vmatprep.subr.mxu0 0.0
  %2262 = vmatpush1.msra.mxu0 0.0
  %2263 = vmatprep.subr.mxu0 0.0
  %2264 = vmatpush1.msra.mxu0 0.0
  %2265 = vmatprep.subr.mxu0 0.0
  %2266 = vmatpush1.msra.mxu0 0.0
  %2267 = vmatprep.subr.mxu0 0.0
  %2268 = vmatpush1.msra.mxu0 0.0
  %2269 = vmatprep.subr.mxu0 0.0
  %2270 = vmatpush1.msra.mxu0 0.0
  %2271 = vmatprep.subr.mxu0 0.0
  %2272 = vmatpush1.msra.mxu0 0.0
  %2273 = vmatprep.subr.mxu0 0.0
  %2274 = vmatpush1.msra.mxu0 0.0
  %2275 = vmatprep.subr.mxu0 0.0
  %2276 = vmatpush1.msra.mxu0 0.0
  %2277 = vmatprep.subr.mxu0 0.0
  %2278 = vmatpush1.msra.mxu0 0.0
  %2279 = vmatprep.subr.mxu0 0.0
  %2280 = vmatpush1.msra.mxu0 0.0
  %2281 = vmatprep.subr.mxu0 0.0
  %2282 = vmatpush1.msra.mxu0 0.0
  %2283 = vmatprep.subr.mxu0 0.0
  %2284 = vmatpush1.msra.mxu0 0.0
  %2285 = vmatprep.subr.mxu0 0.0
  %2286 = vmatpush1.msra.mxu0 0.0
  %2287 = vmatprep.subr.mxu0 0.0
  %2288 = vmatpush1.msra.mxu0 0.0
  %2289 = vmatprep.subr.mxu0 0.0
  %2290 = vmatpush1.msra.mxu0 0.0
  %2291 = vmatprep.subr.mxu0 0.0
  %2292 = vmatpush1.msra.mxu0 0.0
  %2293 = vmatprep.subr.mxu0 0.0
  %2294 = vmatpush1.msra.mxu0 0.0
  %2295 = vmatprep.subr.mxu0 0.0
  %2296 = vmatpush1.msra.mxu0 0.0
  %2297 = vmatprep.subr.mxu0 0.0
  %2298 = vmatpush1.msra.mxu0 0.0
  %2299 = vmatprep.subr.mxu0 0.0
  %2300 = vmatpush1.msra.mxu0 0.0
  %2301 = vmatprep.subr.mxu0 0.0
  %2302 = vmatpush1.msra.mxu0 0.0
  %2303 = vmatprep.subr.mxu0 0.0
  %2304 = vmatpush1.msra.mxu0 0.0
  %2305 = vmatprep.subr.mxu0 0.0
  %2306 = vmatpush1.msra.mxu0 0.0
  %2307 = vmatprep.mubr.f32.mxu0 0.0
  %2308 = vmatmul.mubr.f32.gmra.mrb[0].mxu0 %v2007
  %v2309 = vpop.f32.mrb[0].mxu0
  %v2310 = vadd.f32 0.0, %v2309
  %v2311 = vpop.f32.mrb[0].mxu0
  %v2312 = vadd.f32 0.0, %v2311
  %2313 = vmatprep.mubr.f32.mxu0 0.0
  %2314 = vmatmul.mubr.f32.gmra.mrb[0].mxu0 %v2010
  %v2315 = vpop.f32.mrb[0].mxu0
  %v2316 = vadd.f32 0.0, %v2315
  %v2317 = vpop.f32.mrb[0].mxu0
  %v2318 = vadd.f32 0.0, %v2317
  %2319 = vdwg.mxu0
  %v2320 = vadd.f32 %v1682, %v2079
  %v2321 = vadd.f32 %v1684, %v2081
  %v2322 = vadd.f32 %v1759, %v2156
  %v2323 = vadd.f32 %v1761, %v2158
  %v2324 = vadd.f32 %v1836, %v2233
  %v2325 = vadd.f32 %v1838, %v2235
  %v2326 = vadd.f32 %v1913, %v2310
  %v2327 = vadd.f32 %v1915, %v2312
  %v2328 = vadd.f32 %v1688, %v2085
  %v2329 = vadd.f32 %v1690, %v2087
  %v2330 = vadd.f32 %v1765, %v2162
  %v2331 = vadd.f32 %v1767, %v2164
  %v2332 = vadd.f32 %v1842, %v2239
  %v2333 = vadd.f32 %v1844, %v2241
  %v2334 = vadd.f32 %v1919, %v2316
  %v2335 = vadd.f32 %v1921, %v2318
  %v2336 = vadd.f32 %v2320, %v2321
  %v2337 = vadd.f32 %v2336, %v2322
  %v2338 = vadd.f32 %v2337, %v2323
  %v2339 = vadd.f32 %v2338, %v2324
  %v2340 = vadd.f32 %v2339, %v2325
  %v2341 = vadd.f32 %v2340, %v2326
  %v2342 = vadd.f32 %v2341, %v2327
  %2343 = vadd.xlane.f32.xlu0 %v2342
  %v2344 = vpop.xlane.xlu0 %2343
  %v2345 = vsel %vm144, %v2328, 0.0
  %v2346 = vsel %vm144, %v2329, 0.0
  %v2347 = vadd.f32 %v2345, %v2346
  %v2348 = vsel %vm144, %v2330, 0.0
  %v2349 = vadd.f32 %v2347, %v2348
  %v2350 = vsel %vm144, %v2331, 0.0
  %v2351 = vadd.f32 %v2349, %v2350
  %v2352 = vsel %vm144, %v2332, 0.0
  %v2353 = vadd.f32 %v2351, %v2352
  %v2354 = vsel %vm144, %v2333, 0.0
  %v2355 = vadd.f32 %v2353, %v2354
  %v2356 = vsel %vm144, %v2334, 0.0
  %v2357 = vadd.f32 %v2355, %v2356
  %v2358 = vsel %vm144, %v2335, 0.0
  %v2359 = vadd.f32 %v2357, %v2358
  %2360 = vadd.xlane.f32.xlu0 %v2359
  %v2361 = vpop.xlane.xlu0 %2360
  %v2362 = vmul.f32 %v2344, 0.0009765625
  %v2363 = vmul.f32 %v2361, 0.0009765625
  %v2364 = vsub.f32 %v2320, %v2362
  %v2365 = vsub.f32 %v2321, %v2362
  %v2366 = vsub.f32 %v2322, %v2362
  %v2367 = vsub.f32 %v2323, %v2362
  %v2368 = vsub.f32 %v2324, %v2362
  %v2369 = vsub.f32 %v2325, %v2362
  %v2370 = vsub.f32 %v2326, %v2362
  %v2371 = vsub.f32 %v2327, %v2362
  %v2372 = vsub.f32 %v2328, %v2363
  %v2373 = vsub.f32 %v2329, %v2363
  %v2374 = vsub.f32 %v2330, %v2363
  %v2375 = vsub.f32 %v2331, %v2363
  %v2376 = vsub.f32 %v2332, %v2363
  %v2377 = vsub.f32 %v2333, %v2363
  %v2378 = vsub.f32 %v2334, %v2363
  %v2379 = vsub.f32 %v2335, %v2363
  %v2380 = vmul.f32 %v2364, %v2364
  %v2381 = vmul.f32 %v2365, %v2365
  %v2382 = vmul.f32 %v2366, %v2366
  %v2383 = vmul.f32 %v2367, %v2367
  %v2384 = vmul.f32 %v2368, %v2368
  %v2385 = vmul.f32 %v2369, %v2369
  %v2386 = vmul.f32 %v2370, %v2370
  %v2387 = vmul.f32 %v2371, %v2371
  %v2388 = vmul.f32 %v2372, %v2372
  %v2389 = vmul.f32 %v2373, %v2373
  %v2390 = vmul.f32 %v2374, %v2374
  %v2391 = vmul.f32 %v2375, %v2375
  %v2392 = vmul.f32 %v2376, %v2376
  %v2393 = vmul.f32 %v2377, %v2377
  %v2394 = vmul.f32 %v2378, %v2378
  %v2395 = vmul.f32 %v2379, %v2379
  %v2396 = vadd.f32 %v2380, %v2381
  %v2397 = vadd.f32 %v2396, %v2382
  %v2398 = vadd.f32 %v2397, %v2383
  %v2399 = vadd.f32 %v2398, %v2384
  %v2400 = vadd.f32 %v2399, %v2385
  %v2401 = vadd.f32 %v2400, %v2386
  %v2402 = vadd.f32 %v2401, %v2387
  %2403 = vadd.xlane.f32.xlu0 %v2402
  %v2404 = vpop.xlane.xlu0 %2403
  %v2405 = vsel %vm144, %v2388, 0.0
  %v2406 = vsel %vm144, %v2389, 0.0
  %v2407 = vadd.f32 %v2405, %v2406
  %v2408 = vsel %vm144, %v2390, 0.0
  %v2409 = vadd.f32 %v2407, %v2408
  %v2410 = vsel %vm144, %v2391, 0.0
  %v2411 = vadd.f32 %v2409, %v2410
  %v2412 = vsel %vm144, %v2392, 0.0
  %v2413 = vadd.f32 %v2411, %v2412
  %v2414 = vsel %vm144, %v2393, 0.0
  %v2415 = vadd.f32 %v2413, %v2414
  %v2416 = vsel %vm144, %v2394, 0.0
  %v2417 = vadd.f32 %v2415, %v2416
  %v2418 = vsel %vm144, %v2395, 0.0
  %v2419 = vadd.f32 %v2417, %v2418
  %2420 = vadd.xlane.f32.xlu0 %v2419
  %v2421 = vpop.xlane.xlu0 %2420
  %v2422 = vmul.f32 %v2404, 0.0009765625
  %v2423 = vmul.f32 %v2421, 0.0009765625
  %v2424 = vld [vmem:[%s6] sm:$0xff]
  %v2425 = vld [vmem:[%s6 + $0x8] sm:$0xf]
  %v2426 = vadd.f32 %v2422, 1e-05
  %v2427 = vadd.f32 %v2423, 1e-05
  %v2428 = vrsqrt.pop %v2426
  %v2429 = vrsqrt.pop %v2427
  %v2430 = vmul.f32 %v2424, %v2428
  %v2431 = vmul.f32 %v2425, %v2429
  %2433 = vset.pattern.permute.xlu0 0
  %2434 = vperm.xlu0 %2433, %v2430
  %v2435 = vpop.permute.xlu0 %2434
  %2438 = vset.pattern.permute.xlu0 0
  %2439 = vperm.xlu0 %2438, %v2431
  %v2440 = vpop.permute.xlu0 %2439
  %v2442 = vmul.f32 %v2364, %v2435
  %v2443 = vmul.f32 %v2365, %v2435
  %v2444 = vmul.f32 %v2366, %v2435
  %v2445 = vmul.f32 %v2367, %v2435
  %v2446 = vmul.f32 %v2368, %v2435
  %v2447 = vmul.f32 %v2369, %v2435
  %v2448 = vmul.f32 %v2370, %v2435
  %v2449 = vmul.f32 %v2371, %v2435
  %v2450 = vmul.f32 %v2372, %v2440
  %v2451 = vmul.f32 %v2373, %v2440
  %v2452 = vmul.f32 %v2374, %v2440
  %v2453 = vmul.f32 %v2375, %v2440
  %v2454 = vmul.f32 %v2376, %v2440
  %v2455 = vmul.f32 %v2377, %v2440
  %v2456 = vmul.f32 %v2378, %v2440
  %v2457 = vmul.f32 %v2379, %v2440
  %v2458 = vld [vmem:[%s7] sm:$0xff]
  %v2459 = vld [vmem:[%s7 + $0x8] sm:$0xf]
  %2461 = vset.pattern.permute.xlu0 0
  %2462 = vperm.xlu0 %2461, %v2458
  %v2463 = vpop.permute.xlu0 %2462
  %2466 = vset.pattern.permute.xlu0 0
  %2467 = vperm.xlu0 %2466, %v2459
  %v2468 = vpop.permute.xlu0 %2467
  %v2470 = vadd.f32 %v2442, %v2463
  %v2471 = vadd.f32 %v2443, %v2463
  %v2472 = vadd.f32 %v2444, %v2463
  %v2473 = vadd.f32 %v2445, %v2463
  %v2474 = vadd.f32 %v2446, %v2463
  %v2475 = vadd.f32 %v2447, %v2463
  %v2476 = vadd.f32 %v2448, %v2463
  %v2477 = vadd.f32 %v2449, %v2463
  %v2478 = vadd.f32 %v2450, %v2468
  %v2479 = vadd.f32 %v2451, %v2468
  %v2480 = vadd.f32 %v2452, %v2468
  %v2481 = vadd.f32 %v2453, %v2468
  %v2482 = vadd.f32 %v2454, %v2468
  %v2483 = vadd.f32 %v2455, %v2468
  %v2484 = vadd.f32 %v2456, %v2468
  %v2485 = vadd.f32 %v2457, %v2468
  %v2486 = vmax.f32 %v2470, 0.0
  %v2487 = vmax.f32 %v2471, 0.0
  %v2488 = vmax.f32 %v2472, 0.0
  %v2489 = vmax.f32 %v2473, 0.0
  %v2490 = vmax.f32 %v2474, 0.0
  %v2491 = vmax.f32 %v2475, 0.0
  %v2492 = vmax.f32 %v2476, 0.0
  %v2493 = vmax.f32 %v2477, 0.0
  %v2494 = vmax.f32 %v2478, 0.0
  %v2495 = vmax.f32 %v2479, 0.0
  %v2496 = vmax.f32 %v2480, 0.0
  %v2497 = vmax.f32 %v2481, 0.0
  %v2498 = vmax.f32 %v2482, 0.0
  %v2499 = vmax.f32 %v2483, 0.0
  %v2500 = vmax.f32 %v2484, 0.0
  %v2501 = vmax.f32 %v2485, 0.0
  %s2502 = scalar_lea.vmem %s1, 16
  %v2503 = vld [vmem:[%s2502] sm:$0xff]
  %2504 = vrot.lane.b32.xlu0 %v2486, 1
  %v2505 = vpop.permute.xlu0 %2504
  %2506 = vrot.lane.b32.xlu0 %v2494, 1
  %v2507 = vpop.permute.xlu0 %2506
  %2508 = vrot.lane.b32.xlu0 %v2487, 1
  %v2509 = vpop.permute.xlu0 %2508
  %2510 = vrot.lane.b32.xlu0 %v2495, 1
  %v2511 = vpop.permute.xlu0 %2510
  %2512 = vrot.lane.b32.xlu0 %v2488, 1
  %v2513 = vpop.permute.xlu0 %2512
  %2514 = vrot.lane.b32.xlu0 %v2496, 1
  %v2515 = vpop.permute.xlu0 %2514
  %2516 = vrot.lane.b32.xlu0 %v2489, 1
  %v2517 = vpop.permute.xlu0 %2516
  %2518 = vrot.lane.b32.xlu0 %v2497, 1
  %v2519 = vpop.permute.xlu0 %2518
  %2520 = vrot.lane.b32.xlu0 %v2490, 1
  %v2521 = vpop.permute.xlu0 %2520
  %2522 = vrot.lane.b32.xlu0 %v2498, 1
  %v2523 = vpop.permute.xlu0 %2522
  %2524 = vrot.lane.b32.xlu0 %v2491, 1
  %v2525 = vpop.permute.xlu0 %2524
  %2526 = vrot.lane.b32.xlu0 %v2499, 1
  %v2527 = vpop.permute.xlu0 %2526
  %2528 = vrot.lane.b32.xlu0 %v2492, 1
  %v2529 = vpop.permute.xlu0 %2528
  %2530 = vrot.lane.b32.xlu0 %v2500, 1
  %v2531 = vpop.permute.xlu0 %2530
  %2532 = vrot.lane.b32.xlu0 %v2493, 1
  %v2533 = vpop.permute.xlu0 %2532
  %2534 = vrot.lane.b32.xlu0 %v2501, 1
  %v2535 = vpop.permute.xlu0 %2534
  %vm2536 = vcmp.lt.s32.totalorder %v72, 1
  %v2537 = vsel %vm2536, %v2529, %v2533
  %v2538 = vsel %vm2536, %v2531, %v2535
  %v2539 = vsel %vm2536, %v2525, %v2529
  %v2540 = vsel %vm2536, %v2527, %v2531
  %v2541 = vsel %vm2536, %v2521, %v2525
  %v2542 = vsel %vm2536, %v2523, %v2527
  %v2543 = vsel %vm2536, %v2517, %v2521
  %v2544 = vsel %vm2536, %v2519, %v2523
  %v2545 = vsel %vm2536, %v2513, %v2517
  %v2546 = vsel %vm2536, %v2515, %v2519
  %v2547 = vsel %vm2536, %v2509, %v2513
  %v2548 = vsel %vm2536, %v2511, %v2515
  %v2549 = vsel %vm2536, %v2505, %v2509
  %v2550 = vsel %vm2536, %v2507, %v2511
  %v2551 = vsel %vm2536, %v2533, %v2505
  %v2552 = vsel %vm2536, %v2535, %v2507
  %v2553 = vadd.s32 %v2503, 4294967295
  %vm2554 = vcmp.ge.s32.totalorder %v2553, 0
  %vm2555 = vcmp.lt.s32.totalorder %v2553, 8
  %vm2556 = vmand %vm2554, %vm2555
  %v2557 = vsel %vm2556, 1, 0
  %v2558 = vcvt.s32.f32 %v2557
  %v2560 = vlaneseq
  %v2561 = vshrl.u32 %v2560, 7
  %v2562 = vsub.s32 0, %v2561
  %v2563 = vrot.slane %v2558, %v2562
  %v2564 = vlaneseq
  %v2565 = vshrl.u32 %v2564, 7
  %v2566 = vsub.s32 1, %v2565
  %v2567 = vrot.slane %v2558, %v2566
  %v2568 = vlaneseq
  %v2569 = vshrl.u32 %v2568, 7
  %v2570 = vsub.s32 2, %v2569
  %v2571 = vrot.slane %v2558, %v2570
  %v2572 = vlaneseq
  %v2573 = vshrl.u32 %v2572, 7
  %v2574 = vsub.s32 3, %v2573
  %v2575 = vrot.slane %v2558, %v2574
  %v2576 = vlaneseq
  %v2577 = vshrl.u32 %v2576, 7
  %v2578 = vsub.s32 4, %v2577
  %v2579 = vrot.slane %v2558, %v2578
  %v2580 = vlaneseq
  %v2581 = vshrl.u32 %v2580, 7
  %v2582 = vsub.s32 5, %v2581
  %v2583 = vrot.slane %v2558, %v2582
  %v2584 = vlaneseq
  %v2585 = vshrl.u32 %v2584, 7
  %v2586 = vsub.s32 6, %v2585
  %v2587 = vrot.slane %v2558, %v2586
  %v2588 = vlaneseq
  %v2589 = vshrl.u32 %v2588, 7
  %v2590 = vsub.s32 7, %v2589
  %v2591 = vrot.slane %v2558, %v2590
  %v2600 = vmul.f32 %v2551, %v2563
  %v2601 = vmul.f32 %v2549, %v2567
  %v2602 = vmul.f32 %v2547, %v2571
  %v2603 = vmul.f32 %v2545, %v2575
  %v2604 = vmul.f32 %v2543, %v2579
  %v2605 = vmul.f32 %v2541, %v2583
  %v2606 = vmul.f32 %v2539, %v2587
  %v2607 = vmul.f32 %v2537, %v2591
  %v2608 = vmul.f32 %v2552, %v2563
  %v2609 = vmul.f32 %v2550, %v2567
  %v2610 = vmul.f32 %v2548, %v2571
  %v2611 = vmul.f32 %v2546, %v2575
  %v2612 = vmul.f32 %v2544, %v2579
  %v2613 = vmul.f32 %v2542, %v2583
  %v2614 = vmul.f32 %v2540, %v2587
  %v2615 = vmul.f32 %v2538, %v2591
  %v2616 = vld [vmem:[%s8] sm:$0xff]
  %v2617 = vld [vmem:[%s8 + $0x8] sm:$0xff]
  %s2618 = scalar_lea.vmem %s8, 16
  %v2619 = vld [vmem:[%s2618] sm:$0xff]
  %v2620 = vld [vmem:[%s2618 + $0x8] sm:$0xff]
  %vm2621 = vcmask 97280
  %v2623 = vsel %vm2621, %v2619, 0
  %v2626 = vsel %vm2621, %v2620, 0
  %v2629 = vsel %vm144, %v2494, 0
  %v2632 = vsel %vm144, %v2495, 0
  %v2635 = vsel %vm144, %v2496, 0
  %v2638 = vsel %vm144, %v2497, 0
  %v2641 = vsel %vm144, %v2498, 0
  %v2644 = vsel %vm144, %v2499, 0
  %v2647 = vsel %vm144, %v2500, 0
  %v2650 = vsel %vm144, %v2501, 0
  %2652 = vmatprep.subr.mxu0 %v2487
  %2653 = vmatpush1.msra.mxu0 %v2486
  %2654 = vmatprep.subr.mxu0 %v2632
  %2655 = vmatpush1.msra.mxu0 %v2629
  %2656 = vmatprep.subr.mxu0 0.0
  %2657 = vmatpush1.msra.mxu0 0.0
  %2658 = vmatprep.subr.mxu0 0.0
  %2659 = vmatpush1.msra.mxu0 0.0
  %2660 = vmatprep.subr.mxu0 0.0
  %2661 = vmatpush1.msra.mxu0 0.0
  %2662 = vmatprep.subr.mxu0 0.0
  %2663 = vmatpush1.msra.mxu0 0.0
  %2664 = vmatprep.subr.mxu0 0.0
  %2665 = vmatpush1.msra.mxu0 0.0
  %2666 = vmatprep.subr.mxu0 0.0
  %2667 = vmatpush1.msra.mxu0 0.0
  %2668 = vmatprep.subr.mxu0 0.0
  %2669 = vmatpush1.msra.mxu0 0.0
  %2670 = vmatprep.subr.mxu0 0.0
  %2671 = vmatpush1.msra.mxu0 0.0
  %2672 = vmatprep.subr.mxu0 0.0
  %2673 = vmatpush1.msra.mxu0 0.0
  %2674 = vmatprep.subr.mxu0 0.0
  %2675 = vmatpush1.msra.mxu0 0.0
  %2676 = vmatprep.subr.mxu0 0.0
  %2677 = vmatpush1.msra.mxu0 0.0
  %2678 = vmatprep.subr.mxu0 0.0
  %2679 = vmatpush1.msra.mxu0 0.0
  %2680 = vmatprep.subr.mxu0 0.0
  %2681 = vmatpush1.msra.mxu0 0.0
  %2682 = vmatprep.subr.mxu0 0.0
  %2683 = vmatpush1.msra.mxu0 0.0
  %2684 = vmatprep.subr.mxu0 0.0
  %2685 = vmatpush1.msra.mxu0 0.0
  %2686 = vmatprep.subr.mxu0 0.0
  %2687 = vmatpush1.msra.mxu0 0.0
  %2688 = vmatprep.subr.mxu0 0.0
  %2689 = vmatpush1.msra.mxu0 0.0
  %2690 = vmatprep.subr.mxu0 0.0
  %2691 = vmatpush1.msra.mxu0 0.0
  %2692 = vmatprep.subr.mxu0 0.0
  %2693 = vmatpush1.msra.mxu0 0.0
  %2694 = vmatprep.subr.mxu0 0.0
  %2695 = vmatpush1.msra.mxu0 0.0
  %2696 = vmatprep.subr.mxu0 0.0
  %2697 = vmatpush1.msra.mxu0 0.0
  %2698 = vmatprep.subr.mxu0 0.0
  %2699 = vmatpush1.msra.mxu0 0.0
  %2700 = vmatprep.subr.mxu0 0.0
  %2701 = vmatpush1.msra.mxu0 0.0
  %2702 = vmatprep.subr.mxu0 0.0
  %2703 = vmatpush1.msra.mxu0 0.0
  %2704 = vmatprep.subr.mxu0 0.0
  %2705 = vmatpush1.msra.mxu0 0.0
  %2706 = vmatprep.subr.mxu0 0.0
  %2707 = vmatpush1.msra.mxu0 0.0
  %2708 = vmatprep.subr.mxu0 0.0
  %2709 = vmatpush1.msra.mxu0 0.0
  %2710 = vmatprep.subr.mxu0 0.0
  %2711 = vmatpush1.msra.mxu0 0.0
  %2712 = vmatprep.subr.mxu0 0.0
  %2713 = vmatpush1.msra.mxu0 0.0
  %2714 = vmatprep.subr.mxu0 0.0
  %2715 = vmatpush1.msra.mxu0 0.0
  %2716 = vmatprep.mubr.f32.mxu0 0.0
  %2717 = vmatmul.mubr.f32.gmra.mrb[0].mxu0 %v2623
  %v2718 = vpop.f32.mrb[0].mxu0
  %v2719 = vadd.f32 0.0, %v2718
  %v2720 = vpop.f32.mrb[0].mxu0
  %v2721 = vadd.f32 0.0, %v2720
  %2722 = vmatprep.mubr.f32.mxu0 0.0
  %2723 = vmatmul.mubr.f32.gmra.mrb[0].mxu0 %v2626
  %v2724 = vpop.f32.mrb[0].mxu0
  %v2725 = vadd.f32 0.0, %v2724
  %v2726 = vpop.f32.mrb[0].mxu0
  %v2727 = vadd.f32 0.0, %v2726
  %2728 = vdwg.mxu0
  %2729 = vmatprep.subr.mxu0 %v2489
  %2730 = vmatpush1.msra.mxu0 %v2488
  %2731 = vmatprep.subr.mxu0 %v2638
  %2732 = vmatpush1.msra.mxu0 %v2635
  %2733 = vmatprep.subr.mxu0 0.0
  %2734 = vmatpush1.msra.mxu0 0.0
  %2735 = vmatprep.subr.mxu0 0.0
  %2736 = vmatpush1.msra.mxu0 0.0
  %2737 = vmatprep.subr.mxu0 0.0
  %2738 = vmatpush1.msra.mxu0 0.0
  %2739 = vmatprep.subr.mxu0 0.0
  %2740 = vmatpush1.msra.mxu0 0.0
  %2741 = vmatprep.subr.mxu0 0.0
  %2742 = vmatpush1.msra.mxu0 0.0
  %2743 = vmatprep.subr.mxu0 0.0
  %2744 = vmatpush1.msra.mxu0 0.0
  %2745 = vmatprep.subr.mxu0 0.0
  %2746 = vmatpush1.msra.mxu0 0.0
  %2747 = vmatprep.subr.mxu0 0.0
  %2748 = vmatpush1.msra.mxu0 0.0
  %2749 = vmatprep.subr.mxu0 0.0
  %2750 = vmatpush1.msra.mxu0 0.0
  %2751 = vmatprep.subr.mxu0 0.0
  %2752 = vmatpush1.msra.mxu0 0.0
  %2753 = vmatprep.subr.mxu0 0.0
  %2754 = vmatpush1.msra.mxu0 0.0
  %2755 = vmatprep.subr.mxu0 0.0
  %2756 = vmatpush1.msra.mxu0 0.0
  %2757 = vmatprep.subr.mxu0 0.0
  %2758 = vmatpush1.msra.mxu0 0.0
  %2759 = vmatprep.subr.mxu0 0.0
  %2760 = vmatpush1.msra.mxu0 0.0
  %2761 = vmatprep.subr.mxu0 0.0
  %2762 = vmatpush1.msra.mxu0 0.0
  %2763 = vmatprep.subr.mxu0 0.0
  %2764 = vmatpush1.msra.mxu0 0.0
  %2765 = vmatprep.subr.mxu0 0.0
  %2766 = vmatpush1.msra.mxu0 0.0
  %2767 = vmatprep.subr.mxu0 0.0
  %2768 = vmatpush1.msra.mxu0 0.0
  %2769 = vmatprep.subr.mxu0 0.0
  %2770 = vmatpush1.msra.mxu0 0.0
  %2771 = vmatprep.subr.mxu0 0.0
  %2772 = vmatpush1.msra.mxu0 0.0
  %2773 = vmatprep.subr.mxu0 0.0
  %2774 = vmatpush1.msra.mxu0 0.0
  %2775 = vmatprep.subr.mxu0 0.0
  %2776 = vmatpush1.msra.mxu0 0.0
  %2777 = vmatprep.subr.mxu0 0.0
  %2778 = vmatpush1.msra.mxu0 0.0
  %2779 = vmatprep.subr.mxu0 0.0
  %2780 = vmatpush1.msra.mxu0 0.0
  %2781 = vmatprep.subr.mxu0 0.0
  %2782 = vmatpush1.msra.mxu0 0.0
  %2783 = vmatprep.subr.mxu0 0.0
  %2784 = vmatpush1.msra.mxu0 0.0
  %2785 = vmatprep.subr.mxu0 0.0
  %2786 = vmatpush1.msra.mxu0 0.0
  %2787 = vmatprep.subr.mxu0 0.0
  %2788 = vmatpush1.msra.mxu0 0.0
  %2789 = vmatprep.subr.mxu0 0.0
  %2790 = vmatpush1.msra.mxu0 0.0
  %2791 = vmatprep.subr.mxu0 0.0
  %2792 = vmatpush1.msra.mxu0 0.0
  %2793 = vmatprep.mubr.f32.mxu0 0.0
  %2794 = vmatmul.mubr.f32.gmra.mrb[0].mxu0 %v2623
  %v2795 = vpop.f32.mrb[0].mxu0
  %v2796 = vadd.f32 0.0, %v2795
  %v2797 = vpop.f32.mrb[0].mxu0
  %v2798 = vadd.f32 0.0, %v2797
  %2799 = vmatprep.mubr.f32.mxu0 0.0
  %2800 = vmatmul.mubr.f32.gmra.mrb[0].mxu0 %v2626
  %v2801 = vpop.f32.mrb[0].mxu0
  %v2802 = vadd.f32 0.0, %v2801
  %v2803 = vpop.f32.mrb[0].mxu0
  %v2804 = vadd.f32 0.0, %v2803
  %2805 = vdwg.mxu0
  %2806 = vmatprep.subr.mxu0 %v2491
  %2807 = vmatpush1.msra.mxu0 %v2490
  %2808 = vmatprep.subr.mxu0 %v2644
  %2809 = vmatpush1.msra.mxu0 %v2641
  %2810 = vmatprep.subr.mxu0 0.0
  %2811 = vmatpush1.msra.mxu0 0.0
  %2812 = vmatprep.subr.mxu0 0.0
  %2813 = vmatpush1.msra.mxu0 0.0
  %2814 = vmatprep.subr.mxu0 0.0
  %2815 = vmatpush1.msra.mxu0 0.0
  %2816 = vmatprep.subr.mxu0 0.0
  %2817 = vmatpush1.msra.mxu0 0.0
  %2818 = vmatprep.subr.mxu0 0.0
  %2819 = vmatpush1.msra.mxu0 0.0
  %2820 = vmatprep.subr.mxu0 0.0
  %2821 = vmatpush1.msra.mxu0 0.0
  %2822 = vmatprep.subr.mxu0 0.0
  %2823 = vmatpush1.msra.mxu0 0.0
  %2824 = vmatprep.subr.mxu0 0.0
  %2825 = vmatpush1.msra.mxu0 0.0
  %2826 = vmatprep.subr.mxu0 0.0
  %2827 = vmatpush1.msra.mxu0 0.0
  %2828 = vmatprep.subr.mxu0 0.0
  %2829 = vmatpush1.msra.mxu0 0.0
  %2830 = vmatprep.subr.mxu0 0.0
  %2831 = vmatpush1.msra.mxu0 0.0
  %2832 = vmatprep.subr.mxu0 0.0
  %2833 = vmatpush1.msra.mxu0 0.0
  %2834 = vmatprep.subr.mxu0 0.0
  %2835 = vmatpush1.msra.mxu0 0.0
  %2836 = vmatprep.subr.mxu0 0.0
  %2837 = vmatpush1.msra.mxu0 0.0
  %2838 = vmatprep.subr.mxu0 0.0
  %2839 = vmatpush1.msra.mxu0 0.0
  %2840 = vmatprep.subr.mxu0 0.0
  %2841 = vmatpush1.msra.mxu0 0.0
  %2842 = vmatprep.subr.mxu0 0.0
  %2843 = vmatpush1.msra.mxu0 0.0
  %2844 = vmatprep.subr.mxu0 0.0
  %2845 = vmatpush1.msra.mxu0 0.0
  %2846 = vmatprep.subr.mxu0 0.0
  %2847 = vmatpush1.msra.mxu0 0.0
  %2848 = vmatprep.subr.mxu0 0.0
  %2849 = vmatpush1.msra.mxu0 0.0
  %2850 = vmatprep.subr.mxu0 0.0
  %2851 = vmatpush1.msra.mxu0 0.0
  %2852 = vmatprep.subr.mxu0 0.0
  %2853 = vmatpush1.msra.mxu0 0.0
  %2854 = vmatprep.subr.mxu0 0.0
  %2855 = vmatpush1.msra.mxu0 0.0
  %2856 = vmatprep.subr.mxu0 0.0
  %2857 = vmatpush1.msra.mxu0 0.0
  %2858 = vmatprep.subr.mxu0 0.0
  %2859 = vmatpush1.msra.mxu0 0.0
  %2860 = vmatprep.subr.mxu0 0.0
  %2861 = vmatpush1.msra.mxu0 0.0
  %2862 = vmatprep.subr.mxu0 0.0
  %2863 = vmatpush1.msra.mxu0 0.0
  %2864 = vmatprep.subr.mxu0 0.0
  %2865 = vmatpush1.msra.mxu0 0.0
  %2866 = vmatprep.subr.mxu0 0.0
  %2867 = vmatpush1.msra.mxu0 0.0
  %2868 = vmatprep.subr.mxu0 0.0
  %2869 = vmatpush1.msra.mxu0 0.0
  %2870 = vmatprep.mubr.f32.mxu0 0.0
  %2871 = vmatmul.mubr.f32.gmra.mrb[0].mxu0 %v2623
  %v2872 = vpop.f32.mrb[0].mxu0
  %v2873 = vadd.f32 0.0, %v2872
  %v2874 = vpop.f32.mrb[0].mxu0
  %v2875 = vadd.f32 0.0, %v2874
  %2876 = vmatprep.mubr.f32.mxu0 0.0
  %2877 = vmatmul.mubr.f32.gmra.mrb[0].mxu0 %v2626
  %v2878 = vpop.f32.mrb[0].mxu0
  %v2879 = vadd.f32 0.0, %v2878
  %v2880 = vpop.f32.mrb[0].mxu0
  %v2881 = vadd.f32 0.0, %v2880
  %2882 = vdwg.mxu0
  %2883 = vmatprep.subr.mxu0 %v2493
  %2884 = vmatpush1.msra.mxu0 %v2492
  %2885 = vmatprep.subr.mxu0 %v2650
  %2886 = vmatpush1.msra.mxu0 %v2647
  %2887 = vmatprep.subr.mxu0 0.0
  %2888 = vmatpush1.msra.mxu0 0.0
  %2889 = vmatprep.subr.mxu0 0.0
  %2890 = vmatpush1.msra.mxu0 0.0
  %2891 = vmatprep.subr.mxu0 0.0
  %2892 = vmatpush1.msra.mxu0 0.0
  %2893 = vmatprep.subr.mxu0 0.0
  %2894 = vmatpush1.msra.mxu0 0.0
  %2895 = vmatprep.subr.mxu0 0.0
  %2896 = vmatpush1.msra.mxu0 0.0
  %2897 = vmatprep.subr.mxu0 0.0
  %2898 = vmatpush1.msra.mxu0 0.0
  %2899 = vmatprep.subr.mxu0 0.0
  %2900 = vmatpush1.msra.mxu0 0.0
  %2901 = vmatprep.subr.mxu0 0.0
  %2902 = vmatpush1.msra.mxu0 0.0
  %2903 = vmatprep.subr.mxu0 0.0
  %2904 = vmatpush1.msra.mxu0 0.0
  %2905 = vmatprep.subr.mxu0 0.0
  %2906 = vmatpush1.msra.mxu0 0.0
  %2907 = vmatprep.subr.mxu0 0.0
  %2908 = vmatpush1.msra.mxu0 0.0
  %2909 = vmatprep.subr.mxu0 0.0
  %2910 = vmatpush1.msra.mxu0 0.0
  %2911 = vmatprep.subr.mxu0 0.0
  %2912 = vmatpush1.msra.mxu0 0.0
  %2913 = vmatprep.subr.mxu0 0.0
  %2914 = vmatpush1.msra.mxu0 0.0
  %2915 = vmatprep.subr.mxu0 0.0
  %2916 = vmatpush1.msra.mxu0 0.0
  %2917 = vmatprep.subr.mxu0 0.0
  %2918 = vmatpush1.msra.mxu0 0.0
  %2919 = vmatprep.subr.mxu0 0.0
  %2920 = vmatpush1.msra.mxu0 0.0
  %2921 = vmatprep.subr.mxu0 0.0
  %2922 = vmatpush1.msra.mxu0 0.0
  %2923 = vmatprep.subr.mxu0 0.0
  %2924 = vmatpush1.msra.mxu0 0.0
  %2925 = vmatprep.subr.mxu0 0.0
  %2926 = vmatpush1.msra.mxu0 0.0
  %2927 = vmatprep.subr.mxu0 0.0
  %2928 = vmatpush1.msra.mxu0 0.0
  %2929 = vmatprep.subr.mxu0 0.0
  %2930 = vmatpush1.msra.mxu0 0.0
  %2931 = vmatprep.subr.mxu0 0.0
  %2932 = vmatpush1.msra.mxu0 0.0
  %2933 = vmatprep.subr.mxu0 0.0
  %2934 = vmatpush1.msra.mxu0 0.0
  %2935 = vmatprep.subr.mxu0 0.0
  %2936 = vmatpush1.msra.mxu0 0.0
  %2937 = vmatprep.subr.mxu0 0.0
  %2938 = vmatpush1.msra.mxu0 0.0
  %2939 = vmatprep.subr.mxu0 0.0
  %2940 = vmatpush1.msra.mxu0 0.0
  %2941 = vmatprep.subr.mxu0 0.0
  %2942 = vmatpush1.msra.mxu0 0.0
  %2943 = vmatprep.subr.mxu0 0.0
  %2944 = vmatpush1.msra.mxu0 0.0
  %2945 = vmatprep.subr.mxu0 0.0
  %2946 = vmatpush1.msra.mxu0 0.0
  %2947 = vmatprep.mubr.f32.mxu0 0.0
  %2948 = vmatmul.mubr.f32.gmra.mrb[0].mxu0 %v2623
  %v2949 = vpop.f32.mrb[0].mxu0
  %v2950 = vadd.f32 0.0, %v2949
  %v2951 = vpop.f32.mrb[0].mxu0
  %v2952 = vadd.f32 0.0, %v2951
  %2953 = vmatprep.mubr.f32.mxu0 0.0
  %2954 = vmatmul.mubr.f32.gmra.mrb[0].mxu0 %v2626
  %v2955 = vpop.f32.mrb[0].mxu0
  %v2956 = vadd.f32 0.0, %v2955
  %v2957 = vpop.f32.mrb[0].mxu0
  %v2958 = vadd.f32 0.0, %v2957
  %2959 = vdwg.mxu0
  %v2961 = vsel %vm2621, %v2616, 0
  %v2964 = vsel %vm2621, %v2617, 0
  %v2967 = vsel %vm144, %v2608, 0
  %v2970 = vsel %vm144, %v2609, 0
  %v2973 = vsel %vm144, %v2610, 0
  %v2976 = vsel %vm144, %v2611, 0
  %v2979 = vsel %vm144, %v2612, 0
  %v2982 = vsel %vm144, %v2613, 0
  %v2985 = vsel %vm144, %v2614, 0
  %v2988 = vsel %vm144, %v2615, 0
  %2990 = vmatprep.subr.mxu0 %v2601
  %2991 = vmatpush1.msra.mxu0 %v2600
  %2992 = vmatprep.subr.mxu0 %v2970
  %2993 = vmatpush1.msra.mxu0 %v2967
  %2994 = vmatprep.subr.mxu0 0.0
  %2995 = vmatpush1.msra.mxu0 0.0
  %2996 = vmatprep.subr.mxu0 0.0
  %2997 = vmatpush1.msra.mxu0 0.0
  %2998 = vmatprep.subr.mxu0 0.0
  %2999 = vmatpush1.msra.mxu0 0.0
  %3000 = vmatprep.subr.mxu0 0.0
  %3001 = vmatpush1.msra.mxu0 0.0
  %3002 = vmatprep.subr.mxu0 0.0
  %3003 = vmatpush1.msra.mxu0 0.0
  %3004 = vmatprep.subr.mxu0 0.0
  %3005 = vmatpush1.msra.mxu0 0.0
  %3006 = vmatprep.subr.mxu0 0.0
  %3007 = vmatpush1.msra.mxu0 0.0
  %3008 = vmatprep.subr.mxu0 0.0
  %3009 = vmatpush1.msra.mxu0 0.0
  %3010 = vmatprep.subr.mxu0 0.0
  %3011 = vmatpush1.msra.mxu0 0.0
  %3012 = vmatprep.subr.mxu0 0.0
  %3013 = vmatpush1.msra.mxu0 0.0
  %3014 = vmatprep.subr.mxu0 0.0
  %3015 = vmatpush1.msra.mxu0 0.0
  %3016 = vmatprep.subr.mxu0 0.0
  %3017 = vmatpush1.msra.mxu0 0.0
  %3018 = vmatprep.subr.mxu0 0.0
  %3019 = vmatpush1.msra.mxu0 0.0
  %3020 = vmatprep.subr.mxu0 0.0
  %3021 = vmatpush1.msra.mxu0 0.0
  %3022 = vmatprep.subr.mxu0 0.0
  %3023 = vmatpush1.msra.mxu0 0.0
  %3024 = vmatprep.subr.mxu0 0.0
  %3025 = vmatpush1.msra.mxu0 0.0
  %3026 = vmatprep.subr.mxu0 0.0
  %3027 = vmatpush1.msra.mxu0 0.0
  %3028 = vmatprep.subr.mxu0 0.0
  %3029 = vmatpush1.msra.mxu0 0.0
  %3030 = vmatprep.subr.mxu0 0.0
  %3031 = vmatpush1.msra.mxu0 0.0
  %3032 = vmatprep.subr.mxu0 0.0
  %3033 = vmatpush1.msra.mxu0 0.0
  %3034 = vmatprep.subr.mxu0 0.0
  %3035 = vmatpush1.msra.mxu0 0.0
  %3036 = vmatprep.subr.mxu0 0.0
  %3037 = vmatpush1.msra.mxu0 0.0
  %3038 = vmatprep.subr.mxu0 0.0
  %3039 = vmatpush1.msra.mxu0 0.0
  %3040 = vmatprep.subr.mxu0 0.0
  %3041 = vmatpush1.msra.mxu0 0.0
  %3042 = vmatprep.subr.mxu0 0.0
  %3043 = vmatpush1.msra.mxu0 0.0
  %3044 = vmatprep.subr.mxu0 0.0
  %3045 = vmatpush1.msra.mxu0 0.0
  %3046 = vmatprep.subr.mxu0 0.0
  %3047 = vmatpush1.msra.mxu0 0.0
  %3048 = vmatprep.subr.mxu0 0.0
  %3049 = vmatpush1.msra.mxu0 0.0
  %3050 = vmatprep.subr.mxu0 0.0
  %3051 = vmatpush1.msra.mxu0 0.0
  %3052 = vmatprep.subr.mxu0 0.0
  %3053 = vmatpush1.msra.mxu0 0.0
  %3054 = vmatprep.mubr.f32.mxu0 0.0
  %3055 = vmatmul.mubr.f32.gmra.mrb[0].mxu0 %v2961
  %v3056 = vpop.f32.mrb[0].mxu0
  %v3057 = vadd.f32 %v2719, %v3056
  %v3058 = vpop.f32.mrb[0].mxu0
  %v3059 = vadd.f32 %v2721, %v3058
  %3060 = vmatprep.mubr.f32.mxu0 0.0
  %3061 = vmatmul.mubr.f32.gmra.mrb[0].mxu0 %v2964
  %v3062 = vpop.f32.mrb[0].mxu0
  %v3063 = vadd.f32 %v2725, %v3062
  %v3064 = vpop.f32.mrb[0].mxu0
  %v3065 = vadd.f32 %v2727, %v3064
  %3066 = vdwg.mxu0
  %3067 = vmatprep.subr.mxu0 %v2603
  %3068 = vmatpush1.msra.mxu0 %v2602
  %3069 = vmatprep.subr.mxu0 %v2976
  %3070 = vmatpush1.msra.mxu0 %v2973
  %3071 = vmatprep.subr.mxu0 0.0
  %3072 = vmatpush1.msra.mxu0 0.0
  %3073 = vmatprep.subr.mxu0 0.0
  %3074 = vmatpush1.msra.mxu0 0.0
  %3075 = vmatprep.subr.mxu0 0.0
  %3076 = vmatpush1.msra.mxu0 0.0
  %3077 = vmatprep.subr.mxu0 0.0
  %3078 = vmatpush1.msra.mxu0 0.0
  %3079 = vmatprep.subr.mxu0 0.0
  %3080 = vmatpush1.msra.mxu0 0.0
  %3081 = vmatprep.subr.mxu0 0.0
  %3082 = vmatpush1.msra.mxu0 0.0
  %3083 = vmatprep.subr.mxu0 0.0
  %3084 = vmatpush1.msra.mxu0 0.0
  %3085 = vmatprep.subr.mxu0 0.0
  %3086 = vmatpush1.msra.mxu0 0.0
  %3087 = vmatprep.subr.mxu0 0.0
  %3088 = vmatpush1.msra.mxu0 0.0
  %3089 = vmatprep.subr.mxu0 0.0
  %3090 = vmatpush1.msra.mxu0 0.0
  %3091 = vmatprep.subr.mxu0 0.0
  %3092 = vmatpush1.msra.mxu0 0.0
  %3093 = vmatprep.subr.mxu0 0.0
  %3094 = vmatpush1.msra.mxu0 0.0
  %3095 = vmatprep.subr.mxu0 0.0
  %3096 = vmatpush1.msra.mxu0 0.0
  %3097 = vmatprep.subr.mxu0 0.0
  %3098 = vmatpush1.msra.mxu0 0.0
  %3099 = vmatprep.subr.mxu0 0.0
  %3100 = vmatpush1.msra.mxu0 0.0
  %3101 = vmatprep.subr.mxu0 0.0
  %3102 = vmatpush1.msra.mxu0 0.0
  %3103 = vmatprep.subr.mxu0 0.0
  %3104 = vmatpush1.msra.mxu0 0.0
  %3105 = vmatprep.subr.mxu0 0.0
  %3106 = vmatpush1.msra.mxu0 0.0
  %3107 = vmatprep.subr.mxu0 0.0
  %3108 = vmatpush1.msra.mxu0 0.0
  %3109 = vmatprep.subr.mxu0 0.0
  %3110 = vmatpush1.msra.mxu0 0.0
  %3111 = vmatprep.subr.mxu0 0.0
  %3112 = vmatpush1.msra.mxu0 0.0
  %3113 = vmatprep.subr.mxu0 0.0
  %3114 = vmatpush1.msra.mxu0 0.0
  %3115 = vmatprep.subr.mxu0 0.0
  %3116 = vmatpush1.msra.mxu0 0.0
  %3117 = vmatprep.subr.mxu0 0.0
  %3118 = vmatpush1.msra.mxu0 0.0
  %3119 = vmatprep.subr.mxu0 0.0
  %3120 = vmatpush1.msra.mxu0 0.0
  %3121 = vmatprep.subr.mxu0 0.0
  %3122 = vmatpush1.msra.mxu0 0.0
  %3123 = vmatprep.subr.mxu0 0.0
  %3124 = vmatpush1.msra.mxu0 0.0
  %3125 = vmatprep.subr.mxu0 0.0
  %3126 = vmatpush1.msra.mxu0 0.0
  %3127 = vmatprep.subr.mxu0 0.0
  %3128 = vmatpush1.msra.mxu0 0.0
  %3129 = vmatprep.subr.mxu0 0.0
  %3130 = vmatpush1.msra.mxu0 0.0
  %3131 = vmatprep.mubr.f32.mxu0 0.0
  %3132 = vmatmul.mubr.f32.gmra.mrb[0].mxu0 %v2961
  %v3133 = vpop.f32.mrb[0].mxu0
  %v3134 = vadd.f32 %v2796, %v3133
  %v3135 = vpop.f32.mrb[0].mxu0
  %v3136 = vadd.f32 %v2798, %v3135
  %3137 = vmatprep.mubr.f32.mxu0 0.0
  %3138 = vmatmul.mubr.f32.gmra.mrb[0].mxu0 %v2964
  %v3139 = vpop.f32.mrb[0].mxu0
  %v3140 = vadd.f32 %v2802, %v3139
  %v3141 = vpop.f32.mrb[0].mxu0
  %v3142 = vadd.f32 %v2804, %v3141
  %3143 = vdwg.mxu0
  %3144 = vmatprep.subr.mxu0 %v2605
  %3145 = vmatpush1.msra.mxu0 %v2604
  %3146 = vmatprep.subr.mxu0 %v2982
  %3147 = vmatpush1.msra.mxu0 %v2979
  %3148 = vmatprep.subr.mxu0 0.0
  %3149 = vmatpush1.msra.mxu0 0.0
  %3150 = vmatprep.subr.mxu0 0.0
  %3151 = vmatpush1.msra.mxu0 0.0
  %3152 = vmatprep.subr.mxu0 0.0
  %3153 = vmatpush1.msra.mxu0 0.0
  %3154 = vmatprep.subr.mxu0 0.0
  %3155 = vmatpush1.msra.mxu0 0.0
  %3156 = vmatprep.subr.mxu0 0.0
  %3157 = vmatpush1.msra.mxu0 0.0
  %3158 = vmatprep.subr.mxu0 0.0
  %3159 = vmatpush1.msra.mxu0 0.0
  %3160 = vmatprep.subr.mxu0 0.0
  %3161 = vmatpush1.msra.mxu0 0.0
  %3162 = vmatprep.subr.mxu0 0.0
  %3163 = vmatpush1.msra.mxu0 0.0
  %3164 = vmatprep.subr.mxu0 0.0
  %3165 = vmatpush1.msra.mxu0 0.0
  %3166 = vmatprep.subr.mxu0 0.0
  %3167 = vmatpush1.msra.mxu0 0.0
  %3168 = vmatprep.subr.mxu0 0.0
  %3169 = vmatpush1.msra.mxu0 0.0
  %3170 = vmatprep.subr.mxu0 0.0
  %3171 = vmatpush1.msra.mxu0 0.0
  %3172 = vmatprep.subr.mxu0 0.0
  %3173 = vmatpush1.msra.mxu0 0.0
  %3174 = vmatprep.subr.mxu0 0.0
  %3175 = vmatpush1.msra.mxu0 0.0
  %3176 = vmatprep.subr.mxu0 0.0
  %3177 = vmatpush1.msra.mxu0 0.0
  %3178 = vmatprep.subr.mxu0 0.0
  %3179 = vmatpush1.msra.mxu0 0.0
  %3180 = vmatprep.subr.mxu0 0.0
  %3181 = vmatpush1.msra.mxu0 0.0
  %3182 = vmatprep.subr.mxu0 0.0
  %3183 = vmatpush1.msra.mxu0 0.0
  %3184 = vmatprep.subr.mxu0 0.0
  %3185 = vmatpush1.msra.mxu0 0.0
  %3186 = vmatprep.subr.mxu0 0.0
  %3187 = vmatpush1.msra.mxu0 0.0
  %3188 = vmatprep.subr.mxu0 0.0
  %3189 = vmatpush1.msra.mxu0 0.0
  %3190 = vmatprep.subr.mxu0 0.0
  %3191 = vmatpush1.msra.mxu0 0.0
  %3192 = vmatprep.subr.mxu0 0.0
  %3193 = vmatpush1.msra.mxu0 0.0
  %3194 = vmatprep.subr.mxu0 0.0
  %3195 = vmatpush1.msra.mxu0 0.0
  %3196 = vmatprep.subr.mxu0 0.0
  %3197 = vmatpush1.msra.mxu0 0.0
  %3198 = vmatprep.subr.mxu0 0.0
  %3199 = vmatpush1.msra.mxu0 0.0
  %3200 = vmatprep.subr.mxu0 0.0
  %3201 = vmatpush1.msra.mxu0 0.0
  %3202 = vmatprep.subr.mxu0 0.0
  %3203 = vmatpush1.msra.mxu0 0.0
  %3204 = vmatprep.subr.mxu0 0.0
  %3205 = vmatpush1.msra.mxu0 0.0
  %3206 = vmatprep.subr.mxu0 0.0
  %3207 = vmatpush1.msra.mxu0 0.0
  %3208 = vmatprep.mubr.f32.mxu0 0.0
  %3209 = vmatmul.mubr.f32.gmra.mrb[0].mxu0 %v2961
  %v3210 = vpop.f32.mrb[0].mxu0
  %v3211 = vadd.f32 %v2873, %v3210
  %v3212 = vpop.f32.mrb[0].mxu0
  %v3213 = vadd.f32 %v2875, %v3212
  %3214 = vmatprep.mubr.f32.mxu0 0.0
  %3215 = vmatmul.mubr.f32.gmra.mrb[0].mxu0 %v2964
  %v3216 = vpop.f32.mrb[0].mxu0
  %v3217 = vadd.f32 %v2879, %v3216
  %v3218 = vpop.f32.mrb[0].mxu0
  %v3219 = vadd.f32 %v2881, %v3218
  %3220 = vdwg.mxu0
  %3221 = vmatprep.subr.mxu0 %v2607
  %3222 = vmatpush1.msra.mxu0 %v2606
  %3223 = vmatprep.subr.mxu0 %v2988
  %3224 = vmatpush1.msra.mxu0 %v2985
  %3225 = vmatprep.subr.mxu0 0.0
  %3226 = vmatpush1.msra.mxu0 0.0
  %3227 = vmatprep.subr.mxu0 0.0
  %3228 = vmatpush1.msra.mxu0 0.0
  %3229 = vmatprep.subr.mxu0 0.0
  %3230 = vmatpush1.msra.mxu0 0.0
  %3231 = vmatprep.subr.mxu0 0.0
  %3232 = vmatpush1.msra.mxu0 0.0
  %3233 = vmatprep.subr.mxu0 0.0
  %3234 = vmatpush1.msra.mxu0 0.0
  %3235 = vmatprep.subr.mxu0 0.0
  %3236 = vmatpush1.msra.mxu0 0.0
  %3237 = vmatprep.subr.mxu0 0.0
  %3238 = vmatpush1.msra.mxu0 0.0
  %3239 = vmatprep.subr.mxu0 0.0
  %3240 = vmatpush1.msra.mxu0 0.0
  %3241 = vmatprep.subr.mxu0 0.0
  %3242 = vmatpush1.msra.mxu0 0.0
  %3243 = vmatprep.subr.mxu0 0.0
  %3244 = vmatpush1.msra.mxu0 0.0
  %3245 = vmatprep.subr.mxu0 0.0
  %3246 = vmatpush1.msra.mxu0 0.0
  %3247 = vmatprep.subr.mxu0 0.0
  %3248 = vmatpush1.msra.mxu0 0.0
  %3249 = vmatprep.subr.mxu0 0.0
  %3250 = vmatpush1.msra.mxu0 0.0
  %3251 = vmatprep.subr.mxu0 0.0
  %3252 = vmatpush1.msra.mxu0 0.0
  %3253 = vmatprep.subr.mxu0 0.0
  %3254 = vmatpush1.msra.mxu0 0.0
  %3255 = vmatprep.subr.mxu0 0.0
  %3256 = vmatpush1.msra.mxu0 0.0
  %3257 = vmatprep.subr.mxu0 0.0
  %3258 = vmatpush1.msra.mxu0 0.0
  %3259 = vmatprep.subr.mxu0 0.0
  %3260 = vmatpush1.msra.mxu0 0.0
  %3261 = vmatprep.subr.mxu0 0.0
  %3262 = vmatpush1.msra.mxu0 0.0
  %3263 = vmatprep.subr.mxu0 0.0
  %3264 = vmatpush1.msra.mxu0 0.0
  %3265 = vmatprep.subr.mxu0 0.0
  %3266 = vmatpush1.msra.mxu0 0.0
  %3267 = vmatprep.subr.mxu0 0.0
  %3268 = vmatpush1.msra.mxu0 0.0
  %3269 = vmatprep.subr.mxu0 0.0
  %3270 = vmatpush1.msra.mxu0 0.0
  %3271 = vmatprep.subr.mxu0 0.0
  %3272 = vmatpush1.msra.mxu0 0.0
  %3273 = vmatprep.subr.mxu0 0.0
  %3274 = vmatpush1.msra.mxu0 0.0
  %3275 = vmatprep.subr.mxu0 0.0
  %3276 = vmatpush1.msra.mxu0 0.0
  %3277 = vmatprep.subr.mxu0 0.0
  %3278 = vmatpush1.msra.mxu0 0.0
  %3279 = vmatprep.subr.mxu0 0.0
  %3280 = vmatpush1.msra.mxu0 0.0
  %3281 = vmatprep.subr.mxu0 0.0
  %3282 = vmatpush1.msra.mxu0 0.0
  %3283 = vmatprep.subr.mxu0 0.0
  %3284 = vmatpush1.msra.mxu0 0.0
  %3285 = vmatprep.mubr.f32.mxu0 0.0
  %3286 = vmatmul.mubr.f32.gmra.mrb[0].mxu0 %v2961
  %v3287 = vpop.f32.mrb[0].mxu0
  %v3288 = vadd.f32 %v2950, %v3287
  %v3289 = vpop.f32.mrb[0].mxu0
  %v3290 = vadd.f32 %v2952, %v3289
  %3291 = vmatprep.mubr.f32.mxu0 0.0
  %3292 = vmatmul.mubr.f32.gmra.mrb[0].mxu0 %v2964
  %v3293 = vpop.f32.mrb[0].mxu0
  %v3294 = vadd.f32 %v2956, %v3293
  %v3295 = vpop.f32.mrb[0].mxu0
  %v3296 = vadd.f32 %v2958, %v3295
  %3297 = vdwg.mxu0
  %3298 = vrot.lane.b32.xlu0 %v2486, 127
  %v3299 = vpop.permute.xlu0 %3298
  %3300 = vrot.lane.b32.xlu0 %v2494, 127
  %v3301 = vpop.permute.xlu0 %3300
  %3302 = vrot.lane.b32.xlu0 %v2487, 127
  %v3303 = vpop.permute.xlu0 %3302
  %3304 = vrot.lane.b32.xlu0 %v2495, 127
  %v3305 = vpop.permute.xlu0 %3304
  %3306 = vrot.lane.b32.xlu0 %v2488, 127
  %v3307 = vpop.permute.xlu0 %3306
  %3308 = vrot.lane.b32.xlu0 %v2496, 127
  %v3309 = vpop.permute.xlu0 %3308
  %3310 = vrot.lane.b32.xlu0 %v2489, 127
  %v3311 = vpop.permute.xlu0 %3310
  %3312 = vrot.lane.b32.xlu0 %v2497, 127
  %v3313 = vpop.permute.xlu0 %3312
  %3314 = vrot.lane.b32.xlu0 %v2490, 127
  %v3315 = vpop.permute.xlu0 %3314
  %3316 = vrot.lane.b32.xlu0 %v2498, 127
  %v3317 = vpop.permute.xlu0 %3316
  %3318 = vrot.lane.b32.xlu0 %v2491, 127
  %v3319 = vpop.permute.xlu0 %3318
  %3320 = vrot.lane.b32.xlu0 %v2499, 127
  %v3321 = vpop.permute.xlu0 %3320
  %3322 = vrot.lane.b32.xlu0 %v2492, 127
  %v3323 = vpop.permute.xlu0 %3322
  %3324 = vrot.lane.b32.xlu0 %v2500, 127
  %v3325 = vpop.permute.xlu0 %3324
  %3326 = vrot.lane.b32.xlu0 %v2493, 127
  %v3327 = vpop.permute.xlu0 %3326
  %3328 = vrot.lane.b32.xlu0 %v2501, 127
  %v3329 = vpop.permute.xlu0 %3328
  %vm3330 = vcmp.lt.s32.totalorder %v72, 127
  %v3331 = vsel %vm3330, %v3323, %v3327
  %v3332 = vsel %vm3330, %v3325, %v3329
  %v3333 = vsel %vm3330, %v3319, %v3323
  %v3334 = vsel %vm3330, %v3321, %v3325
  %v3335 = vsel %vm3330, %v3315, %v3319
  %v3336 = vsel %vm3330, %v3317, %v3321
  %v3337 = vsel %vm3330, %v3311, %v3315
  %v3338 = vsel %vm3330, %v3313, %v3317
  %v3339 = vsel %vm3330, %v3307, %v3311
  %v3340 = vsel %vm3330, %v3309, %v3313
  %v3341 = vsel %vm3330, %v3303, %v3307
  %v3342 = vsel %vm3330, %v3305, %v3309
  %v3343 = vsel %vm3330, %v3299, %v3303
  %v3344 = vsel %vm3330, %v3301, %v3305
  %v3345 = vsel %vm3330, %v3327, %v3299
  %v3346 = vsel %vm3330, %v3329, %v3301
  %v3347 = vadd.s32 %v2503, 1
  %vm3348 = vcmp.ge.s32.totalorder %v3347, 0
  %vm3349 = vcmp.lt.s32.totalorder %v3347, 8
  %vm3350 = vmand %vm3348, %vm3349
  %v3351 = vsel %vm3350, 1, 0
  %v3352 = vcvt.s32.f32 %v3351
  %v3354 = vlaneseq
  %v3355 = vshrl.u32 %v3354, 7
  %v3356 = vsub.s32 0, %v3355
  %v3357 = vrot.slane %v3352, %v3356
  %v3358 = vlaneseq
  %v3359 = vshrl.u32 %v3358, 7
  %v3360 = vsub.s32 1, %v3359
  %v3361 = vrot.slane %v3352, %v3360
  %v3362 = vlaneseq
  %v3363 = vshrl.u32 %v3362, 7
  %v3364 = vsub.s32 2, %v3363
  %v3365 = vrot.slane %v3352, %v3364
  %v3366 = vlaneseq
  %v3367 = vshrl.u32 %v3366, 7
  %v3368 = vsub.s32 3, %v3367
  %v3369 = vrot.slane %v3352, %v3368
  %v3370 = vlaneseq
  %v3371 = vshrl.u32 %v3370, 7
  %v3372 = vsub.s32 4, %v3371
  %v3373 = vrot.slane %v3352, %v3372
  %v3374 = vlaneseq
  %v3375 = vshrl.u32 %v3374, 7
  %v3376 = vsub.s32 5, %v3375
  %v3377 = vrot.slane %v3352, %v3376
  %v3378 = vlaneseq
  %v3379 = vshrl.u32 %v3378, 7
  %v3380 = vsub.s32 6, %v3379
  %v3381 = vrot.slane %v3352, %v3380
  %v3382 = vlaneseq
  %v3383 = vshrl.u32 %v3382, 7
  %v3384 = vsub.s32 7, %v3383
  %v3385 = vrot.slane %v3352, %v3384
  %v3394 = vmul.f32 %v3343, %v3357
  %v3395 = vmul.f32 %v3341, %v3361
  %v3396 = vmul.f32 %v3339, %v3365
  %v3397 = vmul.f32 %v3337, %v3369
  %v3398 = vmul.f32 %v3335, %v3373
  %v3399 = vmul.f32 %v3333, %v3377
  %v3400 = vmul.f32 %v3331, %v3381
  %v3401 = vmul.f32 %v3345, %v3385
  %v3402 = vmul.f32 %v3344, %v3357
  %v3403 = vmul.f32 %v3342, %v3361
  %v3404 = vmul.f32 %v3340, %v3365
  %v3405 = vmul.f32 %v3338, %v3369
  %v3406 = vmul.f32 %v3336, %v3373
  %v3407 = vmul.f32 %v3334, %v3377
  %v3408 = vmul.f32 %v3332, %v3381
  %v3409 = vmul.f32 %v3346, %v3385
  %s3410 = scalar_lea.vmem %s8, 32
  %v3411 = vld [vmem:[%s3410] sm:$0xff]
  %v3412 = vld [vmem:[%s3410 + $0x8] sm:$0xff]
  %v3414 = vsel %vm2621, %v3411, 0
  %v3417 = vsel %vm2621, %v3412, 0
  %v3420 = vsel %vm144, %v3402, 0
  %v3423 = vsel %vm144, %v3403, 0
  %v3426 = vsel %vm144, %v3404, 0
  %v3429 = vsel %vm144, %v3405, 0
  %v3432 = vsel %vm144, %v3406, 0
  %v3435 = vsel %vm144, %v3407, 0
  %v3438 = vsel %vm144, %v3408, 0
  %v3441 = vsel %vm144, %v3409, 0
  %3443 = vmatprep.subr.mxu0 %v3395
  %3444 = vmatpush1.msra.mxu0 %v3394
  %3445 = vmatprep.subr.mxu0 %v3423
  %3446 = vmatpush1.msra.mxu0 %v3420
  %3447 = vmatprep.subr.mxu0 0.0
  %3448 = vmatpush1.msra.mxu0 0.0
  %3449 = vmatprep.subr.mxu0 0.0
  %3450 = vmatpush1.msra.mxu0 0.0
  %3451 = vmatprep.subr.mxu0 0.0
  %3452 = vmatpush1.msra.mxu0 0.0
  %3453 = vmatprep.subr.mxu0 0.0
  %3454 = vmatpush1.msra.mxu0 0.0
  %3455 = vmatprep.subr.mxu0 0.0
  %3456 = vmatpush1.msra.mxu0 0.0
  %3457 = vmatprep.subr.mxu0 0.0
  %3458 = vmatpush1.msra.mxu0 0.0
  %3459 = vmatprep.subr.mxu0 0.0
  %3460 = vmatpush1.msra.mxu0 0.0
  %3461 = vmatprep.subr.mxu0 0.0
  %3462 = vmatpush1.msra.mxu0 0.0
  %3463 = vmatprep.subr.mxu0 0.0
  %3464 = vmatpush1.msra.mxu0 0.0
  %3465 = vmatprep.subr.mxu0 0.0
  %3466 = vmatpush1.msra.mxu0 0.0
  %3467 = vmatprep.subr.mxu0 0.0
  %3468 = vmatpush1.msra.mxu0 0.0
  %3469 = vmatprep.subr.mxu0 0.0
  %3470 = vmatpush1.msra.mxu0 0.0
  %3471 = vmatprep.subr.mxu0 0.0
  %3472 = vmatpush1.msra.mxu0 0.0
  %3473 = vmatprep.subr.mxu0 0.0
  %3474 = vmatpush1.msra.mxu0 0.0
  %3475 = vmatprep.subr.mxu0 0.0
  %3476 = vmatpush1.msra.mxu0 0.0
  %3477 = vmatprep.subr.mxu0 0.0
  %3478 = vmatpush1.msra.mxu0 0.0
  %3479 = vmatprep.subr.mxu0 0.0
  %3480 = vmatpush1.msra.mxu0 0.0
  %3481 = vmatprep.subr.mxu0 0.0
  %3482 = vmatpush1.msra.mxu0 0.0
  %3483 = vmatprep.subr.mxu0 0.0
  %3484 = vmatpush1.msra.mxu0 0.0
  %3485 = vmatprep.subr.mxu0 0.0
  %3486 = vmatpush1.msra.mxu0 0.0
  %3487 = vmatprep.subr.mxu0 0.0
  %3488 = vmatpush1.msra.mxu0 0.0
  %3489 = vmatprep.subr.mxu0 0.0
  %3490 = vmatpush1.msra.mxu0 0.0
  %3491 = vmatprep.subr.mxu0 0.0
  %3492 = vmatpush1.msra.mxu0 0.0
  %3493 = vmatprep.subr.mxu0 0.0
  %3494 = vmatpush1.msra.mxu0 0.0
  %3495 = vmatprep.subr.mxu0 0.0
  %3496 = vmatpush1.msra.mxu0 0.0
  %3497 = vmatprep.subr.mxu0 0.0
  %3498 = vmatpush1.msra.mxu0 0.0
  %3499 = vmatprep.subr.mxu0 0.0
  %3500 = vmatpush1.msra.mxu0 0.0
  %3501 = vmatprep.subr.mxu0 0.0
  %3502 = vmatpush1.msra.mxu0 0.0
  %3503 = vmatprep.subr.mxu0 0.0
  %3504 = vmatpush1.msra.mxu0 0.0
  %3505 = vmatprep.subr.mxu0 0.0
  %3506 = vmatpush1.msra.mxu0 0.0
  %3507 = vmatprep.mubr.f32.mxu0 0.0
  %3508 = vmatmul.mubr.f32.gmra.mrb[0].mxu0 %v3414
  %v3509 = vpop.f32.mrb[0].mxu0
  %v3510 = vadd.f32 0.0, %v3509
  %v3511 = vpop.f32.mrb[0].mxu0
  %v3512 = vadd.f32 0.0, %v3511
  %3513 = vmatprep.mubr.f32.mxu0 0.0
  %3514 = vmatmul.mubr.f32.gmra.mrb[0].mxu0 %v3417
  %v3515 = vpop.f32.mrb[0].mxu0
  %v3516 = vadd.f32 0.0, %v3515
  %v3517 = vpop.f32.mrb[0].mxu0
  %v3518 = vadd.f32 0.0, %v3517
  %3519 = vdwg.mxu0
  %3520 = vmatprep.subr.mxu0 %v3397
  %3521 = vmatpush1.msra.mxu0 %v3396
  %3522 = vmatprep.subr.mxu0 %v3429
  %3523 = vmatpush1.msra.mxu0 %v3426
  %3524 = vmatprep.subr.mxu0 0.0
  %3525 = vmatpush1.msra.mxu0 0.0
  %3526 = vmatprep.subr.mxu0 0.0
  %3527 = vmatpush1.msra.mxu0 0.0
  %3528 = vmatprep.subr.mxu0 0.0
  %3529 = vmatpush1.msra.mxu0 0.0
  %3530 = vmatprep.subr.mxu0 0.0
  %3531 = vmatpush1.msra.mxu0 0.0
  %3532 = vmatprep.subr.mxu0 0.0
  %3533 = vmatpush1.msra.mxu0 0.0
  %3534 = vmatprep.subr.mxu0 0.0
  %3535 = vmatpush1.msra.mxu0 0.0
  %3536 = vmatprep.subr.mxu0 0.0
  %3537 = vmatpush1.msra.mxu0 0.0
  %3538 = vmatprep.subr.mxu0 0.0
  %3539 = vmatpush1.msra.mxu0 0.0
  %3540 = vmatprep.subr.mxu0 0.0
  %3541 = vmatpush1.msra.mxu0 0.0
  %3542 = vmatprep.subr.mxu0 0.0
  %3543 = vmatpush1.msra.mxu0 0.0
  %3544 = vmatprep.subr.mxu0 0.0
  %3545 = vmatpush1.msra.mxu0 0.0
  %3546 = vmatprep.subr.mxu0 0.0
  %3547 = vmatpush1.msra.mxu0 0.0
  %3548 = vmatprep.subr.mxu0 0.0
  %3549 = vmatpush1.msra.mxu0 0.0
  %3550 = vmatprep.subr.mxu0 0.0
  %3551 = vmatpush1.msra.mxu0 0.0
  %3552 = vmatprep.subr.mxu0 0.0
  %3553 = vmatpush1.msra.mxu0 0.0
  %3554 = vmatprep.subr.mxu0 0.0
  %3555 = vmatpush1.msra.mxu0 0.0
  %3556 = vmatprep.subr.mxu0 0.0
  %3557 = vmatpush1.msra.mxu0 0.0
  %3558 = vmatprep.subr.mxu0 0.0
  %3559 = vmatpush1.msra.mxu0 0.0
  %3560 = vmatprep.subr.mxu0 0.0
  %3561 = vmatpush1.msra.mxu0 0.0
  %3562 = vmatprep.subr.mxu0 0.0
  %3563 = vmatpush1.msra.mxu0 0.0
  %3564 = vmatprep.subr.mxu0 0.0
  %3565 = vmatpush1.msra.mxu0 0.0
  %3566 = vmatprep.subr.mxu0 0.0
  %3567 = vmatpush1.msra.mxu0 0.0
  %3568 = vmatprep.subr.mxu0 0.0
  %3569 = vmatpush1.msra.mxu0 0.0
  %3570 = vmatprep.subr.mxu0 0.0
  %3571 = vmatpush1.msra.mxu0 0.0
  %3572 = vmatprep.subr.mxu0 0.0
  %3573 = vmatpush1.msra.mxu0 0.0
  %3574 = vmatprep.subr.mxu0 0.0
  %3575 = vmatpush1.msra.mxu0 0.0
  %3576 = vmatprep.subr.mxu0 0.0
  %3577 = vmatpush1.msra.mxu0 0.0
  %3578 = vmatprep.subr.mxu0 0.0
  %3579 = vmatpush1.msra.mxu0 0.0
  %3580 = vmatprep.subr.mxu0 0.0
  %3581 = vmatpush1.msra.mxu0 0.0
  %3582 = vmatprep.subr.mxu0 0.0
  %3583 = vmatpush1.msra.mxu0 0.0
  %3584 = vmatprep.mubr.f32.mxu0 0.0
  %3585 = vmatmul.mubr.f32.gmra.mrb[0].mxu0 %v3414
  %v3586 = vpop.f32.mrb[0].mxu0
  %v3587 = vadd.f32 0.0, %v3586
  %v3588 = vpop.f32.mrb[0].mxu0
  %v3589 = vadd.f32 0.0, %v3588
  %3590 = vmatprep.mubr.f32.mxu0 0.0
  %3591 = vmatmul.mubr.f32.gmra.mrb[0].mxu0 %v3417
  %v3592 = vpop.f32.mrb[0].mxu0
  %v3593 = vadd.f32 0.0, %v3592
  %v3594 = vpop.f32.mrb[0].mxu0
  %v3595 = vadd.f32 0.0, %v3594
  %3596 = vdwg.mxu0
  %3597 = vmatprep.subr.mxu0 %v3399
  %3598 = vmatpush1.msra.mxu0 %v3398
  %3599 = vmatprep.subr.mxu0 %v3435
  %3600 = vmatpush1.msra.mxu0 %v3432
  %3601 = vmatprep.subr.mxu0 0.0
  %3602 = vmatpush1.msra.mxu0 0.0
  %3603 = vmatprep.subr.mxu0 0.0
  %3604 = vmatpush1.msra.mxu0 0.0
  %3605 = vmatprep.subr.mxu0 0.0
  %3606 = vmatpush1.msra.mxu0 0.0
  %3607 = vmatprep.subr.mxu0 0.0
  %3608 = vmatpush1.msra.mxu0 0.0
  %3609 = vmatprep.subr.mxu0 0.0
  %3610 = vmatpush1.msra.mxu0 0.0
  %3611 = vmatprep.subr.mxu0 0.0
  %3612 = vmatpush1.msra.mxu0 0.0
  %3613 = vmatprep.subr.mxu0 0.0
  %3614 = vmatpush1.msra.mxu0 0.0
  %3615 = vmatprep.subr.mxu0 0.0
  %3616 = vmatpush1.msra.mxu0 0.0
  %3617 = vmatprep.subr.mxu0 0.0
  %3618 = vmatpush1.msra.mxu0 0.0
  %3619 = vmatprep.subr.mxu0 0.0
  %3620 = vmatpush1.msra.mxu0 0.0
  %3621 = vmatprep.subr.mxu0 0.0
  %3622 = vmatpush1.msra.mxu0 0.0
  %3623 = vmatprep.subr.mxu0 0.0
  %3624 = vmatpush1.msra.mxu0 0.0
  %3625 = vmatprep.subr.mxu0 0.0
  %3626 = vmatpush1.msra.mxu0 0.0
  %3627 = vmatprep.subr.mxu0 0.0
  %3628 = vmatpush1.msra.mxu0 0.0
  %3629 = vmatprep.subr.mxu0 0.0
  %3630 = vmatpush1.msra.mxu0 0.0
  %3631 = vmatprep.subr.mxu0 0.0
  %3632 = vmatpush1.msra.mxu0 0.0
  %3633 = vmatprep.subr.mxu0 0.0
  %3634 = vmatpush1.msra.mxu0 0.0
  %3635 = vmatprep.subr.mxu0 0.0
  %3636 = vmatpush1.msra.mxu0 0.0
  %3637 = vmatprep.subr.mxu0 0.0
  %3638 = vmatpush1.msra.mxu0 0.0
  %3639 = vmatprep.subr.mxu0 0.0
  %3640 = vmatpush1.msra.mxu0 0.0
  %3641 = vmatprep.subr.mxu0 0.0
  %3642 = vmatpush1.msra.mxu0 0.0
  %3643 = vmatprep.subr.mxu0 0.0
  %3644 = vmatpush1.msra.mxu0 0.0
  %3645 = vmatprep.subr.mxu0 0.0
  %3646 = vmatpush1.msra.mxu0 0.0
  %3647 = vmatprep.subr.mxu0 0.0
  %3648 = vmatpush1.msra.mxu0 0.0
  %3649 = vmatprep.subr.mxu0 0.0
  %3650 = vmatpush1.msra.mxu0 0.0
  %3651 = vmatprep.subr.mxu0 0.0
  %3652 = vmatpush1.msra.mxu0 0.0
  %3653 = vmatprep.subr.mxu0 0.0
  %3654 = vmatpush1.msra.mxu0 0.0
  %3655 = vmatprep.subr.mxu0 0.0
  %3656 = vmatpush1.msra.mxu0 0.0
  %3657 = vmatprep.subr.mxu0 0.0
  %3658 = vmatpush1.msra.mxu0 0.0
  %3659 = vmatprep.subr.mxu0 0.0
  %3660 = vmatpush1.msra.mxu0 0.0
  %3661 = vmatprep.mubr.f32.mxu0 0.0
  %3662 = vmatmul.mubr.f32.gmra.mrb[0].mxu0 %v3414
  %v3663 = vpop.f32.mrb[0].mxu0
  %v3664 = vadd.f32 0.0, %v3663
  %v3665 = vpop.f32.mrb[0].mxu0
  %v3666 = vadd.f32 0.0, %v3665
  %3667 = vmatprep.mubr.f32.mxu0 0.0
  %3668 = vmatmul.mubr.f32.gmra.mrb[0].mxu0 %v3417
  %v3669 = vpop.f32.mrb[0].mxu0
  %v3670 = vadd.f32 0.0, %v3669
  %v3671 = vpop.f32.mrb[0].mxu0
  %v3672 = vadd.f32 0.0, %v3671
  %3673 = vdwg.mxu0
  %3674 = vmatprep.subr.mxu0 %v3401
  %3675 = vmatpush1.msra.mxu0 %v3400
  %3676 = vmatprep.subr.mxu0 %v3441
  %3677 = vmatpush1.msra.mxu0 %v3438
  %3678 = vmatprep.subr.mxu0 0.0
  %3679 = vmatpush1.msra.mxu0 0.0
  %3680 = vmatprep.subr.mxu0 0.0
  %3681 = vmatpush1.msra.mxu0 0.0
  %3682 = vmatprep.subr.mxu0 0.0
  %3683 = vmatpush1.msra.mxu0 0.0
  %3684 = vmatprep.subr.mxu0 0.0
  %3685 = vmatpush1.msra.mxu0 0.0
  %3686 = vmatprep.subr.mxu0 0.0
  %3687 = vmatpush1.msra.mxu0 0.0
  %3688 = vmatprep.subr.mxu0 0.0
  %3689 = vmatpush1.msra.mxu0 0.0
  %3690 = vmatprep.subr.mxu0 0.0
  %3691 = vmatpush1.msra.mxu0 0.0
  %3692 = vmatprep.subr.mxu0 0.0
  %3693 = vmatpush1.msra.mxu0 0.0
  %3694 = vmatprep.subr.mxu0 0.0
  %3695 = vmatpush1.msra.mxu0 0.0
  %3696 = vmatprep.subr.mxu0 0.0
  %3697 = vmatpush1.msra.mxu0 0.0
  %3698 = vmatprep.subr.mxu0 0.0
  %3699 = vmatpush1.msra.mxu0 0.0
  %3700 = vmatprep.subr.mxu0 0.0
  %3701 = vmatpush1.msra.mxu0 0.0
  %3702 = vmatprep.subr.mxu0 0.0
  %3703 = vmatpush1.msra.mxu0 0.0
  %3704 = vmatprep.subr.mxu0 0.0
  %3705 = vmatpush1.msra.mxu0 0.0
  %3706 = vmatprep.subr.mxu0 0.0
  %3707 = vmatpush1.msra.mxu0 0.0
  %3708 = vmatprep.subr.mxu0 0.0
  %3709 = vmatpush1.msra.mxu0 0.0
  %3710 = vmatprep.subr.mxu0 0.0
  %3711 = vmatpush1.msra.mxu0 0.0
  %3712 = vmatprep.subr.mxu0 0.0
  %3713 = vmatpush1.msra.mxu0 0.0
  %3714 = vmatprep.subr.mxu0 0.0
  %3715 = vmatpush1.msra.mxu0 0.0
  %3716 = vmatprep.subr.mxu0 0.0
  %3717 = vmatpush1.msra.mxu0 0.0
  %3718 = vmatprep.subr.mxu0 0.0
  %3719 = vmatpush1.msra.mxu0 0.0
  %3720 = vmatprep.subr.mxu0 0.0
  %3721 = vmatpush1.msra.mxu0 0.0
  %3722 = vmatprep.subr.mxu0 0.0
  %3723 = vmatpush1.msra.mxu0 0.0
  %3724 = vmatprep.subr.mxu0 0.0
  %3725 = vmatpush1.msra.mxu0 0.0
  %3726 = vmatprep.subr.mxu0 0.0
  %3727 = vmatpush1.msra.mxu0 0.0
  %3728 = vmatprep.subr.mxu0 0.0
  %3729 = vmatpush1.msra.mxu0 0.0
  %3730 = vmatprep.subr.mxu0 0.0
  %3731 = vmatpush1.msra.mxu0 0.0
  %3732 = vmatprep.subr.mxu0 0.0
  %3733 = vmatpush1.msra.mxu0 0.0
  %3734 = vmatprep.subr.mxu0 0.0
  %3735 = vmatpush1.msra.mxu0 0.0
  %3736 = vmatprep.subr.mxu0 0.0
  %3737 = vmatpush1.msra.mxu0 0.0
  %3738 = vmatprep.mubr.f32.mxu0 0.0
  %3739 = vmatmul.mubr.f32.gmra.mrb[0].mxu0 %v3414
  %v3740 = vpop.f32.mrb[0].mxu0
  %v3741 = vadd.f32 0.0, %v3740
  %v3742 = vpop.f32.mrb[0].mxu0
  %v3743 = vadd.f32 0.0, %v3742
  %3744 = vmatprep.mubr.f32.mxu0 0.0
  %3745 = vmatmul.mubr.f32.gmra.mrb[0].mxu0 %v3417
  %v3746 = vpop.f32.mrb[0].mxu0
  %v3747 = vadd.f32 0.0, %v3746
  %v3748 = vpop.f32.mrb[0].mxu0
  %v3749 = vadd.f32 0.0, %v3748
  %3750 = vdwg.mxu0
  %v3751 = vadd.f32 %v3057, %v3510
  %v3752 = vadd.f32 %v3059, %v3512
  %v3753 = vadd.f32 %v3134, %v3587
  %v3754 = vadd.f32 %v3136, %v3589
  %v3755 = vadd.f32 %v3211, %v3664
  %v3756 = vadd.f32 %v3213, %v3666
  %v3757 = vadd.f32 %v3288, %v3741
  %v3758 = vadd.f32 %v3290, %v3743
  %v3759 = vadd.f32 %v3063, %v3516
  %v3760 = vadd.f32 %v3065, %v3518
  %v3761 = vadd.f32 %v3140, %v3593
  %v3762 = vadd.f32 %v3142, %v3595
  %v3763 = vadd.f32 %v3217, %v3670
  %v3764 = vadd.f32 %v3219, %v3672
  %v3765 = vadd.f32 %v3294, %v3747
  %v3766 = vadd.f32 %v3296, %v3749
  %v3767 = vadd.f32 %v3751, %v3752
  %v3768 = vadd.f32 %v3767, %v3753
  %v3769 = vadd.f32 %v3768, %v3754
  %v3770 = vadd.f32 %v3769, %v3755
  %v3771 = vadd.f32 %v3770, %v3756
  %v3772 = vadd.f32 %v3771, %v3757
  %v3773 = vadd.f32 %v3772, %v3758
  %3774 = vadd.xlane.f32.xlu0 %v3773
  %v3775 = vpop.xlane.xlu0 %3774
  %v3776 = vadd.f32 %v3759, %v3760
  %v3777 = vadd.f32 %v3776, %v3761
  %v3778 = vadd.f32 %v3777, %v3762
  %v3779 = vadd.f32 %v3778, %v3763
  %v3780 = vadd.f32 %v3779, %v3764
  %v3781 = vadd.f32 %v3780, %v3765
  %v3782 = vadd.f32 %v3781, %v3766
  %3783 = vadd.xlane.f32.xlu0 %v3782
  %v3784 = vpop.xlane.xlu0 %3783
  %v3785 = vmul.f32 %v3775, 0.0009765625
  %v3786 = vmul.f32 %v3784, 0.0009765625
  %v3787 = vsub.f32 %v3751, %v3785
  %v3788 = vsub.f32 %v3752, %v3785
  %v3789 = vsub.f32 %v3753, %v3785
  %v3790 = vsub.f32 %v3754, %v3785
  %v3791 = vsub.f32 %v3755, %v3785
  %v3792 = vsub.f32 %v3756, %v3785
  %v3793 = vsub.f32 %v3757, %v3785
  %v3794 = vsub.f32 %v3758, %v3785
  %v3795 = vsub.f32 %v3759, %v3786
  %v3796 = vsub.f32 %v3760, %v3786
  %v3797 = vsub.f32 %v3761, %v3786
  %v3798 = vsub.f32 %v3762, %v3786
  %v3799 = vsub.f32 %v3763, %v3786
  %v3800 = vsub.f32 %v3764, %v3786
  %v3801 = vsub.f32 %v3765, %v3786
  %v3802 = vsub.f32 %v3766, %v3786
  %v3803 = vmul.f32 %v3787, %v3787
  %v3804 = vmul.f32 %v3788, %v3788
  %v3805 = vmul.f32 %v3789, %v3789
  %v3806 = vmul.f32 %v3790, %v3790
  %v3807 = vmul.f32 %v3791, %v3791
  %v3808 = vmul.f32 %v3792, %v3792
  %v3809 = vmul.f32 %v3793, %v3793
  %v3810 = vmul.f32 %v3794, %v3794
  %v3811 = vmul.f32 %v3795, %v3795
  %v3812 = vmul.f32 %v3796, %v3796
  %v3813 = vmul.f32 %v3797, %v3797
  %v3814 = vmul.f32 %v3798, %v3798
  %v3815 = vmul.f32 %v3799, %v3799
  %v3816 = vmul.f32 %v3800, %v3800
  %v3817 = vmul.f32 %v3801, %v3801
  %v3818 = vmul.f32 %v3802, %v3802
  %v3819 = vadd.f32 %v3803, %v3804
  %v3820 = vadd.f32 %v3819, %v3805
  %v3821 = vadd.f32 %v3820, %v3806
  %v3822 = vadd.f32 %v3821, %v3807
  %v3823 = vadd.f32 %v3822, %v3808
  %v3824 = vadd.f32 %v3823, %v3809
  %v3825 = vadd.f32 %v3824, %v3810
  %3826 = vadd.xlane.f32.xlu0 %v3825
  %v3827 = vpop.xlane.xlu0 %3826
  %v3828 = vadd.f32 %v3811, %v3812
  %v3829 = vadd.f32 %v3828, %v3813
  %v3830 = vadd.f32 %v3829, %v3814
  %v3831 = vadd.f32 %v3830, %v3815
  %v3832 = vadd.f32 %v3831, %v3816
  %v3833 = vadd.f32 %v3832, %v3817
  %v3834 = vadd.f32 %v3833, %v3818
  %3835 = vadd.xlane.f32.xlu0 %v3834
  %v3836 = vpop.xlane.xlu0 %3835
  %v3837 = vmul.f32 %v3827, 0.0009765625
  %v3838 = vmul.f32 %v3836, 0.0009765625
  %v3839 = vld [vmem:[%s9] sm:$0xff]
  %v3840 = vld [vmem:[%s9 + $0x8] sm:$0xff]
  %v3841 = vadd.f32 %v3837, 1e-05
  %v3842 = vadd.f32 %v3838, 1e-05
  %v3843 = vrsqrt.pop %v3841
  %v3844 = vrsqrt.pop %v3842
  %v3845 = vmul.f32 %v3839, %v3843
  %v3846 = vmul.f32 %v3840, %v3844
  %3848 = vset.pattern.permute.xlu0 0
  %3849 = vperm.xlu0 %3848, %v3845
  %v3850 = vpop.permute.xlu0 %3849
  %3853 = vset.pattern.permute.xlu0 0
  %3854 = vperm.xlu0 %3853, %v3846
  %v3855 = vpop.permute.xlu0 %3854
  %v3857 = vmul.f32 %v3787, %v3850
  %v3858 = vmul.f32 %v3788, %v3850
  %v3859 = vmul.f32 %v3789, %v3850
  %v3860 = vmul.f32 %v3790, %v3850
  %v3861 = vmul.f32 %v3791, %v3850
  %v3862 = vmul.f32 %v3792, %v3850
  %v3863 = vmul.f32 %v3793, %v3850
  %v3864 = vmul.f32 %v3794, %v3850
  %v3865 = vmul.f32 %v3795, %v3855
  %v3866 = vmul.f32 %v3796, %v3855
  %v3867 = vmul.f32 %v3797, %v3855
  %v3868 = vmul.f32 %v3798, %v3855
  %v3869 = vmul.f32 %v3799, %v3855
  %v3870 = vmul.f32 %v3800, %v3855
  %v3871 = vmul.f32 %v3801, %v3855
  %v3872 = vmul.f32 %v3802, %v3855
  %v3873 = vld [vmem:[%s10] sm:$0xff]
  %v3874 = vld [vmem:[%s10 + $0x8] sm:$0xff]
  %3876 = vset.pattern.permute.xlu0 0
  %3877 = vperm.xlu0 %3876, %v3873
  %v3878 = vpop.permute.xlu0 %3877
  %3881 = vset.pattern.permute.xlu0 0
  %3882 = vperm.xlu0 %3881, %v3874
  %v3883 = vpop.permute.xlu0 %3882
  %v3885 = vadd.f32 %v3857, %v3878
  %v3886 = vadd.f32 %v3858, %v3878
  %v3887 = vadd.f32 %v3859, %v3878
  %v3888 = vadd.f32 %v3860, %v3878
  %v3889 = vadd.f32 %v3861, %v3878
  %v3890 = vadd.f32 %v3862, %v3878
  %v3891 = vadd.f32 %v3863, %v3878
  %v3892 = vadd.f32 %v3864, %v3878
  %v3893 = vadd.f32 %v3865, %v3883
  %v3894 = vadd.f32 %v3866, %v3883
  %v3895 = vadd.f32 %v3867, %v3883
  %v3896 = vadd.f32 %v3868, %v3883
  %v3897 = vadd.f32 %v3869, %v3883
  %v3898 = vadd.f32 %v3870, %v3883
  %v3899 = vadd.f32 %v3871, %v3883
  %v3900 = vadd.f32 %v3872, %v3883
  %v3901 = vmax.f32 %v3885, 0.0
  %v3902 = vmax.f32 %v3886, 0.0
  %v3903 = vmax.f32 %v3887, 0.0
  %v3904 = vmax.f32 %v3888, 0.0
  %v3905 = vmax.f32 %v3889, 0.0
  %v3906 = vmax.f32 %v3890, 0.0
  %v3907 = vmax.f32 %v3891, 0.0
  %v3908 = vmax.f32 %v3892, 0.0
  %v3909 = vmax.f32 %v3893, 0.0
  %v3910 = vmax.f32 %v3894, 0.0
  %v3911 = vmax.f32 %v3895, 0.0
  %v3912 = vmax.f32 %v3896, 0.0
  %v3913 = vmax.f32 %v3897, 0.0
  %v3914 = vmax.f32 %v3898, 0.0
  %v3915 = vmax.f32 %v3899, 0.0
  %v3916 = vmax.f32 %v3900, 0.0
  %3917 = vst [vmem:[%s11] sm:$0xff] %v3901
  %3918 = vst [vmem:[%s11 + $0x8] sm:$0xff] %v3902
  %3919 = vst [vmem:[%s11 + $0x10] sm:$0xff] %v3903
  %3920 = vst [vmem:[%s11 + $0x18] sm:$0xff] %v3904
  %3921 = vst [vmem:[%s11 + $0x20] sm:$0xff] %v3905
  %3922 = vst [vmem:[%s11 + $0x28] sm:$0xff] %v3906
  %3923 = vst [vmem:[%s11 + $0x30] sm:$0xff] %v3907
  %3924 = vst [vmem:[%s11 + $0x38] sm:$0xff] %v3908
  %3925 = vst [vmem:[%s11 + $0x40] sm:$0xff] %v3909
  %3926 = vst [vmem:[%s11 + $0x48] sm:$0xff] %v3910
  %3927 = vst [vmem:[%s11 + $0x50] sm:$0xff] %v3911
  %3928 = vst [vmem:[%s11 + $0x58] sm:$0xff] %v3912
  %3929 = vst [vmem:[%s11 + $0x60] sm:$0xff] %v3913
  %3930 = vst [vmem:[%s11 + $0x68] sm:$0xff] %v3914
  %3931 = vst [vmem:[%s11 + $0x70] sm:$0xff] %v3915
  %3932 = vst [vmem:[%s11 + $0x78] sm:$0xff] %v3916
  // Predicated region
  $region46: #{_lambda_.1} parent=0 // pred_check
    _
  $region47: #{_lambda_.1} parent=0 // pred_check_branch
    %3934 = sbr.rel (0) target = $region49
  $region48: #{_lambda_.1} parent=0 // pred_region
    _
  $region49: #{_lambda_.1} parent=0 // pred_fallthru
    _
  // Predicated region
  $region50: #{_lambda_.1} parent=0 // pred_check
    _
  $region51: #{_lambda_.1} parent=0 // pred_check_branch
    %3936 = sbr.rel (0) target = $region53
  $region52: #{_lambda_.1} parent=0 // pred_region
    _
  $region53: #{_lambda_.1} parent=0 // pred_fallthru
    _

</llo_original>
